<compile_context>
chip_gen: v5e
topology: v5e:2x2
jax: 0.10.0
libtpu: 0.0.40
codegen_flags: <defaults>
</compile_context>

<pallas_src>
import functools
import inspect
import math

import jax
import jax.numpy as jnp
from jax import lax
from jax.experimental import pallas as pl
from jax.experimental.pallas import tpu as pltpu


# --------------------------------------------------------------------------- #
# Small helpers
# --------------------------------------------------------------------------- #
def _round_up(n, m):
    return ((n + m - 1) // m) * m


def _device_kind():
    try:
        return jax.devices()[0].device_kind.lower()
    except Exception:
        return ""


def _is_v7(kind):
    return ("v7" in kind) or ("7x" in kind)


def _is_v5(kind):
    return "v5" in kind


def _supports_buffered():
    """Explicit feature check for single-buffered constant-index BlockSpecs.

    A version/feature check (not a blanket try/except around the kernel call)
    so genuine kernel errors are never masked and the weight-VMEM budget never
    silently doubles.
    """
    if not hasattr(pl, "Buffered"):
        return False
    try:
        return "pipeline_mode" in inspect.signature(pl.BlockSpec).parameters
    except (TypeError, ValueError):
        return False


_HAS_BUFFERED = _supports_buffered()


def _vmem_limit_bytes():
    """Generation-aware scoped-VMEM limit: ~56 MiB on v7x, ~100 MiB on v5e/v6e."""
    cap = None
    try:
        cap = getattr(pltpu.get_tpu_info(), "vmem_capacity_bytes", None)
    except Exception:
        cap = None
    if cap is None:
        cap = (64 if _is_v7(_device_kind()) else 128) * 1024 * 1024
    # Leave headroom for compiler scratch and the x/out double buffers.
    return int(min(cap - 8 * 1024 * 1024, 100 * 1024 * 1024))


# --------------------------------------------------------------------------- #
# Kernel
# --------------------------------------------------------------------------- #
def multidae_kernel(x_ref, *refs, n_layers, bf16_tanh):
    """Whole MultiDAE forward for one batch tile.

    refs = (w0, b0, w1, b1, ..., w{L-1}, b{L-1}, out_ref); weights are
    [d_in, d_out] bf16, biases [1, d_out] f32.
    """
    out_ref = refs[-1]
    wb = refs[:-1]

    # F.normalize(input, dim=1): torch clamps the norm at eps=1e-12, which is
    # rsqrt(max(ss, 1e-24)).  It is a per-row scale, so it is folded into the
    # f32 accumulator of the first matmul (single EUP rsqrt; keeps the encoder
    # layer K-tiling friendly and avoids re-rounding normalized rows to bf16).
    x = x_ref[...]
    xf = x.astype(jnp.float32)
    ss = jnp.sum(xf * xf, axis=1, keepdims=True)
    inv_norm = lax.rsqrt(jnp.maximum(ss, 1e-24))

    # TODO(synk): nn.Dropout(0.5) is identity here (eval-mode semantics);
    # training-mode masking would need pltpu.prng_* and cannot match torch RNG.

    w0 = wb[0][...]
    b0 = wb[1][...].astype(jnp.float32)
    h = jnp.dot(x.astype(w0.dtype), w0,
                preferred_element_type=jnp.float32) * inv_norm + b0

    # Chain of Linear layers; tanh after every layer except the last (the
    # original `len(self.weights) - 1` read as "number of layers", matching the
    # intended Multi-DAE architecture).
    for i in range(1, n_layers):
        h = jnp.tanh(h.astype(jnp.bfloat16) if bf16_tanh else h)
        w = wb[2 * i][...]
        b = wb[2 * i + 1][...].astype(jnp.float32)
        h = jnp.dot(h.astype(w.dtype), w, preferred_element_type=jnp.float32) + b

    out_ref[...] = h.astype(out_ref.dtype)


# --------------------------------------------------------------------------- #
# Parameter preparation (one-time, outside the hot path)
# --------------------------------------------------------------------------- #
def prepare_params(weights, biases, *, weight_dtype=jnp.bfloat16):
    """One-time padding/cast of parameters.

    weights[i] is [d_in, d_out] (pre-transposed vs torch nn.Linear).  Every
    feature dim is zero-padded to a multiple of 128 so all kernel loads/stores
    are lane-dense; zero padding is exact for this network (zero ss
    contribution, zero weight rows / bias cols, tanh(0) = 0).
    """
    dims = [int(weights[0].shape[0])] + [int(w.shape[1]) for w in weights]
    pdims = [_round_up(d, 128) for d in dims]
    wp, bp = [], []
    for i, (w, b) in enumerate(zip(weights, biases)):
        w = jnp.asarray(w, weight_dtype)
        b = jnp.reshape(jnp.asarray(b, jnp.float32), (1, -1))
        wi = jnp.zeros((pdims[i], pdims[i + 1]), weight_dtype)
        wi = wi.at[: w.shape[0], : w.shape[1]].set(w)
        bi = jnp.zeros((1, pdims[i + 1]), jnp.float32)
        bi = bi.at[:, : b.shape[1]].set(b)
        wp.append(wi)
        bp.append(bi)
    return dict(dims=dims, pdims=pdims, weights=wp, biases=bp)


def _default_tile_b(batch, pdims, weight_bytes, vmem_limit):
    """Batch tile: big enough to amortize per-grid-step overhead and I/O DMAs,
    >=2 parallel steps on v7x's two TensorCores, and VMEM-fit checked."""
    kind = _device_kind()
    pref = 256 if _is_v7(kind) else 512          # v5e/v6e have 128 MiB VMEM
    tile_b = min(pref, _round_up(max(batch, 8), 8))
    if _is_v7(kind):
        # 2 TensorCores per chip: keep the single "parallel" axis at >=2 steps.
        half = _round_up(max(pl.cdiv(batch, 2), 8), 8)
        tile_b = min(tile_b, half)

    def fits(tb):
        io = 2 * tb * (pdims[0] + pdims[-1]) * 2       # bf16 x/out, double-buffered
        act = 4 * tb * max(pdims) * 4                  # f32 intermediates (+slack)
        return weight_bytes + io + act <= vmem_limit

    while tile_b > 8 and not fits(tile_b):
        tile_b = max(8, _round_up(tile_b // 2, 8))
    return max(8, _round_up(tile_b, 8))


# --------------------------------------------------------------------------- #
# Forward wrapper
# --------------------------------------------------------------------------- #
def multidae_forward(x, params, *, tile_b=None, io_dtype=jnp.bfloat16,
                     vmem_limit_bytes=None, bf16_tanh=None):
    """Fused MultiDAE forward: one Pallas kernel, grid over batch tiles."""
    dims, pdims = params["dims"], params["pdims"]
    wp, bp = params["weights"], params["biases"]
    n_layers = len(wp)
    B, d_in = x.shape
    assert d_in == dims[0], "x feature dim must match the first layer"
    d_out = dims[-1]

    kind = _device_kind()
    if bf16_tanh is None:
        bf16_tanh = not _is_v5(kind)             # v6e/v7x EUP has a bf16 path
    if vmem_limit_bytes is None:
        vmem_limit_bytes = _vmem_limit_bytes()

    weight_bytes = sum(w.nbytes for w in wp) + sum(b.nbytes for b in bp)
    if tile_b is None:
        tile_b = _default_tile_b(B, pdims, weight_bytes, vmem_limit_bytes)
    tile_b = max(8, _round_up(tile_b, 8))
    Bp = _round_up(B, tile_b)

    # bf16 I/O: halves HBM<->VMEM traffic of the two widest tensors; exact for
    # non-negative click counts.
    xb = x.astype(io_dtype)
    if Bp != B or pdims[0] != d_in:
        xb = jnp.pad(xb, ((0, Bp - B), (0, pdims[0] - d_in)))

    grid = (Bp // tile_b,)

    def const_spec(shape):
        # Constant-index operand: one VMEM copy is enough; skipping the default
        # double-buffer keeps whole-network weight residency inside v7x VMEM.
        if _HAS_BUFFERED:
            return pl.BlockSpec(shape, lambda i: (0, 0),
                                pipeline_mode=pl.Buffered(1))
        return pl.BlockSpec(shape, lambda i: (0, 0))

    in_specs = [pl.BlockSpec((tile_b, pdims[0]), lambda i: (i, 0))]
    args = [xb]
    for wi, bi in zip(wp, bp):
        in_specs.append(const_spec(wi.shape))
        args.append(wi)
        in_specs.append(const_spec(bi.shape))
        args.append(bi)
    out_spec = pl.BlockSpec((tile_b, pdims[-1]), lambda i: (i, 0))

    flops = 2 * Bp * sum(pdims[i] * pdims[i + 1] for i in range(n_layers))
    transcendentals = Bp * (sum(pdims[1:-1]) + 1)        # tanh per hidden + rsqrt
    bytes_accessed = (xb.nbytes + weight_bytes
                      + Bp * pdims[-1] * jnp.dtype(io_dtype).itemsize)

    kernel = functools.partial(multidae_kernel, n_layers=n_layers,
                               bf16_tanh=bf16_tanh)

    out = pl.pallas_call(
        kernel,
        out_shape=jax.ShapeDtypeStruct((Bp, pdims[-1]), io_dtype),
        grid_spec=pltpu.PrefetchScalarGridSpec(
            num_scalar_prefetch=0,
            grid=grid,
            in_specs=in_specs,
            out_specs=out_spec,
        ),
        compiler_params=pltpu.CompilerParams(
            dimension_semantics=("parallel",),
            vmem_limit_bytes=int(vmem_limit_bytes),
        ),
        cost_estimate=pl.CostEstimate(
            flops=int(flops),
            transcendentals=int(transcendentals),
            bytes_accessed=int(bytes_accessed),
        ),
    )(*args)

    # TODO(synk): for production n_items (~20k) the first/last item-dim layers
    # must be K-tiled (encoder) / N-tiled (decoder) with f32 VMEM accumulators
    # (pl.when init/finalize) instead of whole-matrix residency, and a
    # following log-softmax / multinomial NLL should be fused into the N-tiled
    # decoder pass (online logsumexp) to avoid materializing B x n_items logits.
    return out[:B, :d_out]


# --------------------------------------------------------------------------- #
# Init + reference
# --------------------------------------------------------------------------- #
def init_params(p_dims, key, *, q_dims=None, weight_dtype=jnp.bfloat16):
    """Matches MultiDAE.init_weights shapes/statistics.

    Weights are returned transposed ([d_in, d_out]) vs torch's nn.Linear
    ([d_out, d_in]); std = sqrt(2/(fan_in+fan_out)) is symmetric so the
    distribution is unchanged.  Weights in bf16 (MXU-native), biases f32.
    """
    if q_dims is None:
        q_dims = p_dims[::-1]
    dims = list(q_dims) + list(p_dims[1:])
    weights, biases = [], []
    for d_in, d_out in zip(dims[:-1], dims[1:]):
        key, wk, bk = jax.random.split(key, 3)
        std = math.sqrt(2.0 / (d_in + d_out))
        weights.append((jax.random.normal(wk, (d_in, d_out), jnp.float32)
                        * std).astype(weight_dtype))
        biases.append(jax.random.normal(bk, (1, d_out), jnp.float32) * 0.001)
    return weights, biases


def multidae_reference(x, weights, biases, *, io_dtype=jnp.bfloat16,
                       bf16_tanh=True):
    """Pure-JAX reference mirroring the kernel's exact dtype policy."""
    xb = x.astype(io_dtype)
    xf = xb.astype(jnp.float32)
    ss = jnp.sum(xf * xf, axis=1, keepdims=True)
    inv = lax.rsqrt(jnp.maximum(ss, 1e-24))
    n = len(weights)
    w0 = weights[0]
    b0 = jnp.reshape(biases[0], (1, -1)).astype(jnp.float32)
    h = jnp.dot(xb.astype(w0.dtype), w0,
                preferred_element_type=jnp.float32) * inv + b0
    for i in range(1, n):
        h = jnp.tanh(h.astype(jnp.bfloat16) if bf16_tanh else h)
        w = weights[i]
        b = jnp.reshape(biases[i], (1, -1)).astype(jnp.float32)
        h = jnp.dot(h.astype(w.dtype), w, preferred_element_type=jnp.float32) + b
    return h.astype(io_dtype)


# --------------------------------------------------------------------------- #
# Demo / self-test
# --------------------------------------------------------------------------- #
if __name__ == "__main__":
    key = jax.random.PRNGKey(0)
    k_x, k_p = jax.random.split(key)

    # Small demo dims (all multiples of 128): dims = [512, 256, 128, 256, 512].
    p_dims = [128, 256, 512]
    B = 256
    n_items = p_dims[-1]

    # Non-negative "click counts"-style input, as in collaborative filtering.
    x = jnp.abs(jax.random.normal(k_x, (B, n_items), jnp.float32))

    weights, biases = init_params(p_dims, k_p)
    params = prepare_params(weights, biases)       # one-time pad + bf16 cast

    bf16_tanh = not _is_v5(_device_kind())
    out = multidae_forward(x, params, bf16_tanh=bf16_tanh)
    out = jax.block_until_ready(out)

    ref = multidae_reference(x, weights, biases, bf16_tanh=bf16_tanh)
    assert out.shape == (B, n_items)
    o32 = out.astype(jnp.float32)
    r32 = ref.astype(jnp.float32)
    max_err = float(jnp.max(jnp.abs(o32 - r32)))
    assert jnp.allclose(o32, r32, atol=3e-2, rtol=3e-2), (
        f"mismatch vs reference (max abs err {max_err})")

    print("KERNEL_OK")
</pallas_src>

<mosaic_0001>
module attributes {stable_mosaic.version = 11 : i64} {
  func.func @multidae_kernel(%arg0: i32, %arg1: memref<256x512xbf16, #tpu.memory_space<vmem>>, %arg2: memref<512x256xbf16, #tpu.memory_space<vmem>>, %arg3: memref<1x256xf32, #tpu.memory_space<vmem>>, %arg4: memref<256x128xbf16, #tpu.memory_space<vmem>>, %arg5: memref<1x128xf32, #tpu.memory_space<vmem>>, %arg6: memref<128x256xbf16, #tpu.memory_space<vmem>>, %arg7: memref<1x256xf32, #tpu.memory_space<vmem>>, %arg8: memref<256x512xbf16, #tpu.memory_space<vmem>>, %arg9: memref<1x512xf32, #tpu.memory_space<vmem>>, %arg10: memref<256x512xbf16, #tpu.memory_space<vmem>>) attributes {dimension_semantics = [#tpu.dimension_semantics<parallel>], iteration_bounds = array<i64: 1>, scalar_prefetch = 0 : i64, scratch_operands = 0 : i64, tpu.core_type = #tpu.core_type<tc>, window_params = [{transform_indices = @transform_0, window_bounds = array<i64: 256, 512>}, {pipeline_mode = #tpu.pipeline_mode<synchronous>, transform_indices = @transform_1, window_bounds = array<i64: 512, 256>}, {pipeline_mode = #tpu.pipeline_mode<synchronous>, transform_indices = @transform_2, window_bounds = array<i64: 1, 256>}, {pipeline_mode = #tpu.pipeline_mode<synchronous>, transform_indices = @transform_3, window_bounds = array<i64: 256, 128>}, {pipeline_mode = #tpu.pipeline_mode<synchronous>, transform_indices = @transform_4, window_bounds = array<i64: 1, 128>}, {pipeline_mode = #tpu.pipeline_mode<synchronous>, transform_indices = @transform_5, window_bounds = array<i64: 128, 256>}, {pipeline_mode = #tpu.pipeline_mode<synchronous>, transform_indices = @transform_6, window_bounds = array<i64: 1, 256>}, {pipeline_mode = #tpu.pipeline_mode<synchronous>, transform_indices = @transform_7, window_bounds = array<i64: 256, 512>}, {pipeline_mode = #tpu.pipeline_mode<synchronous>, transform_indices = @transform_8, window_bounds = array<i64: 1, 512>}, {transform_indices = @transform_9, window_bounds = array<i64: 256, 512>}]} {
    %c0 = arith.constant 0 : index
    %c0_0 = arith.constant 0 : index
    %0 = vector.load %arg1[%c0, %c0_0] : memref<256x512xbf16, #tpu.memory_space<vmem>>, vector<256x512xbf16>
    %1 = arith.extf %0 : vector<256x512xbf16> to vector<256x512xf32>
    %2 = arith.mulf %1, %1 : vector<256x512xf32>
    %cst = arith.constant dense<0.000000e+00> : vector<256xf32>
    %3 = vector.multi_reduction <add>, %2, %cst [1] : vector<256x512xf32> to vector<256xf32>
    %4 = vector.shape_cast %3 : vector<256xf32> to vector<256x1xf32>
    %cst_1 = arith.constant 1.000000e-24 : f32
    %5 = vector.broadcast %cst_1 : f32 to vector<256x1xf32>
    %6 = arith.maximumf %4, %5 : vector<256x1xf32>
    %7 = math.rsqrt %6 : vector<256x1xf32>
    %c0_2 = arith.constant 0 : index
    %c0_3 = arith.constant 0 : index
    %8 = vector.load %arg2[%c0_2, %c0_3] : memref<512x256xbf16, #tpu.memory_space<vmem>>, vector<512x256xbf16>
    %c0_4 = arith.constant 0 : index
    %c0_5 = arith.constant 0 : index
    %9 = vector.load %arg3[%c0_4, %c0_5] : memref<1x256xf32, #tpu.memory_space<vmem>>, vector<1x256xf32>
    %cst_6 = arith.constant dense<0.000000e+00> : vector<256x256xf32>
    %10 = tpu.matmul %0, %8, %cst_6 {dimension_numbers = #tpu.dot_dimension_numbers<[1], [0], [0], [1], [0, 0, 1, 1], [], []>} : vector<256x512xbf16>, vector<512x256xbf16>, vector<256x256xf32> -> vector<256x256xf32>
    %11 = vector.broadcast %7 : vector<256x1xf32> to vector<256x256xf32>
    %12 = arith.mulf %10, %11 : vector<256x256xf32>
    %13 = vector.broadcast %9 : vector<1x256xf32> to vector<256x256xf32>
    %14 = arith.addf %12, %13 : vector<256x256xf32>
    %15 = arith.truncf %14 : vector<256x256xf32> to vector<256x256xbf16>
    %16 = math.tanh %15 : vector<256x256xbf16>
    %c0_7 = arith.constant 0 : index
    %c0_8 = arith.constant 0 : index
    %17 = vector.load %arg4[%c0_7, %c0_8] : memref<256x128xbf16, #tpu.memory_space<vmem>>, vector<256x128xbf16>
    %c0_9 = arith.constant 0 : index
    %c0_10 = arith.constant 0 : index
    %18 = vector.load %arg5[%c0_9, %c0_10] : memref<1x128xf32, #tpu.memory_space<vmem>>, vector<1x128xf32>
    %cst_11 = arith.constant dense<0.000000e+00> : vector<256x128xf32>
    %19 = tpu.matmul %16, %17, %cst_11 {dimension_numbers = #tpu.dot_dimension_numbers<[1], [0], [0], [1], [0, 0, 1, 1], [], []>} : vector<256x256xbf16>, vector<256x128xbf16>, vector<256x128xf32> -> vector<256x128xf32>
    %20 = vector.broadcast %18 : vector<1x128xf32> to vector<256x128xf32>
    %21 = arith.addf %19, %20 : vector<256x128xf32>
    %22 = arith.truncf %21 : vector<256x128xf32> to vector<256x128xbf16>
    %23 = math.tanh %22 : vector<256x128xbf16>
    %c0_12 = arith.constant 0 : index
    %c0_13 = arith.constant 0 : index
    %24 = vector.load %arg6[%c0_12, %c0_13] : memref<128x256xbf16, #tpu.memory_space<vmem>>, vector<128x256xbf16>
    %c0_14 = arith.constant 0 : index
    %c0_15 = arith.constant 0 : index
    %25 = vector.load %arg7[%c0_14, %c0_15] : memref<1x256xf32, #tpu.memory_space<vmem>>, vector<1x256xf32>
    %cst_16 = arith.constant dense<0.000000e+00> : vector<256x256xf32>
    %26 = tpu.matmul %23, %24, %cst_16 {dimension_numbers = #tpu.dot_dimension_numbers<[1], [0], [0], [1], [0, 0, 1, 1], [], []>} : vector<256x128xbf16>, vector<128x256xbf16>, vector<256x256xf32> -> vector<256x256xf32>
    %27 = vector.broadcast %25 : vector<1x256xf32> to vector<256x256xf32>
    %28 = arith.addf %26, %27 : vector<256x256xf32>
    %29 = arith.truncf %28 : vector<256x256xf32> to vector<256x256xbf16>
    %30 = math.tanh %29 : vector<256x256xbf16>
    %c0_17 = arith.constant 0 : index
    %c0_18 = arith.constant 0 : index
    %31 = vector.load %arg8[%c0_17, %c0_18] : memref<256x512xbf16, #tpu.memory_space<vmem>>, vector<256x512xbf16>
    %c0_19 = arith.constant 0 : index
    %c0_20 = arith.constant 0 : index
    %32 = vector.load %arg9[%c0_19, %c0_20] : memref<1x512xf32, #tpu.memory_space<vmem>>, vector<1x512xf32>
    %cst_21 = arith.constant dense<0.000000e+00> : vector<256x512xf32>
    %33 = tpu.matmul %30, %31, %cst_21 {dimension_numbers = #tpu.dot_dimension_numbers<[1], [0], [0], [1], [0, 0, 1, 1], [], []>} : vector<256x256xbf16>, vector<256x512xbf16>, vector<256x512xf32> -> vector<256x512xf32>
    %34 = vector.broadcast %32 : vector<1x512xf32> to vector<256x512xf32>
    %35 = arith.addf %33, %34 : vector<256x512xf32>
    %36 = arith.truncf %35 : vector<256x512xf32> to vector<256x512xbf16>
    %c0_22 = arith.constant 0 : index
    %c0_23 = arith.constant 0 : index
    %37 = vector.load %arg10[%c0_22, %c0_23] : memref<256x512xbf16, #tpu.memory_space<vmem>>, vector<256x512xbf16>
    tpu.vector_store %arg10[%c0_22, %c0_23], %36 {strides = array<i32>} : memref<256x512xbf16, #tpu.memory_space<vmem>>, vector<256x512xbf16>,
    return
  }
  func.func @transform_0(%arg0: i32) -> (i32, i32) {
    %c0_i32 = arith.constant 0 : i32
    %c0_i32_0 = arith.constant 0 : i32
    return %arg0, %c0_i32 : i32, i32
  }
  func.func @transform_1(%arg0: i32) -> (i32, i32) {
    %c0_i32 = arith.constant 0 : i32
    %c0_i32_0 = arith.constant 0 : i32
    %c0_i32_1 = arith.constant 0 : i32
    return %c0_i32, %c0_i32_0 : i32, i32
  }
  func.func @transform_2(%arg0: i32) -> (i32, i32) {
    %c0_i32 = arith.constant 0 : i32
    %c0_i32_0 = arith.constant 0 : i32
    %c0_i32_1 = arith.constant 0 : i32
    return %c0_i32, %c0_i32_0 : i32, i32
  }
  func.func @transform_3(%arg0: i32) -> (i32, i32) {
    %c0_i32 = arith.constant 0 : i32
    %c0_i32_0 = arith.constant 0 : i32
    %c0_i32_1 = arith.constant 0 : i32
    return %c0_i32, %c0_i32_0 : i32, i32
  }
  func.func @transform_4(%arg0: i32) -> (i32, i32) {
    %c0_i32 = arith.constant 0 : i32
    %c0_i32_0 = arith.constant 0 : i32
    %c0_i32_1 = arith.constant 0 : i32
    return %c0_i32, %c0_i32_0 : i32, i32
  }
  func.func @transform_5(%arg0: i32) -> (i32, i32) {
    %c0_i32 = arith.constant 0 : i32
    %c0_i32_0 = arith.constant 0 : i32
    %c0_i32_1 = arith.constant 0 : i32
    return %c0_i32, %c0_i32_0 : i32, i32
  }
  func.func @transform_6(%arg0: i32) -> (i32, i32) {
    %c0_i32 = arith.constant 0 : i32
    %c0_i32_0 = arith.constant 0 : i32
    %c0_i32_1 = arith.constant 0 : i32
    return %c0_i32, %c0_i32_0 : i32, i32
  }
  func.func @transform_7(%arg0: i32) -> (i32, i32) {
    %c0_i32 = arith.constant 0 : i32
    %c0_i32_0 = arith.constant 0 : i32
    %c0_i32_1 = arith.constant 0 : i32
    return %c0_i32, %c0_i32_0 : i32, i32
  }
  func.func @transform_8(%arg0: i32) -> (i32, i32) {
    %c0_i32 = arith.constant 0 : i32
    %c0_i32_0 = arith.constant 0 : i32
    %c0_i32_1 = arith.constant 0 : i32
    return %c0_i32, %c0_i32_0 : i32, i32
  }
  func.func @transform_9(%arg0: i32) -> (i32, i32) {
    %c0_i32 = arith.constant 0 : i32
    %c0_i32_0 = arith.constant 0 : i32
    return %arg0, %c0_i32 : i32, i32
  }
}

</mosaic_0001>

<llo_original>
// kernel: tpu_custom_call.1
$region0: #{tpu_custom_call.1}
  #allocation0 [shape = 'u32[]', space=smem, size = 0x4, offset = 0x4, fixed_abs, tag = 'smem constant byte address 0x4 - core index']
  #allocation1 [shape = 'u32[72,128]{1,0:T(1,128)}', space=vmem, size = 0x9000, scoped, tag = 'internal scratch']
  %s0 = inlined_call_operand.hbm [shape: bf16[256,512], index: 0, kind: input, shape index: {}]
  %s1 = inlined_call_operand.hbm [shape: bf16[512,256], index: 1, kind: input, shape index: {}]
  %s2 = inlined_call_operand.hbm [shape: f32[1,256], index: 2, kind: input, shape index: {}]
  %s3 = inlined_call_operand.hbm [shape: bf16[256,128], index: 3, kind: input, shape index: {}]
  %s4 = inlined_call_operand.vmem [shape: f32[1,128], index: 4, kind: input, shape index: {}]
  %s5 = inlined_call_operand.hbm [shape: bf16[128,256], index: 5, kind: input, shape index: {}]
  %s6 = inlined_call_operand.vmem [shape: f32[1,256], index: 6, kind: input, shape index: {}]
  %s7 = inlined_call_operand.hbm [shape: bf16[256,512], index: 7, kind: input, shape index: {}]
  %s8 = inlined_call_operand.vmem [shape: f32[1,512], index: 8, kind: input, shape index: {}]
  %s9 = inlined_call_operand.hbm [shape: bf16[256,512], index: 9, kind: output, shape index: {}]
  %s10 = sld [smem:[#allocation0]]
  $region70: #{tpu_custom_call.1} parent=0
    _
  %s12 = ssub.s32 1, %s10
  %s13 = scalar_select 0, %s12, %s10
  $region1: #{tpu_custom_call.1} parent=0
    #allocation2 [shape = 'u8[262144]{0}', space=vmem, size = 0x40000, scoped, tag = 'input window, operand 0, single buffered']
    #allocation3 [shape = 's32[1]{0}', space=sflag, size = 0x4, scoped, tag = 'scoped memory for tpu_custom_call.1']
    #allocation4 [shape = 's32[1]{0}', space=sflag, size = 0x4, scoped, tag = 'scoped memory for tpu_custom_call.1']
    #allocation5 [shape = 'u8[262144]{0}', space=vmem, size = 0x40000, scoped, tag = 'input window, operand 1, single buffered']
    #allocation6 [shape = 's32[1]{0}', space=sflag, size = 0x4, scoped, tag = 'scoped memory for tpu_custom_call.1']
    #allocation7 [shape = 'u8[1024]{0}', space=vmem, size = 0x400, scoped, tag = 'input window, operand 2, single buffered']
    #allocation8 [shape = 'u8[65536]{0}', space=vmem, size = 0x10000, scoped, tag = 'input window, operand 3, single buffered']
    #allocation9 [shape = 's32[1]{0}', space=sflag, size = 0x4, scoped, tag = 'scoped memory for tpu_custom_call.1']
    #allocation10 [shape = 'u8[65536]{0}', space=vmem, size = 0x10000, scoped, tag = 'input window, operand 5, single buffered']
    #allocation11 [shape = 'u8[262144]{0}', space=vmem, size = 0x40000, scoped, tag = 'input window, operand 7, single buffered']
    #allocation12 [shape = 's32[1]{0}', space=sflag, size = 0x4, scoped, tag = 'scoped memory for tpu_custom_call.1']
    #allocation13 [shape = 'u8[262144]{0}', space=vmem, size = 0x40000, scoped, tag = 'output window, operand 0, single buffered']
    %14 = vsyncpa [#allocation3], 0
    %15 = vsyncpa [#allocation6], 0
    %16 = vsyncpa [#allocation9], 0
    %17 = vsyncpa [#allocation12], 0
    %18 = vsyncpa [#allocation4], 0
    // Predicated region
    $region2: #{tpu_custom_call.1} parent=1 // pred_check
      _
    $region3: #{tpu_custom_call.1} parent=1 // pred_check_branch
      %20 = sbr.rel (0) target = $region5
    $region4: #{tpu_custom_call.1} parent=1 // pred_region
      %22 = vsyncadd [#allocation3], 0
      %s23 = sshll.u32 %s0, 4
      %s24 = int_to_ptr.hbm [resolvable:$true] %s23
      %s25 = sshll.u32 [#allocation2], 4
      %s26 = int_to_ptr.vmem [resolvable:$true] %s25
      %31 = dma.hbm_to_vmem [thread:$0]  %s24, 8192, %s26, [#allocation3], 256, 256, 16
    $region5: #{tpu_custom_call.1} parent=1 // pred_fallthru
      _
    // Predicated region
    $region6: #{tpu_custom_call.1} parent=1 // pred_check
      _
    $region7: #{tpu_custom_call.1} parent=1 // pred_check_branch
      %33 = sbr.rel (0) target = $region9
    $region8: #{tpu_custom_call.1} parent=1 // pred_region
      %35 = vsyncadd [#allocation6], 0
      %s36 = sshll.u32 %s1, 4
      %s37 = int_to_ptr.hbm [resolvable:$true] %s36
      %s38 = sshll.u32 [#allocation5], 4
      %s39 = int_to_ptr.vmem [resolvable:$true] %s38
      %44 = dma.hbm_to_vmem [thread:$0]  %s37, 8192, %s39, [#allocation6], 128, 128, 8
    $region9: #{tpu_custom_call.1} parent=1 // pred_fallthru
      _
    // Predicated region
    $region10: #{tpu_custom_call.1} parent=1 // pred_check
      _
    $region11: #{tpu_custom_call.1} parent=1 // pred_check_branch
      %46 = sbr.rel (0) target = $region13
    $region12: #{tpu_custom_call.1} parent=1 // pred_region
      %48 = vsyncadd [#allocation6], 0
      %s50 = sshll.u32 %s2, 4
      %s51 = int_to_ptr.hbm [resolvable:$true] %s50
      %s52 = sshll.u32 [#allocation7], 4
      %s53 = int_to_ptr.vmem [resolvable:$true] %s52
      %55 = dma.hbm_to_vmem [thread:$0]  %s51, 32, %s53, [#allocation6]
    $region13: #{tpu_custom_call.1} parent=1 // pred_fallthru
      _
    // Predicated region
    $region14: #{tpu_custom_call.1} parent=1 // pred_check
      _
    $region15: #{tpu_custom_call.1} parent=1 // pred_check_branch
      %57 = sbr.rel (0) target = $region17
    $region16: #{tpu_custom_call.1} parent=1 // pred_region
      %59 = vsyncadd [#allocation9], 0
      %s60 = sshll.u32 %s3, 4
      %s61 = int_to_ptr.hbm [resolvable:$true] %s60
      %s62 = sshll.u32 [#allocation8], 4
      %s63 = int_to_ptr.vmem [resolvable:$true] %s62
      %68 = dma.hbm_to_vmem [thread:$0]  %s61, 2048, %s63, [#allocation9], 64, 64, 4
    $region17: #{tpu_custom_call.1} parent=1 // pred_fallthru
      _
    // Predicated region
    $region18: #{tpu_custom_call.1} parent=1 // pred_check
      _
    $region19: #{tpu_custom_call.1} parent=1 // pred_check_branch
      %70 = sbr.rel (0) target = $region21
    $region20: #{tpu_custom_call.1} parent=1 // pred_region
      _
    $region21: #{tpu_custom_call.1} parent=1 // pred_fallthru
      _
    // Predicated region
    $region22: #{tpu_custom_call.1} parent=1 // pred_check
      _
    $region23: #{tpu_custom_call.1} parent=1 // pred_check_branch
      %72 = sbr.rel (0) target = $region25
    $region24: #{tpu_custom_call.1} parent=1 // pred_region
      %74 = vsyncadd [#allocation9], 0
      %s75 = sshll.u32 %s5, 4
      %s76 = int_to_ptr.hbm [resolvable:$true] %s75
      %s77 = sshll.u32 [#allocation10], 4
      %s78 = int_to_ptr.vmem [resolvable:$true] %s77
      %83 = dma.hbm_to_vmem [thread:$0]  %s76, 2048, %s78, [#allocation9], 128, 128, 8
    $region25: #{tpu_custom_call.1} parent=1 // pred_fallthru
      _
    // Predicated region
    $region26: #{tpu_custom_call.1} parent=1 // pred_check
      _
    $region27: #{tpu_custom_call.1} parent=1 // pred_check_branch
      %85 = sbr.rel (0) target = $region29
    $region28: #{tpu_custom_call.1} parent=1 // pred_region
      _
    $region29: #{tpu_custom_call.1} parent=1 // pred_fallthru
      _
    // Predicated region
    $region30: #{tpu_custom_call.1} parent=1 // pred_check
      _
    $region31: #{tpu_custom_call.1} parent=1 // pred_check_branch
      %87 = sbr.rel (0) target = $region33
    $region32: #{tpu_custom_call.1} parent=1 // pred_region
      %89 = vsyncadd [#allocation12], 0
      %s90 = sshll.u32 %s7, 4
      %s91 = int_to_ptr.hbm [resolvable:$true] %s90
      %s92 = sshll.u32 [#allocation11], 4
      %s93 = int_to_ptr.vmem [resolvable:$true] %s92
      %98 = dma.hbm_to_vmem [thread:$0]  %s91, 8192, %s93, [#allocation12], 256, 256, 16
    $region33: #{tpu_custom_call.1} parent=1 // pred_fallthru
      _
    // Predicated region
    $region34: #{tpu_custom_call.1} parent=1 // pred_check
      _
    $region35: #{tpu_custom_call.1} parent=1 // pred_check_branch
      %100 = sbr.rel (0) target = $region37
    $region36: #{tpu_custom_call.1} parent=1 // pred_region
      _
    $region37: #{tpu_custom_call.1} parent=1 // pred_fallthru
      _
    // Predicated region
    $region38: #{tpu_custom_call.1} parent=1 // pred_check
      _
    $region39: #{tpu_custom_call.1} parent=1 // pred_check_branch
      %102 = sbr.rel (0) target = $region41
    $region40: #{tpu_custom_call.1} parent=1 // pred_region
      %104 = dma.done [#allocation3], 8192
    $region41: #{tpu_custom_call.1} parent=1 // pred_fallthru
      _
    // Predicated region
    $region42: #{tpu_custom_call.1} parent=1 // pred_check
      _
    $region43: #{tpu_custom_call.1} parent=1 // pred_check_branch
      %106 = sbr.rel (0) target = $region45
    $region44: #{tpu_custom_call.1} parent=1 // pred_region
      %108 = dma.done [#allocation6], 8192
    $region45: #{tpu_custom_call.1} parent=1 // pred_fallthru
      _
    // Predicated region
    $region46: #{tpu_custom_call.1} parent=1 // pred_check
      _
    $region47: #{tpu_custom_call.1} parent=1 // pred_check_branch
      %110 = sbr.rel (0) target = $region49
    $region48: #{tpu_custom_call.1} parent=1 // pred_region
      %112 = dma.done [#allocation6], 32
    $region49: #{tpu_custom_call.1} parent=1 // pred_fallthru
      _
    // Predicated region
    $region50: #{tpu_custom_call.1} parent=1 // pred_check
      _
    $region51: #{tpu_custom_call.1} parent=1 // pred_check_branch
      %114 = sbr.rel (0) target = $region53
    $region52: #{tpu_custom_call.1} parent=1 // pred_region
      %116 = dma.done [#allocation9], 2048
    $region53: #{tpu_custom_call.1} parent=1 // pred_fallthru
      _
    // Predicated region
    $region54: #{tpu_custom_call.1} parent=1 // pred_check
      _
    $region55: #{tpu_custom_call.1} parent=1 // pred_check_branch
      %118 = sbr.rel (0) target = $region57
    $region56: #{tpu_custom_call.1} parent=1 // pred_region
      %120 = dma.done [#allocation9], 2048
    $region57: #{tpu_custom_call.1} parent=1 // pred_fallthru
      _
    // Predicated region
    $region58: #{tpu_custom_call.1} parent=1 // pred_check
      _
    $region59: #{tpu_custom_call.1} parent=1 // pred_check_branch
      %122 = sbr.rel (0) target = $region61
    $region60: #{tpu_custom_call.1} parent=1 // pred_region
      %124 = dma.done [#allocation12], 8192
    $region61: #{tpu_custom_call.1} parent=1 // pred_fallthru
      _
    %v125 = vld [vmem:[#allocation2] sm:$0xff]
    %v126 = vld [vmem:[#allocation2 + $0x8] sm:$0xff]
    %v127 = vld [vmem:[#allocation2 + $0x10] sm:$0xff]
    %v128 = vld [vmem:[#allocation2 + $0x18] sm:$0xff]
    %v129 = vld [vmem:[#allocation2 + $0x20] sm:$0xff]
    %v130 = vld [vmem:[#allocation2 + $0x28] sm:$0xff]
    %v131 = vld [vmem:[#allocation2 + $0x30] sm:$0xff]
    %v132 = vld [vmem:[#allocation2 + $0x38] sm:$0xff]
    %v133 = vld [vmem:[#allocation2 + $0x40] sm:$0xff]
    %v134 = vld [vmem:[#allocation2 + $0x48] sm:$0xff]
    %v135 = vld [vmem:[#allocation2 + $0x50] sm:$0xff]
    %v136 = vld [vmem:[#allocation2 + $0x58] sm:$0xff]
    %v137 = vld [vmem:[#allocation2 + $0x60] sm:$0xff]
    %v138 = vld [vmem:[#allocation2 + $0x68] sm:$0xff]
    %v139 = vld [vmem:[#allocation2 + $0x70] sm:$0xff]
    %v140 = vld [vmem:[#allocation2 + $0x78] sm:$0xff]
    %v141 = vld [vmem:[#allocation2 + $0x80] sm:$0xff]
    %v142 = vld [vmem:[#allocation2 + $0x88] sm:$0xff]
    %v143 = vld [vmem:[#allocation2 + $0x90] sm:$0xff]
    %v144 = vld [vmem:[#allocation2 + $0x98] sm:$0xff]
    %v145 = vld [vmem:[#allocation2 + $0xa0] sm:$0xff]
    %v146 = vld [vmem:[#allocation2 + $0xa8] sm:$0xff]
    %v147 = vld [vmem:[#allocation2 + $0xb0] sm:$0xff]
    %v148 = vld [vmem:[#allocation2 + $0xb8] sm:$0xff]
    %v149 = vld [vmem:[#allocation2 + $0xc0] sm:$0xff]
    %v150 = vld [vmem:[#allocation2 + $0xc8] sm:$0xff]
    %v151 = vld [vmem:[#allocation2 + $0xd0] sm:$0xff]
    %v152 = vld [vmem:[#allocation2 + $0xd8] sm:$0xff]
    %v153 = vld [vmem:[#allocation2 + $0xe0] sm:$0xff]
    %v154 = vld [vmem:[#allocation2 + $0xe8] sm:$0xff]
    %v155 = vld [vmem:[#allocation2 + $0xf0] sm:$0xff]
    %v156 = vld [vmem:[#allocation2 + $0xf8] sm:$0xff]
    %v157 = vld [vmem:[#allocation2 + $0x100] sm:$0xff]
    %v158 = vld [vmem:[#allocation2 + $0x108] sm:$0xff]
    %v159 = vld [vmem:[#allocation2 + $0x110] sm:$0xff]
    %v160 = vld [vmem:[#allocation2 + $0x118] sm:$0xff]
    %v161 = vld [vmem:[#allocation2 + $0x120] sm:$0xff]
    %v162 = vld [vmem:[#allocation2 + $0x128] sm:$0xff]
    %v163 = vld [vmem:[#allocation2 + $0x130] sm:$0xff]
    %v164 = vld [vmem:[#allocation2 + $0x138] sm:$0xff]
    %v165 = vld [vmem:[#allocation2 + $0x140] sm:$0xff]
    %v166 = vld [vmem:[#allocation2 + $0x148] sm:$0xff]
    %v167 = vld [vmem:[#allocation2 + $0x150] sm:$0xff]
    %v168 = vld [vmem:[#allocation2 + $0x158] sm:$0xff]
    %v169 = vld [vmem:[#allocation2 + $0x160] sm:$0xff]
    %v170 = vld [vmem:[#allocation2 + $0x168] sm:$0xff]
    %v171 = vld [vmem:[#allocation2 + $0x170] sm:$0xff]
    %v172 = vld [vmem:[#allocation2 + $0x178] sm:$0xff]
    %v173 = vld [vmem:[#allocation2 + $0x180] sm:$0xff]
    %v174 = vld [vmem:[#allocation2 + $0x188] sm:$0xff]
    %v175 = vld [vmem:[#allocation2 + $0x190] sm:$0xff]
    %v176 = vld [vmem:[#allocation2 + $0x198] sm:$0xff]
    %v177 = vld [vmem:[#allocation2 + $0x1a0] sm:$0xff]
    %v178 = vld [vmem:[#allocation2 + $0x1a8] sm:$0xff]
    %v179 = vld [vmem:[#allocation2 + $0x1b0] sm:$0xff]
    %v180 = vld [vmem:[#allocation2 + $0x1b8] sm:$0xff]
    %v181 = vld [vmem:[#allocation2 + $0x1c0] sm:$0xff]
    %v182 = vld [vmem:[#allocation2 + $0x1c8] sm:$0xff]
    %v183 = vld [vmem:[#allocation2 + $0x1d0] sm:$0xff]
    %v184 = vld [vmem:[#allocation2 + $0x1d8] sm:$0xff]
    %v185 = vld [vmem:[#allocation2 + $0x1e0] sm:$0xff]
    %v186 = vld [vmem:[#allocation2 + $0x1e8] sm:$0xff]
    %v187 = vld [vmem:[#allocation2 + $0x1f0] sm:$0xff]
    %v188 = vld [vmem:[#allocation2 + $0x1f8] sm:$0xff]
    %v189 = vunpack.c.l.bf16 %v125
    %v190 = vunpack.c.h.bf16 %v125
    %v191 = vunpack.c.l.bf16 %v126
    %v192 = vunpack.c.h.bf16 %v126
    %v193 = vunpack.c.l.bf16 %v127
    %v194 = vunpack.c.h.bf16 %v127
    %v195 = vunpack.c.l.bf16 %v128
    %v196 = vunpack.c.h.bf16 %v128
    %v197 = vunpack.c.l.bf16 %v129
    %v198 = vunpack.c.h.bf16 %v129
    %v199 = vunpack.c.l.bf16 %v130
    %v200 = vunpack.c.h.bf16 %v130
    %v201 = vunpack.c.l.bf16 %v131
    %v202 = vunpack.c.h.bf16 %v131
    %v203 = vunpack.c.l.bf16 %v132
    %v204 = vunpack.c.h.bf16 %v132
    %v205 = vunpack.c.l.bf16 %v133
    %v206 = vunpack.c.h.bf16 %v133
    %v207 = vunpack.c.l.bf16 %v134
    %v208 = vunpack.c.h.bf16 %v134
    %v209 = vunpack.c.l.bf16 %v135
    %v210 = vunpack.c.h.bf16 %v135
    %v211 = vunpack.c.l.bf16 %v136
    %v212 = vunpack.c.h.bf16 %v136
    %v213 = vunpack.c.l.bf16 %v137
    %v214 = vunpack.c.h.bf16 %v137
    %v215 = vunpack.c.l.bf16 %v138
    %v216 = vunpack.c.h.bf16 %v138
    %v217 = vunpack.c.l.bf16 %v139
    %v218 = vunpack.c.h.bf16 %v139
    %v219 = vunpack.c.l.bf16 %v140
    %v220 = vunpack.c.h.bf16 %v140
    %v221 = vunpack.c.l.bf16 %v141
    %v222 = vunpack.c.h.bf16 %v141
    %v223 = vunpack.c.l.bf16 %v142
    %v224 = vunpack.c.h.bf16 %v142
    %v225 = vunpack.c.l.bf16 %v143
    %v226 = vunpack.c.h.bf16 %v143
    %v227 = vunpack.c.l.bf16 %v144
    %v228 = vunpack.c.h.bf16 %v144
    %v229 = vunpack.c.l.bf16 %v145
    %v230 = vunpack.c.h.bf16 %v145
    %v231 = vunpack.c.l.bf16 %v146
    %v232 = vunpack.c.h.bf16 %v146
    %v233 = vunpack.c.l.bf16 %v147
    %v234 = vunpack.c.h.bf16 %v147
    %v235 = vunpack.c.l.bf16 %v148
    %v236 = vunpack.c.h.bf16 %v148
    %v237 = vunpack.c.l.bf16 %v149
    %v238 = vunpack.c.h.bf16 %v149
    %v239 = vunpack.c.l.bf16 %v150
    %v240 = vunpack.c.h.bf16 %v150
    %v241 = vunpack.c.l.bf16 %v151
    %v242 = vunpack.c.h.bf16 %v151
    %v243 = vunpack.c.l.bf16 %v152
    %v244 = vunpack.c.h.bf16 %v152
    %v245 = vunpack.c.l.bf16 %v153
    %v246 = vunpack.c.h.bf16 %v153
    %v247 = vunpack.c.l.bf16 %v154
    %v248 = vunpack.c.h.bf16 %v154
    %v249 = vunpack.c.l.bf16 %v155
    %v250 = vunpack.c.h.bf16 %v155
    %v251 = vunpack.c.l.bf16 %v156
    %v252 = vunpack.c.h.bf16 %v156
    %v253 = vunpack.c.l.bf16 %v157
    %v254 = vunpack.c.h.bf16 %v157
    %v255 = vunpack.c.l.bf16 %v158
    %v256 = vunpack.c.h.bf16 %v158
    %v257 = vunpack.c.l.bf16 %v159
    %v258 = vunpack.c.h.bf16 %v159
    %v259 = vunpack.c.l.bf16 %v160
    %v260 = vunpack.c.h.bf16 %v160
    %v261 = vunpack.c.l.bf16 %v161
    %v262 = vunpack.c.h.bf16 %v161
    %v263 = vunpack.c.l.bf16 %v162
    %v264 = vunpack.c.h.bf16 %v162
    %v265 = vunpack.c.l.bf16 %v163
    %v266 = vunpack.c.h.bf16 %v163
    %v267 = vunpack.c.l.bf16 %v164
    %v268 = vunpack.c.h.bf16 %v164
    %v269 = vunpack.c.l.bf16 %v165
    %v270 = vunpack.c.h.bf16 %v165
    %v271 = vunpack.c.l.bf16 %v166
    %v272 = vunpack.c.h.bf16 %v166
    %v273 = vunpack.c.l.bf16 %v167
    %v274 = vunpack.c.h.bf16 %v167
    %v275 = vunpack.c.l.bf16 %v168
    %v276 = vunpack.c.h.bf16 %v168
    %v277 = vunpack.c.l.bf16 %v169
    %v278 = vunpack.c.h.bf16 %v169
    %v279 = vunpack.c.l.bf16 %v170
    %v280 = vunpack.c.h.bf16 %v170
    %v281 = vunpack.c.l.bf16 %v171
    %v282 = vunpack.c.h.bf16 %v171
    %v283 = vunpack.c.l.bf16 %v172
    %v284 = vunpack.c.h.bf16 %v172
    %v285 = vunpack.c.l.bf16 %v173
    %v286 = vunpack.c.h.bf16 %v173
    %v287 = vunpack.c.l.bf16 %v174
    %v288 = vunpack.c.h.bf16 %v174
    %v289 = vunpack.c.l.bf16 %v175
    %v290 = vunpack.c.h.bf16 %v175
    %v291 = vunpack.c.l.bf16 %v176
    %v292 = vunpack.c.h.bf16 %v176
    %v293 = vunpack.c.l.bf16 %v177
    %v294 = vunpack.c.h.bf16 %v177
    %v295 = vunpack.c.l.bf16 %v178
    %v296 = vunpack.c.h.bf16 %v178
    %v297 = vunpack.c.l.bf16 %v179
    %v298 = vunpack.c.h.bf16 %v179
    %v299 = vunpack.c.l.bf16 %v180
    %v300 = vunpack.c.h.bf16 %v180
    %v301 = vunpack.c.l.bf16 %v181
    %v302 = vunpack.c.h.bf16 %v181
    %v303 = vunpack.c.l.bf16 %v182
    %v304 = vunpack.c.h.bf16 %v182
    %v305 = vunpack.c.l.bf16 %v183
    %v306 = vunpack.c.h.bf16 %v183
    %v307 = vunpack.c.l.bf16 %v184
    %v308 = vunpack.c.h.bf16 %v184
    %v309 = vunpack.c.l.bf16 %v185
    %v310 = vunpack.c.h.bf16 %v185
    %v311 = vunpack.c.l.bf16 %v186
    %v312 = vunpack.c.h.bf16 %v186
    %v313 = vunpack.c.l.bf16 %v187
    %v314 = vunpack.c.h.bf16 %v187
    %v315 = vunpack.c.l.bf16 %v188
    %v316 = vunpack.c.h.bf16 %v188
    %v317 = vmul.f32 %v189, %v189
    %v318 = vmul.f32 %v190, %v190
    %v319 = vmul.f32 %v191, %v191
    %v320 = vmul.f32 %v192, %v192
    %v321 = vmul.f32 %v193, %v193
    %v322 = vmul.f32 %v194, %v194
    %v323 = vmul.f32 %v195, %v195
    %v324 = vmul.f32 %v196, %v196
    %v325 = vmul.f32 %v197, %v197
    %v326 = vmul.f32 %v198, %v198
    %v327 = vmul.f32 %v199, %v199
    %v328 = vmul.f32 %v200, %v200
    %v329 = vmul.f32 %v201, %v201
    %v330 = vmul.f32 %v202, %v202
    %v331 = vmul.f32 %v203, %v203
    %v332 = vmul.f32 %v204, %v204
    %v333 = vmul.f32 %v205, %v205
    %v334 = vmul.f32 %v206, %v206
    %v335 = vmul.f32 %v207, %v207
    %v336 = vmul.f32 %v208, %v208
    %v337 = vmul.f32 %v209, %v209
    %v338 = vmul.f32 %v210, %v210
    %v339 = vmul.f32 %v211, %v211
    %v340 = vmul.f32 %v212, %v212
    %v341 = vmul.f32 %v213, %v213
    %v342 = vmul.f32 %v214, %v214
    %v343 = vmul.f32 %v215, %v215
    %v344 = vmul.f32 %v216, %v216
    %v345 = vmul.f32 %v217, %v217
    %v346 = vmul.f32 %v218, %v218
    %v347 = vmul.f32 %v219, %v219
    %v348 = vmul.f32 %v220, %v220
    %v349 = vmul.f32 %v221, %v221
    %v350 = vmul.f32 %v222, %v222
    %v351 = vmul.f32 %v223, %v223
    %v352 = vmul.f32 %v224, %v224
    %v353 = vmul.f32 %v225, %v225
    %v354 = vmul.f32 %v226, %v226
    %v355 = vmul.f32 %v227, %v227
    %v356 = vmul.f32 %v228, %v228
    %v357 = vmul.f32 %v229, %v229
    %v358 = vmul.f32 %v230, %v230
    %v359 = vmul.f32 %v231, %v231
    %v360 = vmul.f32 %v232, %v232
    %v361 = vmul.f32 %v233, %v233
    %v362 = vmul.f32 %v234, %v234
    %v363 = vmul.f32 %v235, %v235
    %v364 = vmul.f32 %v236, %v236
    %v365 = vmul.f32 %v237, %v237
    %v366 = vmul.f32 %v238, %v238
    %v367 = vmul.f32 %v239, %v239
    %v368 = vmul.f32 %v240, %v240
    %v369 = vmul.f32 %v241, %v241
    %v370 = vmul.f32 %v242, %v242
    %v371 = vmul.f32 %v243, %v243
    %v372 = vmul.f32 %v244, %v244
    %v373 = vmul.f32 %v245, %v245
    %v374 = vmul.f32 %v246, %v246
    %v375 = vmul.f32 %v247, %v247
    %v376 = vmul.f32 %v248, %v248
    %v377 = vmul.f32 %v249, %v249
    %v378 = vmul.f32 %v250, %v250
    %v379 = vmul.f32 %v251, %v251
    %v380 = vmul.f32 %v252, %v252
    %v381 = vmul.f32 %v253, %v253
    %v382 = vmul.f32 %v254, %v254
    %v383 = vmul.f32 %v255, %v255
    %v384 = vmul.f32 %v256, %v256
    %v385 = vmul.f32 %v257, %v257
    %v386 = vmul.f32 %v258, %v258
    %v387 = vmul.f32 %v259, %v259
    %v388 = vmul.f32 %v260, %v260
    %v389 = vmul.f32 %v261, %v261
    %v390 = vmul.f32 %v262, %v262
    %v391 = vmul.f32 %v263, %v263
    %v392 = vmul.f32 %v264, %v264
    %v393 = vmul.f32 %v265, %v265
    %v394 = vmul.f32 %v266, %v266
    %v395 = vmul.f32 %v267, %v267
    %v396 = vmul.f32 %v268, %v268
    %v397 = vmul.f32 %v269, %v269
    %v398 = vmul.f32 %v270, %v270
    %v399 = vmul.f32 %v271, %v271
    %v400 = vmul.f32 %v272, %v272
    %v401 = vmul.f32 %v273, %v273
    %v402 = vmul.f32 %v274, %v274
    %v403 = vmul.f32 %v275, %v275
    %v404 = vmul.f32 %v276, %v276
    %v405 = vmul.f32 %v277, %v277
    %v406 = vmul.f32 %v278, %v278
    %v407 = vmul.f32 %v279, %v279
    %v408 = vmul.f32 %v280, %v280
    %v409 = vmul.f32 %v281, %v281
    %v410 = vmul.f32 %v282, %v282
    %v411 = vmul.f32 %v283, %v283
    %v412 = vmul.f32 %v284, %v284
    %v413 = vmul.f32 %v285, %v285
    %v414 = vmul.f32 %v286, %v286
    %v415 = vmul.f32 %v287, %v287
    %v416 = vmul.f32 %v288, %v288
    %v417 = vmul.f32 %v289, %v289
    %v418 = vmul.f32 %v290, %v290
    %v419 = vmul.f32 %v291, %v291
    %v420 = vmul.f32 %v292, %v292
    %v421 = vmul.f32 %v293, %v293
    %v422 = vmul.f32 %v294, %v294
    %v423 = vmul.f32 %v295, %v295
    %v424 = vmul.f32 %v296, %v296
    %v425 = vmul.f32 %v297, %v297
    %v426 = vmul.f32 %v298, %v298
    %v427 = vmul.f32 %v299, %v299
    %v428 = vmul.f32 %v300, %v300
    %v429 = vmul.f32 %v301, %v301
    %v430 = vmul.f32 %v302, %v302
    %v431 = vmul.f32 %v303, %v303
    %v432 = vmul.f32 %v304, %v304
    %v433 = vmul.f32 %v305, %v305
    %v434 = vmul.f32 %v306, %v306
    %v435 = vmul.f32 %v307, %v307
    %v436 = vmul.f32 %v308, %v308
    %v437 = vmul.f32 %v309, %v309
    %v438 = vmul.f32 %v310, %v310
    %v439 = vmul.f32 %v311, %v311
    %v440 = vmul.f32 %v312, %v312
    %v441 = vmul.f32 %v313, %v313
    %v442 = vmul.f32 %v314, %v314
    %v443 = vmul.f32 %v315, %v315
    %v444 = vmul.f32 %v316, %v316
    %v445 = vadd.f32 %v317, %v318
    %v446 = vadd.f32 %v445, %v319
    %v447 = vadd.f32 %v446, %v320
    %448 = vadd.xlane.f32.xlu0 %v447
    %v449 = vpop.xlane.xlu0 %448
    %v450 = vadd.f32 %v321, %v322
    %v451 = vadd.f32 %v450, %v323
    %v452 = vadd.f32 %v451, %v324
    %453 = vadd.xlane.f32.xlu0 %v452
    %v454 = vpop.xlane.xlu0 %453
    %v455 = vadd.f32 %v325, %v326
    %v456 = vadd.f32 %v455, %v327
    %v457 = vadd.f32 %v456, %v328
    %458 = vadd.xlane.f32.xlu0 %v457
    %v459 = vpop.xlane.xlu0 %458
    %v460 = vadd.f32 %v329, %v330
    %v461 = vadd.f32 %v460, %v331
    %v462 = vadd.f32 %v461, %v332
    %463 = vadd.xlane.f32.xlu0 %v462
    %v464 = vpop.xlane.xlu0 %463
    %v465 = vadd.f32 %v333, %v334
    %v466 = vadd.f32 %v465, %v335
    %v467 = vadd.f32 %v466, %v336
    %468 = vadd.xlane.f32.xlu0 %v467
    %v469 = vpop.xlane.xlu0 %468
    %v470 = vadd.f32 %v337, %v338
    %v471 = vadd.f32 %v470, %v339
    %v472 = vadd.f32 %v471, %v340
    %473 = vadd.xlane.f32.xlu0 %v472
    %v474 = vpop.xlane.xlu0 %473
    %v475 = vadd.f32 %v341, %v342
    %v476 = vadd.f32 %v475, %v343
    %v477 = vadd.f32 %v476, %v344
    %478 = vadd.xlane.f32.xlu0 %v477
    %v479 = vpop.xlane.xlu0 %478
    %v480 = vadd.f32 %v345, %v346
    %v481 = vadd.f32 %v480, %v347
    %v482 = vadd.f32 %v481, %v348
    %483 = vadd.xlane.f32.xlu0 %v482
    %v484 = vpop.xlane.xlu0 %483
    %v485 = vadd.f32 %v349, %v350
    %v486 = vadd.f32 %v485, %v351
    %v487 = vadd.f32 %v486, %v352
    %488 = vadd.xlane.f32.xlu0 %v487
    %v489 = vpop.xlane.xlu0 %488
    %v490 = vadd.f32 %v353, %v354
    %v491 = vadd.f32 %v490, %v355
    %v492 = vadd.f32 %v491, %v356
    %493 = vadd.xlane.f32.xlu0 %v492
    %v494 = vpop.xlane.xlu0 %493
    %v495 = vadd.f32 %v357, %v358
    %v496 = vadd.f32 %v495, %v359
    %v497 = vadd.f32 %v496, %v360
    %498 = vadd.xlane.f32.xlu0 %v497
    %v499 = vpop.xlane.xlu0 %498
    %v500 = vadd.f32 %v361, %v362
    %v501 = vadd.f32 %v500, %v363
    %v502 = vadd.f32 %v501, %v364
    %503 = vadd.xlane.f32.xlu0 %v502
    %v504 = vpop.xlane.xlu0 %503
    %v505 = vadd.f32 %v365, %v366
    %v506 = vadd.f32 %v505, %v367
    %v507 = vadd.f32 %v506, %v368
    %508 = vadd.xlane.f32.xlu0 %v507
    %v509 = vpop.xlane.xlu0 %508
    %v510 = vadd.f32 %v369, %v370
    %v511 = vadd.f32 %v510, %v371
    %v512 = vadd.f32 %v511, %v372
    %513 = vadd.xlane.f32.xlu0 %v512
    %v514 = vpop.xlane.xlu0 %513
    %v515 = vadd.f32 %v373, %v374
    %v516 = vadd.f32 %v515, %v375
    %v517 = vadd.f32 %v516, %v376
    %518 = vadd.xlane.f32.xlu0 %v517
    %v519 = vpop.xlane.xlu0 %518
    %v520 = vadd.f32 %v377, %v378
    %v521 = vadd.f32 %v520, %v379
    %v522 = vadd.f32 %v521, %v380
    %523 = vadd.xlane.f32.xlu0 %v522
    %v524 = vpop.xlane.xlu0 %523
    %v525 = vadd.f32 %v381, %v382
    %v526 = vadd.f32 %v525, %v383
    %v527 = vadd.f32 %v526, %v384
    %528 = vadd.xlane.f32.xlu0 %v527
    %v529 = vpop.xlane.xlu0 %528
    %v530 = vadd.f32 %v385, %v386
    %v531 = vadd.f32 %v530, %v387
    %v532 = vadd.f32 %v531, %v388
    %533 = vadd.xlane.f32.xlu0 %v532
    %v534 = vpop.xlane.xlu0 %533
    %v535 = vadd.f32 %v389, %v390
    %v536 = vadd.f32 %v535, %v391
    %v537 = vadd.f32 %v536, %v392
    %538 = vadd.xlane.f32.xlu0 %v537
    %v539 = vpop.xlane.xlu0 %538
    %v540 = vadd.f32 %v393, %v394
    %v541 = vadd.f32 %v540, %v395
    %v542 = vadd.f32 %v541, %v396
    %543 = vadd.xlane.f32.xlu0 %v542
    %v544 = vpop.xlane.xlu0 %543
    %v545 = vadd.f32 %v397, %v398
    %v546 = vadd.f32 %v545, %v399
    %v547 = vadd.f32 %v546, %v400
    %548 = vadd.xlane.f32.xlu0 %v547
    %v549 = vpop.xlane.xlu0 %548
    %v550 = vadd.f32 %v401, %v402
    %v551 = vadd.f32 %v550, %v403
    %v552 = vadd.f32 %v551, %v404
    %553 = vadd.xlane.f32.xlu0 %v552
    %v554 = vpop.xlane.xlu0 %553
    %v555 = vadd.f32 %v405, %v406
    %v556 = vadd.f32 %v555, %v407
    %v557 = vadd.f32 %v556, %v408
    %558 = vadd.xlane.f32.xlu0 %v557
    %v559 = vpop.xlane.xlu0 %558
    %v560 = vadd.f32 %v409, %v410
    %v561 = vadd.f32 %v560, %v411
    %v562 = vadd.f32 %v561, %v412
    %563 = vadd.xlane.f32.xlu0 %v562
    %v564 = vpop.xlane.xlu0 %563
    %v565 = vadd.f32 %v413, %v414
    %v566 = vadd.f32 %v565, %v415
    %v567 = vadd.f32 %v566, %v416
    %568 = vadd.xlane.f32.xlu0 %v567
    %v569 = vpop.xlane.xlu0 %568
    %v570 = vadd.f32 %v417, %v418
    %v571 = vadd.f32 %v570, %v419
    %v572 = vadd.f32 %v571, %v420
    %573 = vadd.xlane.f32.xlu0 %v572
    %v574 = vpop.xlane.xlu0 %573
    %v575 = vadd.f32 %v421, %v422
    %v576 = vadd.f32 %v575, %v423
    %v577 = vadd.f32 %v576, %v424
    %578 = vadd.xlane.f32.xlu0 %v577
    %v579 = vpop.xlane.xlu0 %578
    %v580 = vadd.f32 %v425, %v426
    %v581 = vadd.f32 %v580, %v427
    %v582 = vadd.f32 %v581, %v428
    %583 = vadd.xlane.f32.xlu0 %v582
    %v584 = vpop.xlane.xlu0 %583
    %v585 = vadd.f32 %v429, %v430
    %v586 = vadd.f32 %v585, %v431
    %v587 = vadd.f32 %v586, %v432
    %588 = vadd.xlane.f32.xlu0 %v587
    %v589 = vpop.xlane.xlu0 %588
    %v590 = vadd.f32 %v433, %v434
    %v591 = vadd.f32 %v590, %v435
    %v592 = vadd.f32 %v591, %v436
    %593 = vadd.xlane.f32.xlu0 %v592
    %v594 = vpop.xlane.xlu0 %593
    %v595 = vadd.f32 %v437, %v438
    %v596 = vadd.f32 %v595, %v439
    %v597 = vadd.f32 %v596, %v440
    %598 = vadd.xlane.f32.xlu0 %v597
    %v599 = vpop.xlane.xlu0 %598
    %v600 = vadd.f32 %v441, %v442
    %v601 = vadd.f32 %v600, %v443
    %v602 = vadd.f32 %v601, %v444
    %603 = vadd.xlane.f32.xlu0 %v602
    %v604 = vpop.xlane.xlu0 %603
    %v605 = vmax.f32 %v449, 1e-24
    %v606 = vmax.f32 %v454, 1e-24
    %v607 = vmax.f32 %v459, 1e-24
    %v608 = vmax.f32 %v464, 1e-24
    %v609 = vmax.f32 %v469, 1e-24
    %v610 = vmax.f32 %v474, 1e-24
    %v611 = vmax.f32 %v479, 1e-24
    %v612 = vmax.f32 %v484, 1e-24
    %v613 = vmax.f32 %v489, 1e-24
    %v614 = vmax.f32 %v494, 1e-24
    %v615 = vmax.f32 %v499, 1e-24
    %v616 = vmax.f32 %v504, 1e-24
    %v617 = vmax.f32 %v509, 1e-24
    %v618 = vmax.f32 %v514, 1e-24
    %v619 = vmax.f32 %v519, 1e-24
    %v620 = vmax.f32 %v524, 1e-24
    %v621 = vmax.f32 %v529, 1e-24
    %v622 = vmax.f32 %v534, 1e-24
    %v623 = vmax.f32 %v539, 1e-24
    %v624 = vmax.f32 %v544, 1e-24
    %v625 = vmax.f32 %v549, 1e-24
    %v626 = vmax.f32 %v554, 1e-24
    %v627 = vmax.f32 %v559, 1e-24
    %v628 = vmax.f32 %v564, 1e-24
    %v629 = vmax.f32 %v569, 1e-24
    %v630 = vmax.f32 %v574, 1e-24
    %v631 = vmax.f32 %v579, 1e-24
    %v632 = vmax.f32 %v584, 1e-24
    %v633 = vmax.f32 %v589, 1e-24
    %v634 = vmax.f32 %v594, 1e-24
    %v635 = vmax.f32 %v599, 1e-24
    %v636 = vmax.f32 %v604, 1e-24
    %v637 = vrsqrt.pop %v605
    %v638 = vmul.f32 %v637, %v605
    %v639 = vmul.f32 %v638, %v637
    %v640 = vmul.f32 0.5, %v639
    %v641 = vsub.f32 1.5, %v640
    %v642 = vmul.f32 %v637, %v641
    %vm643 = vweird.f32 %v605
    %vm644 = vweird.f32 %v637
    %vm645 = vmor %vm643, %vm644
    %v646 = vsel %vm645, %v637, %v642
    %v647 = vrsqrt.pop %v606
    %v648 = vmul.f32 %v647, %v606
    %v649 = vmul.f32 %v648, %v647
    %v650 = vmul.f32 0.5, %v649
    %v651 = vsub.f32 1.5, %v650
    %v652 = vmul.f32 %v647, %v651
    %vm653 = vweird.f32 %v606
    %vm654 = vweird.f32 %v647
    %vm655 = vmor %vm653, %vm654
    %v656 = vsel %vm655, %v647, %v652
    %v657 = vrsqrt.pop %v607
    %v658 = vmul.f32 %v657, %v607
    %v659 = vmul.f32 %v658, %v657
    %v660 = vmul.f32 0.5, %v659
    %v661 = vsub.f32 1.5, %v660
    %v662 = vmul.f32 %v657, %v661
    %vm663 = vweird.f32 %v607
    %vm664 = vweird.f32 %v657
    %vm665 = vmor %vm663, %vm664
    %v666 = vsel %vm665, %v657, %v662
    %v667 = vrsqrt.pop %v608
    %v668 = vmul.f32 %v667, %v608
    %v669 = vmul.f32 %v668, %v667
    %v670 = vmul.f32 0.5, %v669
    %v671 = vsub.f32 1.5, %v670
    %v672 = vmul.f32 %v667, %v671
    %vm673 = vweird.f32 %v608
    %vm674 = vweird.f32 %v667
    %vm675 = vmor %vm673, %vm674
    %v676 = vsel %vm675, %v667, %v672
    %v677 = vrsqrt.pop %v609
    %v678 = vmul.f32 %v677, %v609
    %v679 = vmul.f32 %v678, %v677
    %v680 = vmul.f32 0.5, %v679
    %v681 = vsub.f32 1.5, %v680
    %v682 = vmul.f32 %v677, %v681
    %vm683 = vweird.f32 %v609
    %vm684 = vweird.f32 %v677
    %vm685 = vmor %vm683, %vm684
    %v686 = vsel %vm685, %v677, %v682
    %v687 = vrsqrt.pop %v610
    %v688 = vmul.f32 %v687, %v610
    %v689 = vmul.f32 %v688, %v687
    %v690 = vmul.f32 0.5, %v689
    %v691 = vsub.f32 1.5, %v690
    %v692 = vmul.f32 %v687, %v691
    %vm693 = vweird.f32 %v610
    %vm694 = vweird.f32 %v687
    %vm695 = vmor %vm693, %vm694
    %v696 = vsel %vm695, %v687, %v692
    %v697 = vrsqrt.pop %v611
    %v698 = vmul.f32 %v697, %v611
    %v699 = vmul.f32 %v698, %v697
    %v700 = vmul.f32 0.5, %v699
    %v701 = vsub.f32 1.5, %v700
    %v702 = vmul.f32 %v697, %v701
    %vm703 = vweird.f32 %v611
    %vm704 = vweird.f32 %v697
    %vm705 = vmor %vm703, %vm704
    %v706 = vsel %vm705, %v697, %v702
    %v707 = vrsqrt.pop %v612
    %v708 = vmul.f32 %v707, %v612
    %v709 = vmul.f32 %v708, %v707
    %v710 = vmul.f32 0.5, %v709
    %v711 = vsub.f32 1.5, %v710
    %v712 = vmul.f32 %v707, %v711
    %vm713 = vweird.f32 %v612
    %vm714 = vweird.f32 %v707
    %vm715 = vmor %vm713, %vm714
    %v716 = vsel %vm715, %v707, %v712
    %v717 = vrsqrt.pop %v613
    %v718 = vmul.f32 %v717, %v613
    %v719 = vmul.f32 %v718, %v717
    %v720 = vmul.f32 0.5, %v719
    %v721 = vsub.f32 1.5, %v720
    %v722 = vmul.f32 %v717, %v721
    %vm723 = vweird.f32 %v613
    %vm724 = vweird.f32 %v717
    %vm725 = vmor %vm723, %vm724
    %v726 = vsel %vm725, %v717, %v722
    %v727 = vrsqrt.pop %v614
    %v728 = vmul.f32 %v727, %v614
    %v729 = vmul.f32 %v728, %v727
    %v730 = vmul.f32 0.5, %v729
    %v731 = vsub.f32 1.5, %v730
    %v732 = vmul.f32 %v727, %v731
    %vm733 = vweird.f32 %v614
    %vm734 = vweird.f32 %v727
    %vm735 = vmor %vm733, %vm734
    %v736 = vsel %vm735, %v727, %v732
    %v737 = vrsqrt.pop %v615
    %v738 = vmul.f32 %v737, %v615
    %v739 = vmul.f32 %v738, %v737
    %v740 = vmul.f32 0.5, %v739
    %v741 = vsub.f32 1.5, %v740
    %v742 = vmul.f32 %v737, %v741
    %vm743 = vweird.f32 %v615
    %vm744 = vweird.f32 %v737
    %vm745 = vmor %vm743, %vm744
    %v746 = vsel %vm745, %v737, %v742
    %v747 = vrsqrt.pop %v616
    %v748 = vmul.f32 %v747, %v616
    %v749 = vmul.f32 %v748, %v747
    %v750 = vmul.f32 0.5, %v749
    %v751 = vsub.f32 1.5, %v750
    %v752 = vmul.f32 %v747, %v751
    %vm753 = vweird.f32 %v616
    %vm754 = vweird.f32 %v747
    %vm755 = vmor %vm753, %vm754
    %v756 = vsel %vm755, %v747, %v752
    %v757 = vrsqrt.pop %v617
    %v758 = vmul.f32 %v757, %v617
    %v759 = vmul.f32 %v758, %v757
    %v760 = vmul.f32 0.5, %v759
    %v761 = vsub.f32 1.5, %v760
    %v762 = vmul.f32 %v757, %v761
    %vm763 = vweird.f32 %v617
    %vm764 = vweird.f32 %v757
    %vm765 = vmor %vm763, %vm764
    %v766 = vsel %vm765, %v757, %v762
    %v767 = vrsqrt.pop %v618
    %v768 = vmul.f32 %v767, %v618
    %v769 = vmul.f32 %v768, %v767
    %v770 = vmul.f32 0.5, %v769
    %v771 = vsub.f32 1.5, %v770
    %v772 = vmul.f32 %v767, %v771
    %vm773 = vweird.f32 %v618
    %vm774 = vweird.f32 %v767
    %vm775 = vmor %vm773, %vm774
    %v776 = vsel %vm775, %v767, %v772
    %v777 = vrsqrt.pop %v619
    %v778 = vmul.f32 %v777, %v619
    %v779 = vmul.f32 %v778, %v777
    %v780 = vmul.f32 0.5, %v779
    %v781 = vsub.f32 1.5, %v780
    %v782 = vmul.f32 %v777, %v781
    %vm783 = vweird.f32 %v619
    %vm784 = vweird.f32 %v777
    %vm785 = vmor %vm783, %vm784
    %v786 = vsel %vm785, %v777, %v782
    %v787 = vrsqrt.pop %v620
    %v788 = vmul.f32 %v787, %v620
    %v789 = vmul.f32 %v788, %v787
    %v790 = vmul.f32 0.5, %v789
    %v791 = vsub.f32 1.5, %v790
    %v792 = vmul.f32 %v787, %v791
    %vm793 = vweird.f32 %v620
    %vm794 = vweird.f32 %v787
    %vm795 = vmor %vm793, %vm794
    %v796 = vsel %vm795, %v787, %v792
    %v797 = vrsqrt.pop %v621
    %v798 = vmul.f32 %v797, %v621
    %v799 = vmul.f32 %v798, %v797
    %v800 = vmul.f32 0.5, %v799
    %v801 = vsub.f32 1.5, %v800
    %v802 = vmul.f32 %v797, %v801
    %vm803 = vweird.f32 %v621
    %vm804 = vweird.f32 %v797
    %vm805 = vmor %vm803, %vm804
    %v806 = vsel %vm805, %v797, %v802
    %v807 = vrsqrt.pop %v622
    %v808 = vmul.f32 %v807, %v622
    %v809 = vmul.f32 %v808, %v807
    %v810 = vmul.f32 0.5, %v809
    %v811 = vsub.f32 1.5, %v810
    %v812 = vmul.f32 %v807, %v811
    %vm813 = vweird.f32 %v622
    %vm814 = vweird.f32 %v807
    %vm815 = vmor %vm813, %vm814
    %v816 = vsel %vm815, %v807, %v812
    %v817 = vrsqrt.pop %v623
    %v818 = vmul.f32 %v817, %v623
    %v819 = vmul.f32 %v818, %v817
    %v820 = vmul.f32 0.5, %v819
    %v821 = vsub.f32 1.5, %v820
    %v822 = vmul.f32 %v817, %v821
    %vm823 = vweird.f32 %v623
    %vm824 = vweird.f32 %v817
    %vm825 = vmor %vm823, %vm824
    %v826 = vsel %vm825, %v817, %v822
    %v827 = vrsqrt.pop %v624
    %v828 = vmul.f32 %v827, %v624
    %v829 = vmul.f32 %v828, %v827
    %v830 = vmul.f32 0.5, %v829
    %v831 = vsub.f32 1.5, %v830
    %v832 = vmul.f32 %v827, %v831
    %vm833 = vweird.f32 %v624
    %vm834 = vweird.f32 %v827
    %vm835 = vmor %vm833, %vm834
    %v836 = vsel %vm835, %v827, %v832
    %v837 = vrsqrt.pop %v625
    %v838 = vmul.f32 %v837, %v625
    %v839 = vmul.f32 %v838, %v837
    %v840 = vmul.f32 0.5, %v839
    %v841 = vsub.f32 1.5, %v840
    %v842 = vmul.f32 %v837, %v841
    %vm843 = vweird.f32 %v625
    %vm844 = vweird.f32 %v837
    %vm845 = vmor %vm843, %vm844
    %v846 = vsel %vm845, %v837, %v842
    %v847 = vrsqrt.pop %v626
    %v848 = vmul.f32 %v847, %v626
    %v849 = vmul.f32 %v848, %v847
    %v850 = vmul.f32 0.5, %v849
    %v851 = vsub.f32 1.5, %v850
    %v852 = vmul.f32 %v847, %v851
    %vm853 = vweird.f32 %v626
    %vm854 = vweird.f32 %v847
    %vm855 = vmor %vm853, %vm854
    %v856 = vsel %vm855, %v847, %v852
    %v857 = vrsqrt.pop %v627
    %v858 = vmul.f32 %v857, %v627
    %v859 = vmul.f32 %v858, %v857
    %v860 = vmul.f32 0.5, %v859
    %v861 = vsub.f32 1.5, %v860
    %v862 = vmul.f32 %v857, %v861
    %vm863 = vweird.f32 %v627
    %vm864 = vweird.f32 %v857
    %vm865 = vmor %vm863, %vm864
    %v866 = vsel %vm865, %v857, %v862
    %v867 = vrsqrt.pop %v628
    %v868 = vmul.f32 %v867, %v628
    %v869 = vmul.f32 %v868, %v867
    %v870 = vmul.f32 0.5, %v869
    %v871 = vsub.f32 1.5, %v870
    %v872 = vmul.f32 %v867, %v871
    %vm873 = vweird.f32 %v628
    %vm874 = vweird.f32 %v867
    %vm875 = vmor %vm873, %vm874
    %v876 = vsel %vm875, %v867, %v872
    %v877 = vrsqrt.pop %v629
    %v878 = vmul.f32 %v877, %v629
    %v879 = vmul.f32 %v878, %v877
    %v880 = vmul.f32 0.5, %v879
    %v881 = vsub.f32 1.5, %v880
    %v882 = vmul.f32 %v877, %v881
    %vm883 = vweird.f32 %v629
    %vm884 = vweird.f32 %v877
    %vm885 = vmor %vm883, %vm884
    %v886 = vsel %vm885, %v877, %v882
    %v887 = vrsqrt.pop %v630
    %v888 = vmul.f32 %v887, %v630
    %v889 = vmul.f32 %v888, %v887
    %v890 = vmul.f32 0.5, %v889
    %v891 = vsub.f32 1.5, %v890
    %v892 = vmul.f32 %v887, %v891
    %vm893 = vweird.f32 %v630
    %vm894 = vweird.f32 %v887
    %vm895 = vmor %vm893, %vm894
    %v896 = vsel %vm895, %v887, %v892
    %v897 = vrsqrt.pop %v631
    %v898 = vmul.f32 %v897, %v631
    %v899 = vmul.f32 %v898, %v897
    %v900 = vmul.f32 0.5, %v899
    %v901 = vsub.f32 1.5, %v900
    %v902 = vmul.f32 %v897, %v901
    %vm903 = vweird.f32 %v631
    %vm904 = vweird.f32 %v897
    %vm905 = vmor %vm903, %vm904
    %v906 = vsel %vm905, %v897, %v902
    %v907 = vrsqrt.pop %v632
    %v908 = vmul.f32 %v907, %v632
    %v909 = vmul.f32 %v908, %v907
    %v910 = vmul.f32 0.5, %v909
    %v911 = vsub.f32 1.5, %v910
    %v912 = vmul.f32 %v907, %v911
    %vm913 = vweird.f32 %v632
    %vm914 = vweird.f32 %v907
    %vm915 = vmor %vm913, %vm914
    %v916 = vsel %vm915, %v907, %v912
    %v917 = vrsqrt.pop %v633
    %v918 = vmul.f32 %v917, %v633
    %v919 = vmul.f32 %v918, %v917
    %v920 = vmul.f32 0.5, %v919
    %v921 = vsub.f32 1.5, %v920
    %v922 = vmul.f32 %v917, %v921
    %vm923 = vweird.f32 %v633
    %vm924 = vweird.f32 %v917
    %vm925 = vmor %vm923, %vm924
    %v926 = vsel %vm925, %v917, %v922
    %v927 = vrsqrt.pop %v634
    %v928 = vmul.f32 %v927, %v634
    %v929 = vmul.f32 %v928, %v927
    %v930 = vmul.f32 0.5, %v929
    %v931 = vsub.f32 1.5, %v930
    %v932 = vmul.f32 %v927, %v931
    %vm933 = vweird.f32 %v634
    %vm934 = vweird.f32 %v927
    %vm935 = vmor %vm933, %vm934
    %v936 = vsel %vm935, %v927, %v932
    %v937 = vrsqrt.pop %v635
    %v938 = vmul.f32 %v937, %v635
    %v939 = vmul.f32 %v938, %v937
    %v940 = vmul.f32 0.5, %v939
    %v941 = vsub.f32 1.5, %v940
    %v942 = vmul.f32 %v937, %v941
    %vm943 = vweird.f32 %v635
    %vm944 = vweird.f32 %v937
    %vm945 = vmor %vm943, %vm944
    %v946 = vsel %vm945, %v937, %v942
    %v947 = vrsqrt.pop %v636
    %v948 = vmul.f32 %v947, %v636
    %v949 = vmul.f32 %v948, %v947
    %v950 = vmul.f32 0.5, %v949
    %v951 = vsub.f32 1.5, %v950
    %v952 = vmul.f32 %v947, %v951
    %vm953 = vweird.f32 %v636
    %vm954 = vweird.f32 %v947
    %vm955 = vmor %vm953, %vm954
    %v956 = vsel %vm955, %v947, %v952
    %v957 = vld [vmem:[#allocation5] sm:$0xff]
    %v958 = vld [vmem:[#allocation5 + $0x8] sm:$0xff]
    %v959 = vld [vmem:[#allocation5 + $0x10] sm:$0xff]
    %v960 = vld [vmem:[#allocation5 + $0x18] sm:$0xff]
    %v961 = vld [vmem:[#allocation5 + $0x20] sm:$0xff]
    %v962 = vld [vmem:[#allocation5 + $0x28] sm:$0xff]
    %v963 = vld [vmem:[#allocation5 + $0x30] sm:$0xff]
    %v964 = vld [vmem:[#allocation5 + $0x38] sm:$0xff]
    %v965 = vld [vmem:[#allocation5 + $0x40] sm:$0xff]
    %v966 = vld [vmem:[#allocation5 + $0x48] sm:$0xff]
    %v967 = vld [vmem:[#allocation5 + $0x50] sm:$0xff]
    %v968 = vld [vmem:[#allocation5 + $0x58] sm:$0xff]
    %v969 = vld [vmem:[#allocation5 + $0x60] sm:$0xff]
    %v970 = vld [vmem:[#allocation5 + $0x68] sm:$0xff]
    %v971 = vld [vmem:[#allocation5 + $0x70] sm:$0xff]
    %v972 = vld [vmem:[#allocation5 + $0x78] sm:$0xff]
    %v973 = vld [vmem:[#allocation5 + $0x80] sm:$0xff]
    %v974 = vld [vmem:[#allocation5 + $0x88] sm:$0xff]
    %v975 = vld [vmem:[#allocation5 + $0x90] sm:$0xff]
    %v976 = vld [vmem:[#allocation5 + $0x98] sm:$0xff]
    %v977 = vld [vmem:[#allocation5 + $0xa0] sm:$0xff]
    %v978 = vld [vmem:[#allocation5 + $0xa8] sm:$0xff]
    %v979 = vld [vmem:[#allocation5 + $0xb0] sm:$0xff]
    %v980 = vld [vmem:[#allocation5 + $0xb8] sm:$0xff]
    %v981 = vld [vmem:[#allocation5 + $0xc0] sm:$0xff]
    %v982 = vld [vmem:[#allocation5 + $0xc8] sm:$0xff]
    %v983 = vld [vmem:[#allocation5 + $0xd0] sm:$0xff]
    %v984 = vld [vmem:[#allocation5 + $0xd8] sm:$0xff]
    %v985 = vld [vmem:[#allocation5 + $0xe0] sm:$0xff]
    %v986 = vld [vmem:[#allocation5 + $0xe8] sm:$0xff]
    %v987 = vld [vmem:[#allocation5 + $0xf0] sm:$0xff]
    %v988 = vld [vmem:[#allocation5 + $0xf8] sm:$0xff]
    %v989 = vld [vmem:[#allocation5 + $0x100] sm:$0xff]
    %v990 = vld [vmem:[#allocation5 + $0x108] sm:$0xff]
    %v991 = vld [vmem:[#allocation5 + $0x110] sm:$0xff]
    %v992 = vld [vmem:[#allocation5 + $0x118] sm:$0xff]
    %v993 = vld [vmem:[#allocation5 + $0x120] sm:$0xff]
    %v994 = vld [vmem:[#allocation5 + $0x128] sm:$0xff]
    %v995 = vld [vmem:[#allocation5 + $0x130] sm:$0xff]
    %v996 = vld [vmem:[#allocation5 + $0x138] sm:$0xff]
    %v997 = vld [vmem:[#allocation5 + $0x140] sm:$0xff]
    %v998 = vld [vmem:[#allocation5 + $0x148] sm:$0xff]
    %v999 = vld [vmem:[#allocation5 + $0x150] sm:$0xff]
    %v1000 = vld [vmem:[#allocation5 + $0x158] sm:$0xff]
    %v1001 = vld [vmem:[#allocation5 + $0x160] sm:$0xff]
    %v1002 = vld [vmem:[#allocation5 + $0x168] sm:$0xff]
    %v1003 = vld [vmem:[#allocation5 + $0x170] sm:$0xff]
    %v1004 = vld [vmem:[#allocation5 + $0x178] sm:$0xff]
    %v1005 = vld [vmem:[#allocation5 + $0x180] sm:$0xff]
    %v1006 = vld [vmem:[#allocation5 + $0x188] sm:$0xff]
    %v1007 = vld [vmem:[#allocation5 + $0x190] sm:$0xff]
    %v1008 = vld [vmem:[#allocation5 + $0x198] sm:$0xff]
    %v1009 = vld [vmem:[#allocation5 + $0x1a0] sm:$0xff]
    %v1010 = vld [vmem:[#allocation5 + $0x1a8] sm:$0xff]
    %v1011 = vld [vmem:[#allocation5 + $0x1b0] sm:$0xff]
    %v1012 = vld [vmem:[#allocation5 + $0x1b8] sm:$0xff]
    %v1013 = vld [vmem:[#allocation5 + $0x1c0] sm:$0xff]
    %v1014 = vld [vmem:[#allocation5 + $0x1c8] sm:$0xff]
    %v1015 = vld [vmem:[#allocation5 + $0x1d0] sm:$0xff]
    %v1016 = vld [vmem:[#allocation5 + $0x1d8] sm:$0xff]
    %v1017 = vld [vmem:[#allocation5 + $0x1e0] sm:$0xff]
    %v1018 = vld [vmem:[#allocation5 + $0x1e8] sm:$0xff]
    %v1019 = vld [vmem:[#allocation5 + $0x1f0] sm:$0xff]
    %v1020 = vld [vmem:[#allocation5 + $0x1f8] sm:$0xff]
    %v1021 = vld [vmem:[#allocation7] sm:$0x3]
    %v1086 = vunpack.c.l.b16 %v125
    %v1087 = vunpack.c.h.b16 %v125
    %v1088 = vunpack.c.l.b16 %v126
    %v1089 = vunpack.c.h.b16 %v126
    %v1090 = vunpack.c.l.b16 %v127
    %v1091 = vunpack.c.h.b16 %v127
    %v1092 = vunpack.c.l.b16 %v128
    %v1093 = vunpack.c.h.b16 %v128
    %v1094 = vunpack.c.l.b16 %v129
    %v1095 = vunpack.c.h.b16 %v129
    %v1096 = vunpack.c.l.b16 %v130
    %v1097 = vunpack.c.h.b16 %v130
    %v1098 = vunpack.c.l.b16 %v131
    %v1099 = vunpack.c.h.b16 %v131
    %v1100 = vunpack.c.l.b16 %v132
    %v1101 = vunpack.c.h.b16 %v132
    %v1102 = vunpack.c.l.b16 %v133
    %v1103 = vunpack.c.h.b16 %v133
    %v1104 = vunpack.c.l.b16 %v134
    %v1105 = vunpack.c.h.b16 %v134
    %v1106 = vunpack.c.l.b16 %v135
    %v1107 = vunpack.c.h.b16 %v135
    %v1108 = vunpack.c.l.b16 %v136
    %v1109 = vunpack.c.h.b16 %v136
    %v1110 = vunpack.c.l.b16 %v137
    %v1111 = vunpack.c.h.b16 %v137
    %v1112 = vunpack.c.l.b16 %v138
    %v1113 = vunpack.c.h.b16 %v138
    %v1114 = vunpack.c.l.b16 %v139
    %v1115 = vunpack.c.h.b16 %v139
    %v1116 = vunpack.c.l.b16 %v140
    %v1117 = vunpack.c.h.b16 %v140
    %v1118 = vunpack.c.l.b16 %v141
    %v1119 = vunpack.c.h.b16 %v141
    %v1120 = vunpack.c.l.b16 %v142
    %v1121 = vunpack.c.h.b16 %v142
    %v1122 = vunpack.c.l.b16 %v143
    %v1123 = vunpack.c.h.b16 %v143
    %v1124 = vunpack.c.l.b16 %v144
    %v1125 = vunpack.c.h.b16 %v144
    %v1126 = vunpack.c.l.b16 %v145
    %v1127 = vunpack.c.h.b16 %v145
    %v1128 = vunpack.c.l.b16 %v146
    %v1129 = vunpack.c.h.b16 %v146
    %v1130 = vunpack.c.l.b16 %v147
    %v1131 = vunpack.c.h.b16 %v147
    %v1132 = vunpack.c.l.b16 %v148
    %v1133 = vunpack.c.h.b16 %v148
    %v1134 = vunpack.c.l.b16 %v149
    %v1135 = vunpack.c.h.b16 %v149
    %v1136 = vunpack.c.l.b16 %v150
    %v1137 = vunpack.c.h.b16 %v150
    %v1138 = vunpack.c.l.b16 %v151
    %v1139 = vunpack.c.h.b16 %v151
    %v1140 = vunpack.c.l.b16 %v152
    %v1141 = vunpack.c.h.b16 %v152
    %v1142 = vunpack.c.l.b16 %v153
    %v1143 = vunpack.c.h.b16 %v153
    %v1144 = vunpack.c.l.b16 %v154
    %v1145 = vunpack.c.h.b16 %v154
    %v1146 = vunpack.c.l.b16 %v155
    %v1147 = vunpack.c.h.b16 %v155
    %v1148 = vunpack.c.l.b16 %v156
    %v1149 = vunpack.c.h.b16 %v156
    %v1150 = vunpack.c.l.b16 %v157
    %v1151 = vunpack.c.h.b16 %v157
    %v1152 = vunpack.c.l.b16 %v158
    %v1153 = vunpack.c.h.b16 %v158
    %v1154 = vunpack.c.l.b16 %v159
    %v1155 = vunpack.c.h.b16 %v159
    %v1156 = vunpack.c.l.b16 %v160
    %v1157 = vunpack.c.h.b16 %v160
    %v1158 = vunpack.c.l.b16 %v161
    %v1159 = vunpack.c.h.b16 %v161
    %v1160 = vunpack.c.l.b16 %v162
    %v1161 = vunpack.c.h.b16 %v162
    %v1162 = vunpack.c.l.b16 %v163
    %v1163 = vunpack.c.h.b16 %v163
    %v1164 = vunpack.c.l.b16 %v164
    %v1165 = vunpack.c.h.b16 %v164
    %v1166 = vunpack.c.l.b16 %v165
    %v1167 = vunpack.c.h.b16 %v165
    %v1168 = vunpack.c.l.b16 %v166
    %v1169 = vunpack.c.h.b16 %v166
    %v1170 = vunpack.c.l.b16 %v167
    %v1171 = vunpack.c.h.b16 %v167
    %v1172 = vunpack.c.l.b16 %v168
    %v1173 = vunpack.c.h.b16 %v168
    %v1174 = vunpack.c.l.b16 %v169
    %v1175 = vunpack.c.h.b16 %v169
    %v1176 = vunpack.c.l.b16 %v170
    %v1177 = vunpack.c.h.b16 %v170
    %v1178 = vunpack.c.l.b16 %v171
    %v1179 = vunpack.c.h.b16 %v171
    %v1180 = vunpack.c.l.b16 %v172
    %v1181 = vunpack.c.h.b16 %v172
    %v1182 = vunpack.c.l.b16 %v173
    %v1183 = vunpack.c.h.b16 %v173
    %v1184 = vunpack.c.l.b16 %v174
    %v1185 = vunpack.c.h.b16 %v174
    %v1186 = vunpack.c.l.b16 %v175
    %v1187 = vunpack.c.h.b16 %v175
    %v1188 = vunpack.c.l.b16 %v176
    %v1189 = vunpack.c.h.b16 %v176
    %v1190 = vunpack.c.l.b16 %v177
    %v1191 = vunpack.c.h.b16 %v177
    %v1192 = vunpack.c.l.b16 %v178
    %v1193 = vunpack.c.h.b16 %v178
    %v1194 = vunpack.c.l.b16 %v179
    %v1195 = vunpack.c.h.b16 %v179
    %v1196 = vunpack.c.l.b16 %v180
    %v1197 = vunpack.c.h.b16 %v180
    %v1198 = vunpack.c.l.b16 %v181
    %v1199 = vunpack.c.h.b16 %v181
    %v1200 = vunpack.c.l.b16 %v182
    %v1201 = vunpack.c.h.b16 %v182
    %v1202 = vunpack.c.l.b16 %v183
    %v1203 = vunpack.c.h.b16 %v183
    %v1204 = vunpack.c.l.b16 %v184
    %v1205 = vunpack.c.h.b16 %v184
    %v1206 = vunpack.c.l.b16 %v185
    %v1207 = vunpack.c.h.b16 %v185
    %v1208 = vunpack.c.l.b16 %v186
    %v1209 = vunpack.c.h.b16 %v186
    %v1210 = vunpack.c.l.b16 %v187
    %v1211 = vunpack.c.h.b16 %v187
    %v1212 = vunpack.c.l.b16 %v188
    %v1213 = vunpack.c.h.b16 %v188
    %v1214 = vpack.c.b16 %v1090, %v1086
    %v1215 = vpack.c.b16 %v1091, %v1087
    %v1216 = vpack.c.b16 %v1092, %v1088
    %v1217 = vpack.c.b16 %v1093, %v1089
    %v1218 = vpack.c.b16 %v1098, %v1094
    %v1219 = vpack.c.b16 %v1099, %v1095
    %v1220 = vpack.c.b16 %v1100, %v1096
    %v1221 = vpack.c.b16 %v1101, %v1097
    %v1222 = vpack.c.b16 %v1106, %v1102
    %v1223 = vpack.c.b16 %v1107, %v1103
    %v1224 = vpack.c.b16 %v1108, %v1104
    %v1225 = vpack.c.b16 %v1109, %v1105
    %v1226 = vpack.c.b16 %v1114, %v1110
    %v1227 = vpack.c.b16 %v1115, %v1111
    %v1228 = vpack.c.b16 %v1116, %v1112
    %v1229 = vpack.c.b16 %v1117, %v1113
    %v1230 = vpack.c.b16 %v1122, %v1118
    %v1231 = vpack.c.b16 %v1123, %v1119
    %v1232 = vpack.c.b16 %v1124, %v1120
    %v1233 = vpack.c.b16 %v1125, %v1121
    %v1234 = vpack.c.b16 %v1130, %v1126
    %v1235 = vpack.c.b16 %v1131, %v1127
    %v1236 = vpack.c.b16 %v1132, %v1128
    %v1237 = vpack.c.b16 %v1133, %v1129
    %v1238 = vpack.c.b16 %v1138, %v1134
    %v1239 = vpack.c.b16 %v1139, %v1135
    %v1240 = vpack.c.b16 %v1140, %v1136
    %v1241 = vpack.c.b16 %v1141, %v1137
    %v1242 = vpack.c.b16 %v1146, %v1142
    %v1243 = vpack.c.b16 %v1147, %v1143
    %v1244 = vpack.c.b16 %v1148, %v1144
    %v1245 = vpack.c.b16 %v1149, %v1145
    %v1246 = vpack.c.b16 %v1154, %v1150
    %v1247 = vpack.c.b16 %v1155, %v1151
    %v1248 = vpack.c.b16 %v1156, %v1152
    %v1249 = vpack.c.b16 %v1157, %v1153
    %v1250 = vpack.c.b16 %v1162, %v1158
    %v1251 = vpack.c.b16 %v1163, %v1159
    %v1252 = vpack.c.b16 %v1164, %v1160
    %v1253 = vpack.c.b16 %v1165, %v1161
    %v1254 = vpack.c.b16 %v1170, %v1166
    %v1255 = vpack.c.b16 %v1171, %v1167
    %v1256 = vpack.c.b16 %v1172, %v1168
    %v1257 = vpack.c.b16 %v1173, %v1169
    %v1258 = vpack.c.b16 %v1178, %v1174
    %v1259 = vpack.c.b16 %v1179, %v1175
    %v1260 = vpack.c.b16 %v1180, %v1176
    %v1261 = vpack.c.b16 %v1181, %v1177
    %v1262 = vpack.c.b16 %v1186, %v1182
    %v1263 = vpack.c.b16 %v1187, %v1183
    %v1264 = vpack.c.b16 %v1188, %v1184
    %v1265 = vpack.c.b16 %v1189, %v1185
    %v1266 = vpack.c.b16 %v1194, %v1190
    %v1267 = vpack.c.b16 %v1195, %v1191
    %v1268 = vpack.c.b16 %v1196, %v1192
    %v1269 = vpack.c.b16 %v1197, %v1193
    %v1270 = vpack.c.b16 %v1202, %v1198
    %v1271 = vpack.c.b16 %v1203, %v1199
    %v1272 = vpack.c.b16 %v1204, %v1200
    %v1273 = vpack.c.b16 %v1205, %v1201
    %v1274 = vpack.c.b16 %v1210, %v1206
    %v1275 = vpack.c.b16 %v1211, %v1207
    %v1276 = vpack.c.b16 %v1212, %v1208
    %v1277 = vpack.c.b16 %v1213, %v1209
    %v1406 = vunpack.c.l.b16 %v957
    %v1407 = vunpack.c.h.b16 %v957
    %v1408 = vunpack.c.l.b16 %v958
    %v1409 = vunpack.c.h.b16 %v958
    %v1410 = vunpack.c.l.b16 %v959
    %v1411 = vunpack.c.h.b16 %v959
    %v1412 = vunpack.c.l.b16 %v960
    %v1413 = vunpack.c.h.b16 %v960
    %v1414 = vunpack.c.l.b16 %v961
    %v1415 = vunpack.c.h.b16 %v961
    %v1416 = vunpack.c.l.b16 %v962
    %v1417 = vunpack.c.h.b16 %v962
    %v1418 = vunpack.c.l.b16 %v963
    %v1419 = vunpack.c.h.b16 %v963
    %v1420 = vunpack.c.l.b16 %v964
    %v1421 = vunpack.c.h.b16 %v964
    %v1422 = vunpack.c.l.b16 %v965
    %v1423 = vunpack.c.h.b16 %v965
    %v1424 = vunpack.c.l.b16 %v966
    %v1425 = vunpack.c.h.b16 %v966
    %v1426 = vunpack.c.l.b16 %v967
    %v1427 = vunpack.c.h.b16 %v967
    %v1428 = vunpack.c.l.b16 %v968
    %v1429 = vunpack.c.h.b16 %v968
    %v1430 = vunpack.c.l.b16 %v969
    %v1431 = vunpack.c.h.b16 %v969
    %v1432 = vunpack.c.l.b16 %v970
    %v1433 = vunpack.c.h.b16 %v970
    %v1434 = vunpack.c.l.b16 %v971
    %v1435 = vunpack.c.h.b16 %v971
    %v1436 = vunpack.c.l.b16 %v972
    %v1437 = vunpack.c.h.b16 %v972
    %v1438 = vunpack.c.l.b16 %v973
    %v1439 = vunpack.c.h.b16 %v973
    %v1440 = vunpack.c.l.b16 %v974
    %v1441 = vunpack.c.h.b16 %v974
    %v1442 = vunpack.c.l.b16 %v975
    %v1443 = vunpack.c.h.b16 %v975
    %v1444 = vunpack.c.l.b16 %v976
    %v1445 = vunpack.c.h.b16 %v976
    %v1446 = vunpack.c.l.b16 %v977
    %v1447 = vunpack.c.h.b16 %v977
    %v1448 = vunpack.c.l.b16 %v978
    %v1449 = vunpack.c.h.b16 %v978
    %v1450 = vunpack.c.l.b16 %v979
    %v1451 = vunpack.c.h.b16 %v979
    %v1452 = vunpack.c.l.b16 %v980
    %v1453 = vunpack.c.h.b16 %v980
    %v1454 = vunpack.c.l.b16 %v981
    %v1455 = vunpack.c.h.b16 %v981
    %v1456 = vunpack.c.l.b16 %v982
    %v1457 = vunpack.c.h.b16 %v982
    %v1458 = vunpack.c.l.b16 %v983
    %v1459 = vunpack.c.h.b16 %v983
    %v1460 = vunpack.c.l.b16 %v984
    %v1461 = vunpack.c.h.b16 %v984
    %v1462 = vunpack.c.l.b16 %v985
    %v1463 = vunpack.c.h.b16 %v985
    %v1464 = vunpack.c.l.b16 %v986
    %v1465 = vunpack.c.h.b16 %v986
    %v1466 = vunpack.c.l.b16 %v987
    %v1467 = vunpack.c.h.b16 %v987
    %v1468 = vunpack.c.l.b16 %v988
    %v1469 = vunpack.c.h.b16 %v988
    %v1470 = vunpack.c.l.b16 %v989
    %v1471 = vunpack.c.h.b16 %v989
    %v1472 = vunpack.c.l.b16 %v990
    %v1473 = vunpack.c.h.b16 %v990
    %v1474 = vunpack.c.l.b16 %v991
    %v1475 = vunpack.c.h.b16 %v991
    %v1476 = vunpack.c.l.b16 %v992
    %v1477 = vunpack.c.h.b16 %v992
    %v1478 = vunpack.c.l.b16 %v993
    %v1479 = vunpack.c.h.b16 %v993
    %v1480 = vunpack.c.l.b16 %v994
    %v1481 = vunpack.c.h.b16 %v994
    %v1482 = vunpack.c.l.b16 %v995
    %v1483 = vunpack.c.h.b16 %v995
    %v1484 = vunpack.c.l.b16 %v996
    %v1485 = vunpack.c.h.b16 %v996
    %v1486 = vunpack.c.l.b16 %v997
    %v1487 = vunpack.c.h.b16 %v997
    %v1488 = vunpack.c.l.b16 %v998
    %v1489 = vunpack.c.h.b16 %v998
    %v1490 = vunpack.c.l.b16 %v999
    %v1491 = vunpack.c.h.b16 %v999
    %v1492 = vunpack.c.l.b16 %v1000
    %v1493 = vunpack.c.h.b16 %v1000
    %v1494 = vunpack.c.l.b16 %v1001
    %v1495 = vunpack.c.h.b16 %v1001
    %v1496 = vunpack.c.l.b16 %v1002
    %v1497 = vunpack.c.h.b16 %v1002
    %v1498 = vunpack.c.l.b16 %v1003
    %v1499 = vunpack.c.h.b16 %v1003
    %v1500 = vunpack.c.l.b16 %v1004
    %v1501 = vunpack.c.h.b16 %v1004
    %v1502 = vunpack.c.l.b16 %v1005
    %v1503 = vunpack.c.h.b16 %v1005
    %v1504 = vunpack.c.l.b16 %v1006
    %v1505 = vunpack.c.h.b16 %v1006
    %v1506 = vunpack.c.l.b16 %v1007
    %v1507 = vunpack.c.h.b16 %v1007
    %v1508 = vunpack.c.l.b16 %v1008
    %v1509 = vunpack.c.h.b16 %v1008
    %v1510 = vunpack.c.l.b16 %v1009
    %v1511 = vunpack.c.h.b16 %v1009
    %v1512 = vunpack.c.l.b16 %v1010
    %v1513 = vunpack.c.h.b16 %v1010
    %v1514 = vunpack.c.l.b16 %v1011
    %v1515 = vunpack.c.h.b16 %v1011
    %v1516 = vunpack.c.l.b16 %v1012
    %v1517 = vunpack.c.h.b16 %v1012
    %v1518 = vunpack.c.l.b16 %v1013
    %v1519 = vunpack.c.h.b16 %v1013
    %v1520 = vunpack.c.l.b16 %v1014
    %v1521 = vunpack.c.h.b16 %v1014
    %v1522 = vunpack.c.l.b16 %v1015
    %v1523 = vunpack.c.h.b16 %v1015
    %v1524 = vunpack.c.l.b16 %v1016
    %v1525 = vunpack.c.h.b16 %v1016
    %v1526 = vunpack.c.l.b16 %v1017
    %v1527 = vunpack.c.h.b16 %v1017
    %v1528 = vunpack.c.l.b16 %v1018
    %v1529 = vunpack.c.h.b16 %v1018
    %v1530 = vunpack.c.l.b16 %v1019
    %v1531 = vunpack.c.h.b16 %v1019
    %v1532 = vunpack.c.l.b16 %v1020
    %v1533 = vunpack.c.h.b16 %v1020
    %v1534 = vpack.c.b16 %v1408, %v1406
    %v1535 = vpack.c.b16 %v1409, %v1407
    %v1536 = vpack.c.b16 %v1412, %v1410
    %v1537 = vpack.c.b16 %v1413, %v1411
    %v1538 = vpack.c.b16 %v1416, %v1414
    %v1539 = vpack.c.b16 %v1417, %v1415
    %v1540 = vpack.c.b16 %v1420, %v1418
    %v1541 = vpack.c.b16 %v1421, %v1419
    %v1542 = vpack.c.b16 %v1424, %v1422
    %v1543 = vpack.c.b16 %v1425, %v1423
    %v1544 = vpack.c.b16 %v1428, %v1426
    %v1545 = vpack.c.b16 %v1429, %v1427
    %v1546 = vpack.c.b16 %v1432, %v1430
    %v1547 = vpack.c.b16 %v1433, %v1431
    %v1548 = vpack.c.b16 %v1436, %v1434
    %v1549 = vpack.c.b16 %v1437, %v1435
    %v1550 = vpack.c.b16 %v1440, %v1438
    %v1551 = vpack.c.b16 %v1441, %v1439
    %v1552 = vpack.c.b16 %v1444, %v1442
    %v1553 = vpack.c.b16 %v1445, %v1443
    %v1554 = vpack.c.b16 %v1448, %v1446
    %v1555 = vpack.c.b16 %v1449, %v1447
    %v1556 = vpack.c.b16 %v1452, %v1450
    %v1557 = vpack.c.b16 %v1453, %v1451
    %v1558 = vpack.c.b16 %v1456, %v1454
    %v1559 = vpack.c.b16 %v1457, %v1455
    %v1560 = vpack.c.b16 %v1460, %v1458
    %v1561 = vpack.c.b16 %v1461, %v1459
    %v1562 = vpack.c.b16 %v1464, %v1462
    %v1563 = vpack.c.b16 %v1465, %v1463
    %v1564 = vpack.c.b16 %v1468, %v1466
    %v1565 = vpack.c.b16 %v1469, %v1467
    %v1566 = vpack.c.b16 %v1472, %v1470
    %v1567 = vpack.c.b16 %v1473, %v1471
    %v1568 = vpack.c.b16 %v1476, %v1474
    %v1569 = vpack.c.b16 %v1477, %v1475
    %v1570 = vpack.c.b16 %v1480, %v1478
    %v1571 = vpack.c.b16 %v1481, %v1479
    %v1572 = vpack.c.b16 %v1484, %v1482
    %v1573 = vpack.c.b16 %v1485, %v1483
    %v1574 = vpack.c.b16 %v1488, %v1486
    %v1575 = vpack.c.b16 %v1489, %v1487
    %v1576 = vpack.c.b16 %v1492, %v1490
    %v1577 = vpack.c.b16 %v1493, %v1491
    %v1578 = vpack.c.b16 %v1496, %v1494
    %v1579 = vpack.c.b16 %v1497, %v1495
    %v1580 = vpack.c.b16 %v1500, %v1498
    %v1581 = vpack.c.b16 %v1501, %v1499
    %v1582 = vpack.c.b16 %v1504, %v1502
    %v1583 = vpack.c.b16 %v1505, %v1503
    %v1584 = vpack.c.b16 %v1508, %v1506
    %v1585 = vpack.c.b16 %v1509, %v1507
    %v1586 = vpack.c.b16 %v1512, %v1510
    %v1587 = vpack.c.b16 %v1513, %v1511
    %v1588 = vpack.c.b16 %v1516, %v1514
    %v1589 = vpack.c.b16 %v1517, %v1515
    %v1590 = vpack.c.b16 %v1520, %v1518
    %v1591 = vpack.c.b16 %v1521, %v1519
    %v1592 = vpack.c.b16 %v1524, %v1522
    %v1593 = vpack.c.b16 %v1525, %v1523
    %v1594 = vpack.c.b16 %v1528, %v1526
    %v1595 = vpack.c.b16 %v1529, %v1527
    %v1596 = vpack.c.b16 %v1532, %v1530
    %v1597 = vpack.c.b16 %v1533, %v1531
    %1662 = vmatpush.bf16.msra.mxu0 %v1548
    %1663 = vmatpush.bf16.msra.mxu0 %v1546
    %1664 = vmatpush.bf16.msra.mxu0 %v1544
    %1665 = vmatpush.bf16.msra.mxu0 %v1542
    %1666 = vmatpush.bf16.msra.mxu0 %v1540
    %1667 = vmatpush.bf16.msra.mxu0 %v1538
    %1668 = vmatpush.bf16.msra.mxu0 %v1536
    %1669 = vmatpush.bf16.msra.mxu0 %v1534
    %1670 = vmatmul.bf16.gmra.mxu0 %v1214
    %v1671 = vpop.f32.mrf.mxu0
    %v1672 = vadd.f32 0.0, %v1671
    %v1673 = vpop.f32.mrf.mxu0
    %v1674 = vadd.f32 0.0, %v1673
    %1675 = vmatmul.bf16.gmra.mxu0 %v1218
    %v1676 = vpop.f32.mrf.mxu0
    %v1677 = vadd.f32 0.0, %v1676
    %v1678 = vpop.f32.mrf.mxu0
    %v1679 = vadd.f32 0.0, %v1678
    %1680 = vmatmul.bf16.gmra.mxu0 %v1222
    %v1681 = vpop.f32.mrf.mxu0
    %v1682 = vadd.f32 0.0, %v1681
    %v1683 = vpop.f32.mrf.mxu0
    %v1684 = vadd.f32 0.0, %v1683
    %1685 = vmatmul.bf16.gmra.mxu0 %v1226
    %v1686 = vpop.f32.mrf.mxu0
    %v1687 = vadd.f32 0.0, %v1686
    %v1688 = vpop.f32.mrf.mxu0
    %v1689 = vadd.f32 0.0, %v1688
    %1690 = vmatmul.bf16.gmra.mxu0 %v1230
    %v1691 = vpop.f32.mrf.mxu0
    %v1692 = vadd.f32 0.0, %v1691
    %v1693 = vpop.f32.mrf.mxu0
    %v1694 = vadd.f32 0.0, %v1693
    %1695 = vmatmul.bf16.gmra.mxu0 %v1234
    %v1696 = vpop.f32.mrf.mxu0
    %v1697 = vadd.f32 0.0, %v1696
    %v1698 = vpop.f32.mrf.mxu0
    %v1699 = vadd.f32 0.0, %v1698
    %1700 = vmatmul.bf16.gmra.mxu0 %v1238
    %v1701 = vpop.f32.mrf.mxu0
    %v1702 = vadd.f32 0.0, %v1701
    %v1703 = vpop.f32.mrf.mxu0
    %v1704 = vadd.f32 0.0, %v1703
    %1705 = vmatmul.bf16.gmra.mxu0 %v1242
    %v1706 = vpop.f32.mrf.mxu0
    %v1707 = vadd.f32 0.0, %v1706
    %v1708 = vpop.f32.mrf.mxu0
    %v1709 = vadd.f32 0.0, %v1708
    %1710 = vmatmul.bf16.gmra.mxu0 %v1246
    %v1711 = vpop.f32.mrf.mxu0
    %v1712 = vadd.f32 0.0, %v1711
    %v1713 = vpop.f32.mrf.mxu0
    %v1714 = vadd.f32 0.0, %v1713
    %1715 = vmatmul.bf16.gmra.mxu0 %v1250
    %v1716 = vpop.f32.mrf.mxu0
    %v1717 = vadd.f32 0.0, %v1716
    %v1718 = vpop.f32.mrf.mxu0
    %v1719 = vadd.f32 0.0, %v1718
    %1720 = vmatmul.bf16.gmra.mxu0 %v1254
    %v1721 = vpop.f32.mrf.mxu0
    %v1722 = vadd.f32 0.0, %v1721
    %v1723 = vpop.f32.mrf.mxu0
    %v1724 = vadd.f32 0.0, %v1723
    %1725 = vmatmul.bf16.gmra.mxu0 %v1258
    %v1726 = vpop.f32.mrf.mxu0
    %v1727 = vadd.f32 0.0, %v1726
    %v1728 = vpop.f32.mrf.mxu0
    %v1729 = vadd.f32 0.0, %v1728
    %1730 = vmatmul.bf16.gmra.mxu0 %v1262
    %v1731 = vpop.f32.mrf.mxu0
    %v1732 = vadd.f32 0.0, %v1731
    %v1733 = vpop.f32.mrf.mxu0
    %v1734 = vadd.f32 0.0, %v1733
    %1735 = vmatmul.bf16.gmra.mxu0 %v1266
    %v1736 = vpop.f32.mrf.mxu0
    %v1737 = vadd.f32 0.0, %v1736
    %v1738 = vpop.f32.mrf.mxu0
    %v1739 = vadd.f32 0.0, %v1738
    %1740 = vmatmul.bf16.gmra.mxu0 %v1270
    %v1741 = vpop.f32.mrf.mxu0
    %v1742 = vadd.f32 0.0, %v1741
    %v1743 = vpop.f32.mrf.mxu0
    %v1744 = vadd.f32 0.0, %v1743
    %1745 = vmatmul.bf16.gmra.mxu0 %v1274
    %v1746 = vpop.f32.mrf.mxu0
    %v1747 = vadd.f32 0.0, %v1746
    %v1748 = vpop.f32.mrf.mxu0
    %v1749 = vadd.f32 0.0, %v1748
    %1750 = vdwg.mxu0
    %1751 = vmatpush.bf16.msra.mxu0 %v1564
    %1752 = vmatpush.bf16.msra.mxu0 %v1562
    %1753 = vmatpush.bf16.msra.mxu0 %v1560
    %1754 = vmatpush.bf16.msra.mxu0 %v1558
    %1755 = vmatpush.bf16.msra.mxu0 %v1556
    %1756 = vmatpush.bf16.msra.mxu0 %v1554
    %1757 = vmatpush.bf16.msra.mxu0 %v1552
    %1758 = vmatpush.bf16.msra.mxu0 %v1550
    %1759 = vmatmul.bf16.gmra.mxu0 %v1215
    %v1760 = vpop.f32.mrf.mxu0
    %v1761 = vadd.f32 %v1672, %v1760
    %v1762 = vpop.f32.mrf.mxu0
    %v1763 = vadd.f32 %v1674, %v1762
    %1764 = vmatmul.bf16.gmra.mxu0 %v1219
    %v1765 = vpop.f32.mrf.mxu0
    %v1766 = vadd.f32 %v1677, %v1765
    %v1767 = vpop.f32.mrf.mxu0
    %v1768 = vadd.f32 %v1679, %v1767
    %1769 = vmatmul.bf16.gmra.mxu0 %v1223
    %v1770 = vpop.f32.mrf.mxu0
    %v1771 = vadd.f32 %v1682, %v1770
    %v1772 = vpop.f32.mrf.mxu0
    %v1773 = vadd.f32 %v1684, %v1772
    %1774 = vmatmul.bf16.gmra.mxu0 %v1227
    %v1775 = vpop.f32.mrf.mxu0
    %v1776 = vadd.f32 %v1687, %v1775
    %v1777 = vpop.f32.mrf.mxu0
    %v1778 = vadd.f32 %v1689, %v1777
    %1779 = vmatmul.bf16.gmra.mxu0 %v1231
    %v1780 = vpop.f32.mrf.mxu0
    %v1781 = vadd.f32 %v1692, %v1780
    %v1782 = vpop.f32.mrf.mxu0
    %v1783 = vadd.f32 %v1694, %v1782
    %1784 = vmatmul.bf16.gmra.mxu0 %v1235
    %v1785 = vpop.f32.mrf.mxu0
    %v1786 = vadd.f32 %v1697, %v1785
    %v1787 = vpop.f32.mrf.mxu0
    %v1788 = vadd.f32 %v1699, %v1787
    %1789 = vmatmul.bf16.gmra.mxu0 %v1239
    %v1790 = vpop.f32.mrf.mxu0
    %v1791 = vadd.f32 %v1702, %v1790
    %v1792 = vpop.f32.mrf.mxu0
    %v1793 = vadd.f32 %v1704, %v1792
    %1794 = vmatmul.bf16.gmra.mxu0 %v1243
    %v1795 = vpop.f32.mrf.mxu0
    %v1796 = vadd.f32 %v1707, %v1795
    %v1797 = vpop.f32.mrf.mxu0
    %v1798 = vadd.f32 %v1709, %v1797
    %1799 = vmatmul.bf16.gmra.mxu0 %v1247
    %v1800 = vpop.f32.mrf.mxu0
    %v1801 = vadd.f32 %v1712, %v1800
    %v1802 = vpop.f32.mrf.mxu0
    %v1803 = vadd.f32 %v1714, %v1802
    %1804 = vmatmul.bf16.gmra.mxu0 %v1251
    %v1805 = vpop.f32.mrf.mxu0
    %v1806 = vadd.f32 %v1717, %v1805
    %v1807 = vpop.f32.mrf.mxu0
    %v1808 = vadd.f32 %v1719, %v1807
    %1809 = vmatmul.bf16.gmra.mxu0 %v1255
    %v1810 = vpop.f32.mrf.mxu0
    %v1811 = vadd.f32 %v1722, %v1810
    %v1812 = vpop.f32.mrf.mxu0
    %v1813 = vadd.f32 %v1724, %v1812
    %1814 = vmatmul.bf16.gmra.mxu0 %v1259
    %v1815 = vpop.f32.mrf.mxu0
    %v1816 = vadd.f32 %v1727, %v1815
    %v1817 = vpop.f32.mrf.mxu0
    %v1818 = vadd.f32 %v1729, %v1817
    %1819 = vmatmul.bf16.gmra.mxu0 %v1263
    %v1820 = vpop.f32.mrf.mxu0
    %v1821 = vadd.f32 %v1732, %v1820
    %v1822 = vpop.f32.mrf.mxu0
    %v1823 = vadd.f32 %v1734, %v1822
    %1824 = vmatmul.bf16.gmra.mxu0 %v1267
    %v1825 = vpop.f32.mrf.mxu0
    %v1826 = vadd.f32 %v1737, %v1825
    %v1827 = vpop.f32.mrf.mxu0
    %v1828 = vadd.f32 %v1739, %v1827
    %1829 = vmatmul.bf16.gmra.mxu0 %v1271
    %v1830 = vpop.f32.mrf.mxu0
    %v1831 = vadd.f32 %v1742, %v1830
    %v1832 = vpop.f32.mrf.mxu0
    %v1833 = vadd.f32 %v1744, %v1832
    %1834 = vmatmul.bf16.gmra.mxu0 %v1275
    %v1835 = vpop.f32.mrf.mxu0
    %v1836 = vadd.f32 %v1747, %v1835
    %v1837 = vpop.f32.mrf.mxu0
    %v1838 = vadd.f32 %v1749, %v1837
    %1839 = vdwg.mxu0
    %1840 = vmatpush.bf16.msra.mxu0 %v1580
    %1841 = vmatpush.bf16.msra.mxu0 %v1578
    %1842 = vmatpush.bf16.msra.mxu0 %v1576
    %1843 = vmatpush.bf16.msra.mxu0 %v1574
    %1844 = vmatpush.bf16.msra.mxu0 %v1572
    %1845 = vmatpush.bf16.msra.mxu0 %v1570
    %1846 = vmatpush.bf16.msra.mxu0 %v1568
    %1847 = vmatpush.bf16.msra.mxu0 %v1566
    %1848 = vmatmul.bf16.gmra.mxu0 %v1216
    %v1849 = vpop.f32.mrf.mxu0
    %v1850 = vadd.f32 %v1761, %v1849
    %v1851 = vpop.f32.mrf.mxu0
    %v1852 = vadd.f32 %v1763, %v1851
    %1853 = vmatmul.bf16.gmra.mxu0 %v1220
    %v1854 = vpop.f32.mrf.mxu0
    %v1855 = vadd.f32 %v1766, %v1854
    %v1856 = vpop.f32.mrf.mxu0
    %v1857 = vadd.f32 %v1768, %v1856
    %1858 = vmatmul.bf16.gmra.mxu0 %v1224
    %v1859 = vpop.f32.mrf.mxu0
    %v1860 = vadd.f32 %v1771, %v1859
    %v1861 = vpop.f32.mrf.mxu0
    %v1862 = vadd.f32 %v1773, %v1861
    %1863 = vmatmul.bf16.gmra.mxu0 %v1228
    %v1864 = vpop.f32.mrf.mxu0
    %v1865 = vadd.f32 %v1776, %v1864
    %v1866 = vpop.f32.mrf.mxu0
    %v1867 = vadd.f32 %v1778, %v1866
    %1868 = vmatmul.bf16.gmra.mxu0 %v1232
    %v1869 = vpop.f32.mrf.mxu0
    %v1870 = vadd.f32 %v1781, %v1869
    %v1871 = vpop.f32.mrf.mxu0
    %v1872 = vadd.f32 %v1783, %v1871
    %1873 = vmatmul.bf16.gmra.mxu0 %v1236
    %v1874 = vpop.f32.mrf.mxu0
    %v1875 = vadd.f32 %v1786, %v1874
    %v1876 = vpop.f32.mrf.mxu0
    %v1877 = vadd.f32 %v1788, %v1876
    %1878 = vmatmul.bf16.gmra.mxu0 %v1240
    %v1879 = vpop.f32.mrf.mxu0
    %v1880 = vadd.f32 %v1791, %v1879
    %v1881 = vpop.f32.mrf.mxu0
    %v1882 = vadd.f32 %v1793, %v1881
    %1883 = vmatmul.bf16.gmra.mxu0 %v1244
    %v1884 = vpop.f32.mrf.mxu0
    %v1885 = vadd.f32 %v1796, %v1884
    %v1886 = vpop.f32.mrf.mxu0
    %v1887 = vadd.f32 %v1798, %v1886
    %1888 = vmatmul.bf16.gmra.mxu0 %v1248
    %v1889 = vpop.f32.mrf.mxu0
    %v1890 = vadd.f32 %v1801, %v1889
    %v1891 = vpop.f32.mrf.mxu0
    %v1892 = vadd.f32 %v1803, %v1891
    %1893 = vmatmul.bf16.gmra.mxu0 %v1252
    %v1894 = vpop.f32.mrf.mxu0
    %v1895 = vadd.f32 %v1806, %v1894
    %v1896 = vpop.f32.mrf.mxu0
    %v1897 = vadd.f32 %v1808, %v1896
    %1898 = vmatmul.bf16.gmra.mxu0 %v1256
    %v1899 = vpop.f32.mrf.mxu0
    %v1900 = vadd.f32 %v1811, %v1899
    %v1901 = vpop.f32.mrf.mxu0
    %v1902 = vadd.f32 %v1813, %v1901
    %1903 = vmatmul.bf16.gmra.mxu0 %v1260
    %v1904 = vpop.f32.mrf.mxu0
    %v1905 = vadd.f32 %v1816, %v1904
    %v1906 = vpop.f32.mrf.mxu0
    %v1907 = vadd.f32 %v1818, %v1906
    %1908 = vmatmul.bf16.gmra.mxu0 %v1264
    %v1909 = vpop.f32.mrf.mxu0
    %v1910 = vadd.f32 %v1821, %v1909
    %v1911 = vpop.f32.mrf.mxu0
    %v1912 = vadd.f32 %v1823, %v1911
    %1913 = vmatmul.bf16.gmra.mxu0 %v1268
    %v1914 = vpop.f32.mrf.mxu0
    %v1915 = vadd.f32 %v1826, %v1914
    %v1916 = vpop.f32.mrf.mxu0
    %v1917 = vadd.f32 %v1828, %v1916
    %1918 = vmatmul.bf16.gmra.mxu0 %v1272
    %v1919 = vpop.f32.mrf.mxu0
    %v1920 = vadd.f32 %v1831, %v1919
    %v1921 = vpop.f32.mrf.mxu0
    %v1922 = vadd.f32 %v1833, %v1921
    %1923 = vmatmul.bf16.gmra.mxu0 %v1276
    %v1924 = vpop.f32.mrf.mxu0
    %v1925 = vadd.f32 %v1836, %v1924
    %v1926 = vpop.f32.mrf.mxu0
    %v1927 = vadd.f32 %v1838, %v1926
    %1928 = vdwg.mxu0
    %1929 = vmatpush.bf16.msra.mxu0 %v1596
    %1930 = vmatpush.bf16.msra.mxu0 %v1594
    %1931 = vmatpush.bf16.msra.mxu0 %v1592
    %1932 = vmatpush.bf16.msra.mxu0 %v1590
    %1933 = vmatpush.bf16.msra.mxu0 %v1588
    %1934 = vmatpush.bf16.msra.mxu0 %v1586
    %1935 = vmatpush.bf16.msra.mxu0 %v1584
    %1936 = vmatpush.bf16.msra.mxu0 %v1582
    %1937 = vmatmul.bf16.gmra.mxu0 %v1217
    %v1938 = vpop.f32.mrf.mxu0
    %v1939 = vadd.f32 %v1850, %v1938
    %v1940 = vpop.f32.mrf.mxu0
    %v1941 = vadd.f32 %v1852, %v1940
    %1942 = vmatmul.bf16.gmra.mxu0 %v1221
    %v1943 = vpop.f32.mrf.mxu0
    %v1944 = vadd.f32 %v1855, %v1943
    %v1945 = vpop.f32.mrf.mxu0
    %v1946 = vadd.f32 %v1857, %v1945
    %1947 = vmatmul.bf16.gmra.mxu0 %v1225
    %v1948 = vpop.f32.mrf.mxu0
    %v1949 = vadd.f32 %v1860, %v1948
    %v1950 = vpop.f32.mrf.mxu0
    %v1951 = vadd.f32 %v1862, %v1950
    %1952 = vmatmul.bf16.gmra.mxu0 %v1229
    %v1953 = vpop.f32.mrf.mxu0
    %v1954 = vadd.f32 %v1865, %v1953
    %v1955 = vpop.f32.mrf.mxu0
    %v1956 = vadd.f32 %v1867, %v1955
    %1957 = vmatmul.bf16.gmra.mxu0 %v1233
    %v1958 = vpop.f32.mrf.mxu0
    %v1959 = vadd.f32 %v1870, %v1958
    %v1960 = vpop.f32.mrf.mxu0
    %v1961 = vadd.f32 %v1872, %v1960
    %1962 = vmatmul.bf16.gmra.mxu0 %v1237
    %v1963 = vpop.f32.mrf.mxu0
    %v1964 = vadd.f32 %v1875, %v1963
    %v1965 = vpop.f32.mrf.mxu0
    %v1966 = vadd.f32 %v1877, %v1965
    %1967 = vmatmul.bf16.gmra.mxu0 %v1241
    %v1968 = vpop.f32.mrf.mxu0
    %v1969 = vadd.f32 %v1880, %v1968
    %v1970 = vpop.f32.mrf.mxu0
    %v1971 = vadd.f32 %v1882, %v1970
    %1972 = vmatmul.bf16.gmra.mxu0 %v1245
    %v1973 = vpop.f32.mrf.mxu0
    %v1974 = vadd.f32 %v1885, %v1973
    %v1975 = vpop.f32.mrf.mxu0
    %v1976 = vadd.f32 %v1887, %v1975
    %1977 = vmatmul.bf16.gmra.mxu0 %v1249
    %v1978 = vpop.f32.mrf.mxu0
    %v1979 = vadd.f32 %v1890, %v1978
    %v1980 = vpop.f32.mrf.mxu0
    %v1981 = vadd.f32 %v1892, %v1980
    %1982 = vmatmul.bf16.gmra.mxu0 %v1253
    %v1983 = vpop.f32.mrf.mxu0
    %v1984 = vadd.f32 %v1895, %v1983
    %v1985 = vpop.f32.mrf.mxu0
    %v1986 = vadd.f32 %v1897, %v1985
    %1987 = vmatmul.bf16.gmra.mxu0 %v1257
    %v1988 = vpop.f32.mrf.mxu0
    %v1989 = vadd.f32 %v1900, %v1988
    %v1990 = vpop.f32.mrf.mxu0
    %v1991 = vadd.f32 %v1902, %v1990
    %1992 = vmatmul.bf16.gmra.mxu0 %v1261
    %v1993 = vpop.f32.mrf.mxu0
    %v1994 = vadd.f32 %v1905, %v1993
    %v1995 = vpop.f32.mrf.mxu0
    %v1996 = vadd.f32 %v1907, %v1995
    %1997 = vmatmul.bf16.gmra.mxu0 %v1265
    %v1998 = vpop.f32.mrf.mxu0
    %v1999 = vadd.f32 %v1910, %v1998
    %v2000 = vpop.f32.mrf.mxu0
    %v2001 = vadd.f32 %v1912, %v2000
    %2002 = vmatmul.bf16.gmra.mxu0 %v1269
    %v2003 = vpop.f32.mrf.mxu0
    %v2004 = vadd.f32 %v1915, %v2003
    %v2005 = vpop.f32.mrf.mxu0
    %v2006 = vadd.f32 %v1917, %v2005
    %2007 = vmatmul.bf16.gmra.mxu0 %v1273
    %v2008 = vpop.f32.mrf.mxu0
    %v2009 = vadd.f32 %v1920, %v2008
    %v2010 = vpop.f32.mrf.mxu0
    %v2011 = vadd.f32 %v1922, %v2010
    %2012 = vmatmul.bf16.gmra.mxu0 %v1277
    %v2013 = vpop.f32.mrf.mxu0
    %v2014 = vadd.f32 %v1925, %v2013
    %v2015 = vpop.f32.mrf.mxu0
    %v2016 = vadd.f32 %v1927, %v2015
    %2017 = vdwg.mxu0
    %2018 = vmatpush.bf16.msra.mxu0 %v1549
    %2019 = vmatpush.bf16.msra.mxu0 %v1547
    %2020 = vmatpush.bf16.msra.mxu0 %v1545
    %2021 = vmatpush.bf16.msra.mxu0 %v1543
    %2022 = vmatpush.bf16.msra.mxu0 %v1541
    %2023 = vmatpush.bf16.msra.mxu0 %v1539
    %2024 = vmatpush.bf16.msra.mxu0 %v1537
    %2025 = vmatpush.bf16.msra.mxu0 %v1535
    %2026 = vmatmul.bf16.gmra.mxu0 %v1214
    %v2027 = vpop.f32.mrf.mxu0
    %v2028 = vadd.f32 0.0, %v2027
    %v2029 = vpop.f32.mrf.mxu0
    %v2030 = vadd.f32 0.0, %v2029
    %2031 = vmatmul.bf16.gmra.mxu0 %v1218
    %v2032 = vpop.f32.mrf.mxu0
    %v2033 = vadd.f32 0.0, %v2032
    %v2034 = vpop.f32.mrf.mxu0
    %v2035 = vadd.f32 0.0, %v2034
    %2036 = vmatmul.bf16.gmra.mxu0 %v1222
    %v2037 = vpop.f32.mrf.mxu0
    %v2038 = vadd.f32 0.0, %v2037
    %v2039 = vpop.f32.mrf.mxu0
    %v2040 = vadd.f32 0.0, %v2039
    %2041 = vmatmul.bf16.gmra.mxu0 %v1226
    %v2042 = vpop.f32.mrf.mxu0
    %v2043 = vadd.f32 0.0, %v2042
    %v2044 = vpop.f32.mrf.mxu0
    %v2045 = vadd.f32 0.0, %v2044
    %2046 = vmatmul.bf16.gmra.mxu0 %v1230
    %v2047 = vpop.f32.mrf.mxu0
    %v2048 = vadd.f32 0.0, %v2047
    %v2049 = vpop.f32.mrf.mxu0
    %v2050 = vadd.f32 0.0, %v2049
    %2051 = vmatmul.bf16.gmra.mxu0 %v1234
    %v2052 = vpop.f32.mrf.mxu0
    %v2053 = vadd.f32 0.0, %v2052
    %v2054 = vpop.f32.mrf.mxu0
    %v2055 = vadd.f32 0.0, %v2054
    %2056 = vmatmul.bf16.gmra.mxu0 %v1238
    %v2057 = vpop.f32.mrf.mxu0
    %v2058 = vadd.f32 0.0, %v2057
    %v2059 = vpop.f32.mrf.mxu0
    %v2060 = vadd.f32 0.0, %v2059
    %2061 = vmatmul.bf16.gmra.mxu0 %v1242
    %v2062 = vpop.f32.mrf.mxu0
    %v2063 = vadd.f32 0.0, %v2062
    %v2064 = vpop.f32.mrf.mxu0
    %v2065 = vadd.f32 0.0, %v2064
    %2066 = vmatmul.bf16.gmra.mxu0 %v1246
    %v2067 = vpop.f32.mrf.mxu0
    %v2068 = vadd.f32 0.0, %v2067
    %v2069 = vpop.f32.mrf.mxu0
    %v2070 = vadd.f32 0.0, %v2069
    %2071 = vmatmul.bf16.gmra.mxu0 %v1250
    %v2072 = vpop.f32.mrf.mxu0
    %v2073 = vadd.f32 0.0, %v2072
    %v2074 = vpop.f32.mrf.mxu0
    %v2075 = vadd.f32 0.0, %v2074
    %2076 = vmatmul.bf16.gmra.mxu0 %v1254
    %v2077 = vpop.f32.mrf.mxu0
    %v2078 = vadd.f32 0.0, %v2077
    %v2079 = vpop.f32.mrf.mxu0
    %v2080 = vadd.f32 0.0, %v2079
    %2081 = vmatmul.bf16.gmra.mxu0 %v1258
    %v2082 = vpop.f32.mrf.mxu0
    %v2083 = vadd.f32 0.0, %v2082
    %v2084 = vpop.f32.mrf.mxu0
    %v2085 = vadd.f32 0.0, %v2084
    %2086 = vmatmul.bf16.gmra.mxu0 %v1262
    %v2087 = vpop.f32.mrf.mxu0
    %v2088 = vadd.f32 0.0, %v2087
    %v2089 = vpop.f32.mrf.mxu0
    %v2090 = vadd.f32 0.0, %v2089
    %2091 = vmatmul.bf16.gmra.mxu0 %v1266
    %v2092 = vpop.f32.mrf.mxu0
    %v2093 = vadd.f32 0.0, %v2092
    %v2094 = vpop.f32.mrf.mxu0
    %v2095 = vadd.f32 0.0, %v2094
    %2096 = vmatmul.bf16.gmra.mxu0 %v1270
    %v2097 = vpop.f32.mrf.mxu0
    %v2098 = vadd.f32 0.0, %v2097
    %v2099 = vpop.f32.mrf.mxu0
    %v2100 = vadd.f32 0.0, %v2099
    %2101 = vmatmul.bf16.gmra.mxu0 %v1274
    %v2102 = vpop.f32.mrf.mxu0
    %v2103 = vadd.f32 0.0, %v2102
    %v2104 = vpop.f32.mrf.mxu0
    %v2105 = vadd.f32 0.0, %v2104
    %2106 = vdwg.mxu0
    %2107 = vmatpush.bf16.msra.mxu0 %v1565
    %2108 = vmatpush.bf16.msra.mxu0 %v1563
    %2109 = vmatpush.bf16.msra.mxu0 %v1561
    %2110 = vmatpush.bf16.msra.mxu0 %v1559
    %2111 = vmatpush.bf16.msra.mxu0 %v1557
    %2112 = vmatpush.bf16.msra.mxu0 %v1555
    %2113 = vmatpush.bf16.msra.mxu0 %v1553
    %2114 = vmatpush.bf16.msra.mxu0 %v1551
    %2115 = vmatmul.bf16.gmra.mxu0 %v1215
    %v2116 = vpop.f32.mrf.mxu0
    %v2117 = vadd.f32 %v2028, %v2116
    %v2118 = vpop.f32.mrf.mxu0
    %v2119 = vadd.f32 %v2030, %v2118
    %2120 = vmatmul.bf16.gmra.mxu0 %v1219
    %v2121 = vpop.f32.mrf.mxu0
    %v2122 = vadd.f32 %v2033, %v2121
    %v2123 = vpop.f32.mrf.mxu0
    %v2124 = vadd.f32 %v2035, %v2123
    %2125 = vmatmul.bf16.gmra.mxu0 %v1223
    %v2126 = vpop.f32.mrf.mxu0
    %v2127 = vadd.f32 %v2038, %v2126
    %v2128 = vpop.f32.mrf.mxu0
    %v2129 = vadd.f32 %v2040, %v2128
    %2130 = vmatmul.bf16.gmra.mxu0 %v1227
    %v2131 = vpop.f32.mrf.mxu0
    %v2132 = vadd.f32 %v2043, %v2131
    %v2133 = vpop.f32.mrf.mxu0
    %v2134 = vadd.f32 %v2045, %v2133
    %2135 = vmatmul.bf16.gmra.mxu0 %v1231
    %v2136 = vpop.f32.mrf.mxu0
    %v2137 = vadd.f32 %v2048, %v2136
    %v2138 = vpop.f32.mrf.mxu0
    %v2139 = vadd.f32 %v2050, %v2138
    %2140 = vmatmul.bf16.gmra.mxu0 %v1235
    %v2141 = vpop.f32.mrf.mxu0
    %v2142 = vadd.f32 %v2053, %v2141
    %v2143 = vpop.f32.mrf.mxu0
    %v2144 = vadd.f32 %v2055, %v2143
    %2145 = vmatmul.bf16.gmra.mxu0 %v1239
    %v2146 = vpop.f32.mrf.mxu0
    %v2147 = vadd.f32 %v2058, %v2146
    %v2148 = vpop.f32.mrf.mxu0
    %v2149 = vadd.f32 %v2060, %v2148
    %2150 = vmatmul.bf16.gmra.mxu0 %v1243
    %v2151 = vpop.f32.mrf.mxu0
    %v2152 = vadd.f32 %v2063, %v2151
    %v2153 = vpop.f32.mrf.mxu0
    %v2154 = vadd.f32 %v2065, %v2153
    %2155 = vmatmul.bf16.gmra.mxu0 %v1247
    %v2156 = vpop.f32.mrf.mxu0
    %v2157 = vadd.f32 %v2068, %v2156
    %v2158 = vpop.f32.mrf.mxu0
    %v2159 = vadd.f32 %v2070, %v2158
    %2160 = vmatmul.bf16.gmra.mxu0 %v1251
    %v2161 = vpop.f32.mrf.mxu0
    %v2162 = vadd.f32 %v2073, %v2161
    %v2163 = vpop.f32.mrf.mxu0
    %v2164 = vadd.f32 %v2075, %v2163
    %2165 = vmatmul.bf16.gmra.mxu0 %v1255
    %v2166 = vpop.f32.mrf.mxu0
    %v2167 = vadd.f32 %v2078, %v2166
    %v2168 = vpop.f32.mrf.mxu0
    %v2169 = vadd.f32 %v2080, %v2168
    %2170 = vmatmul.bf16.gmra.mxu0 %v1259
    %v2171 = vpop.f32.mrf.mxu0
    %v2172 = vadd.f32 %v2083, %v2171
    %v2173 = vpop.f32.mrf.mxu0
    %v2174 = vadd.f32 %v2085, %v2173
    %2175 = vmatmul.bf16.gmra.mxu0 %v1263
    %v2176 = vpop.f32.mrf.mxu0
    %v2177 = vadd.f32 %v2088, %v2176
    %v2178 = vpop.f32.mrf.mxu0
    %v2179 = vadd.f32 %v2090, %v2178
    %2180 = vmatmul.bf16.gmra.mxu0 %v1267
    %v2181 = vpop.f32.mrf.mxu0
    %v2182 = vadd.f32 %v2093, %v2181
    %v2183 = vpop.f32.mrf.mxu0
    %v2184 = vadd.f32 %v2095, %v2183
    %2185 = vmatmul.bf16.gmra.mxu0 %v1271
    %v2186 = vpop.f32.mrf.mxu0
    %v2187 = vadd.f32 %v2098, %v2186
    %v2188 = vpop.f32.mrf.mxu0
    %v2189 = vadd.f32 %v2100, %v2188
    %2190 = vmatmul.bf16.gmra.mxu0 %v1275
    %v2191 = vpop.f32.mrf.mxu0
    %v2192 = vadd.f32 %v2103, %v2191
    %v2193 = vpop.f32.mrf.mxu0
    %v2194 = vadd.f32 %v2105, %v2193
    %2195 = vdwg.mxu0
    %2196 = vmatpush.bf16.msra.mxu0 %v1581
    %2197 = vmatpush.bf16.msra.mxu0 %v1579
    %2198 = vmatpush.bf16.msra.mxu0 %v1577
    %2199 = vmatpush.bf16.msra.mxu0 %v1575
    %2200 = vmatpush.bf16.msra.mxu0 %v1573
    %2201 = vmatpush.bf16.msra.mxu0 %v1571
    %2202 = vmatpush.bf16.msra.mxu0 %v1569
    %2203 = vmatpush.bf16.msra.mxu0 %v1567
    %2204 = vmatmul.bf16.gmra.mxu0 %v1216
    %v2205 = vpop.f32.mrf.mxu0
    %v2206 = vadd.f32 %v2117, %v2205
    %v2207 = vpop.f32.mrf.mxu0
    %v2208 = vadd.f32 %v2119, %v2207
    %2209 = vmatmul.bf16.gmra.mxu0 %v1220
    %v2210 = vpop.f32.mrf.mxu0
    %v2211 = vadd.f32 %v2122, %v2210
    %v2212 = vpop.f32.mrf.mxu0
    %v2213 = vadd.f32 %v2124, %v2212
    %2214 = vmatmul.bf16.gmra.mxu0 %v1224
    %v2215 = vpop.f32.mrf.mxu0
    %v2216 = vadd.f32 %v2127, %v2215
    %v2217 = vpop.f32.mrf.mxu0
    %v2218 = vadd.f32 %v2129, %v2217
    %2219 = vmatmul.bf16.gmra.mxu0 %v1228
    %v2220 = vpop.f32.mrf.mxu0
    %v2221 = vadd.f32 %v2132, %v2220
    %v2222 = vpop.f32.mrf.mxu0
    %v2223 = vadd.f32 %v2134, %v2222
    %2224 = vmatmul.bf16.gmra.mxu0 %v1232
    %v2225 = vpop.f32.mrf.mxu0
    %v2226 = vadd.f32 %v2137, %v2225
    %v2227 = vpop.f32.mrf.mxu0
    %v2228 = vadd.f32 %v2139, %v2227
    %2229 = vmatmul.bf16.gmra.mxu0 %v1236
    %v2230 = vpop.f32.mrf.mxu0
    %v2231 = vadd.f32 %v2142, %v2230
    %v2232 = vpop.f32.mrf.mxu0
    %v2233 = vadd.f32 %v2144, %v2232
    %2234 = vmatmul.bf16.gmra.mxu0 %v1240
    %v2235 = vpop.f32.mrf.mxu0
    %v2236 = vadd.f32 %v2147, %v2235
    %v2237 = vpop.f32.mrf.mxu0
    %v2238 = vadd.f32 %v2149, %v2237
    %2239 = vmatmul.bf16.gmra.mxu0 %v1244
    %v2240 = vpop.f32.mrf.mxu0
    %v2241 = vadd.f32 %v2152, %v2240
    %v2242 = vpop.f32.mrf.mxu0
    %v2243 = vadd.f32 %v2154, %v2242
    %2244 = vmatmul.bf16.gmra.mxu0 %v1248
    %v2245 = vpop.f32.mrf.mxu0
    %v2246 = vadd.f32 %v2157, %v2245
    %v2247 = vpop.f32.mrf.mxu0
    %v2248 = vadd.f32 %v2159, %v2247
    %2249 = vmatmul.bf16.gmra.mxu0 %v1252
    %v2250 = vpop.f32.mrf.mxu0
    %v2251 = vadd.f32 %v2162, %v2250
    %v2252 = vpop.f32.mrf.mxu0
    %v2253 = vadd.f32 %v2164, %v2252
    %2254 = vmatmul.bf16.gmra.mxu0 %v1256
    %v2255 = vpop.f32.mrf.mxu0
    %v2256 = vadd.f32 %v2167, %v2255
    %v2257 = vpop.f32.mrf.mxu0
    %v2258 = vadd.f32 %v2169, %v2257
    %2259 = vmatmul.bf16.gmra.mxu0 %v1260
    %v2260 = vpop.f32.mrf.mxu0
    %v2261 = vadd.f32 %v2172, %v2260
    %v2262 = vpop.f32.mrf.mxu0
    %v2263 = vadd.f32 %v2174, %v2262
    %2264 = vmatmul.bf16.gmra.mxu0 %v1264
    %v2265 = vpop.f32.mrf.mxu0
    %v2266 = vadd.f32 %v2177, %v2265
    %v2267 = vpop.f32.mrf.mxu0
    %v2268 = vadd.f32 %v2179, %v2267
    %2269 = vmatmul.bf16.gmra.mxu0 %v1268
    %v2270 = vpop.f32.mrf.mxu0
    %v2271 = vadd.f32 %v2182, %v2270
    %v2272 = vpop.f32.mrf.mxu0
    %v2273 = vadd.f32 %v2184, %v2272
    %2274 = vmatmul.bf16.gmra.mxu0 %v1272
    %v2275 = vpop.f32.mrf.mxu0
    %v2276 = vadd.f32 %v2187, %v2275
    %v2277 = vpop.f32.mrf.mxu0
    %v2278 = vadd.f32 %v2189, %v2277
    %2279 = vmatmul.bf16.gmra.mxu0 %v1276
    %v2280 = vpop.f32.mrf.mxu0
    %v2281 = vadd.f32 %v2192, %v2280
    %v2282 = vpop.f32.mrf.mxu0
    %v2283 = vadd.f32 %v2194, %v2282
    %2284 = vdwg.mxu0
    %2285 = vmatpush.bf16.msra.mxu0 %v1597
    %2286 = vmatpush.bf16.msra.mxu0 %v1595
    %2287 = vmatpush.bf16.msra.mxu0 %v1593
    %2288 = vmatpush.bf16.msra.mxu0 %v1591
    %2289 = vmatpush.bf16.msra.mxu0 %v1589
    %2290 = vmatpush.bf16.msra.mxu0 %v1587
    %2291 = vmatpush.bf16.msra.mxu0 %v1585
    %2292 = vmatpush.bf16.msra.mxu0 %v1583
    %2293 = vmatmul.bf16.gmra.mxu0 %v1217
    %v2294 = vpop.f32.mrf.mxu0
    %v2295 = vadd.f32 %v2206, %v2294
    %v2296 = vpop.f32.mrf.mxu0
    %v2297 = vadd.f32 %v2208, %v2296
    %2298 = vmatmul.bf16.gmra.mxu0 %v1221
    %v2299 = vpop.f32.mrf.mxu0
    %v2300 = vadd.f32 %v2211, %v2299
    %v2301 = vpop.f32.mrf.mxu0
    %v2302 = vadd.f32 %v2213, %v2301
    %2303 = vmatmul.bf16.gmra.mxu0 %v1225
    %v2304 = vpop.f32.mrf.mxu0
    %v2305 = vadd.f32 %v2216, %v2304
    %v2306 = vpop.f32.mrf.mxu0
    %v2307 = vadd.f32 %v2218, %v2306
    %2308 = vmatmul.bf16.gmra.mxu0 %v1229
    %v2309 = vpop.f32.mrf.mxu0
    %v2310 = vadd.f32 %v2221, %v2309
    %v2311 = vpop.f32.mrf.mxu0
    %v2312 = vadd.f32 %v2223, %v2311
    %2313 = vmatmul.bf16.gmra.mxu0 %v1233
    %v2314 = vpop.f32.mrf.mxu0
    %v2315 = vadd.f32 %v2226, %v2314
    %v2316 = vpop.f32.mrf.mxu0
    %v2317 = vadd.f32 %v2228, %v2316
    %2318 = vmatmul.bf16.gmra.mxu0 %v1237
    %v2319 = vpop.f32.mrf.mxu0
    %v2320 = vadd.f32 %v2231, %v2319
    %v2321 = vpop.f32.mrf.mxu0
    %v2322 = vadd.f32 %v2233, %v2321
    %2323 = vmatmul.bf16.gmra.mxu0 %v1241
    %v2324 = vpop.f32.mrf.mxu0
    %v2325 = vadd.f32 %v2236, %v2324
    %v2326 = vpop.f32.mrf.mxu0
    %v2327 = vadd.f32 %v2238, %v2326
    %2328 = vmatmul.bf16.gmra.mxu0 %v1245
    %v2329 = vpop.f32.mrf.mxu0
    %v2330 = vadd.f32 %v2241, %v2329
    %v2331 = vpop.f32.mrf.mxu0
    %v2332 = vadd.f32 %v2243, %v2331
    %2333 = vmatmul.bf16.gmra.mxu0 %v1249
    %v2334 = vpop.f32.mrf.mxu0
    %v2335 = vadd.f32 %v2246, %v2334
    %v2336 = vpop.f32.mrf.mxu0
    %v2337 = vadd.f32 %v2248, %v2336
    %2338 = vmatmul.bf16.gmra.mxu0 %v1253
    %v2339 = vpop.f32.mrf.mxu0
    %v2340 = vadd.f32 %v2251, %v2339
    %v2341 = vpop.f32.mrf.mxu0
    %v2342 = vadd.f32 %v2253, %v2341
    %2343 = vmatmul.bf16.gmra.mxu0 %v1257
    %v2344 = vpop.f32.mrf.mxu0
    %v2345 = vadd.f32 %v2256, %v2344
    %v2346 = vpop.f32.mrf.mxu0
    %v2347 = vadd.f32 %v2258, %v2346
    %2348 = vmatmul.bf16.gmra.mxu0 %v1261
    %v2349 = vpop.f32.mrf.mxu0
    %v2350 = vadd.f32 %v2261, %v2349
    %v2351 = vpop.f32.mrf.mxu0
    %v2352 = vadd.f32 %v2263, %v2351
    %2353 = vmatmul.bf16.gmra.mxu0 %v1265
    %v2354 = vpop.f32.mrf.mxu0
    %v2355 = vadd.f32 %v2266, %v2354
    %v2356 = vpop.f32.mrf.mxu0
    %v2357 = vadd.f32 %v2268, %v2356
    %2358 = vmatmul.bf16.gmra.mxu0 %v1269
    %v2359 = vpop.f32.mrf.mxu0
    %v2360 = vadd.f32 %v2271, %v2359
    %v2361 = vpop.f32.mrf.mxu0
    %v2362 = vadd.f32 %v2273, %v2361
    %2363 = vmatmul.bf16.gmra.mxu0 %v1273
    %v2364 = vpop.f32.mrf.mxu0
    %v2365 = vadd.f32 %v2276, %v2364
    %v2366 = vpop.f32.mrf.mxu0
    %v2367 = vadd.f32 %v2278, %v2366
    %2368 = vmatmul.bf16.gmra.mxu0 %v1277
    %v2369 = vpop.f32.mrf.mxu0
    %v2370 = vadd.f32 %v2281, %v2369
    %v2371 = vpop.f32.mrf.mxu0
    %v2372 = vadd.f32 %v2283, %v2371
    %2373 = vdwg.mxu0
    %v2374 = vmul.f32 %v1939, %v646
    %v2375 = vmul.f32 %v2295, %v646
    %v2376 = vmul.f32 %v1941, %v656
    %v2377 = vmul.f32 %v2297, %v656
    %v2378 = vmul.f32 %v1944, %v666
    %v2379 = vmul.f32 %v2300, %v666
    %v2380 = vmul.f32 %v1946, %v676
    %v2381 = vmul.f32 %v2302, %v676
    %v2382 = vmul.f32 %v1949, %v686
    %v2383 = vmul.f32 %v2305, %v686
    %v2384 = vmul.f32 %v1951, %v696
    %v2385 = vmul.f32 %v2307, %v696
    %v2386 = vmul.f32 %v1954, %v706
    %v2387 = vmul.f32 %v2310, %v706
    %v2388 = vmul.f32 %v1956, %v716
    %v2389 = vmul.f32 %v2312, %v716
    %v2390 = vmul.f32 %v1959, %v726
    %v2391 = vmul.f32 %v2315, %v726
    %v2392 = vmul.f32 %v1961, %v736
    %v2393 = vmul.f32 %v2317, %v736
    %v2394 = vmul.f32 %v1964, %v746
    %v2395 = vmul.f32 %v2320, %v746
    %v2396 = vmul.f32 %v1966, %v756
    %v2397 = vmul.f32 %v2322, %v756
    %v2398 = vmul.f32 %v1969, %v766
    %v2399 = vmul.f32 %v2325, %v766
    %v2400 = vmul.f32 %v1971, %v776
    %v2401 = vmul.f32 %v2327, %v776
    %v2402 = vmul.f32 %v1974, %v786
    %v2403 = vmul.f32 %v2330, %v786
    %v2404 = vmul.f32 %v1976, %v796
    %v2405 = vmul.f32 %v2332, %v796
    %v2406 = vmul.f32 %v1979, %v806
    %v2407 = vmul.f32 %v2335, %v806
    %v2408 = vmul.f32 %v1981, %v816
    %v2409 = vmul.f32 %v2337, %v816
    %v2410 = vmul.f32 %v1984, %v826
    %v2411 = vmul.f32 %v2340, %v826
    %v2412 = vmul.f32 %v1986, %v836
    %v2413 = vmul.f32 %v2342, %v836
    %v2414 = vmul.f32 %v1989, %v846
    %v2415 = vmul.f32 %v2345, %v846
    %v2416 = vmul.f32 %v1991, %v856
    %v2417 = vmul.f32 %v2347, %v856
    %v2418 = vmul.f32 %v1994, %v866
    %v2419 = vmul.f32 %v2350, %v866
    %v2420 = vmul.f32 %v1996, %v876
    %v2421 = vmul.f32 %v2352, %v876
    %v2422 = vmul.f32 %v1999, %v886
    %v2423 = vmul.f32 %v2355, %v886
    %v2424 = vmul.f32 %v2001, %v896
    %v2425 = vmul.f32 %v2357, %v896
    %v2426 = vmul.f32 %v2004, %v906
    %v2427 = vmul.f32 %v2360, %v906
    %v2428 = vmul.f32 %v2006, %v916
    %v2429 = vmul.f32 %v2362, %v916
    %v2430 = vmul.f32 %v2009, %v926
    %v2431 = vmul.f32 %v2365, %v926
    %v2432 = vmul.f32 %v2011, %v936
    %v2433 = vmul.f32 %v2367, %v936
    %v2434 = vmul.f32 %v2014, %v946
    %v2435 = vmul.f32 %v2370, %v946
    %v2436 = vmul.f32 %v2016, %v956
    %v2437 = vmul.f32 %v2372, %v956
    %v2439 = vperm.slane %v1021, 0
    %v2440 = vperm.slane %v1021, 1
    %v2443 = vadd.f32 %v2374, %v2439
    %v2444 = vadd.f32 %v2375, %v2440
    %v2445 = vadd.f32 %v2376, %v2439
    %v2446 = vadd.f32 %v2377, %v2440
    %v2447 = vadd.f32 %v2378, %v2439
    %v2448 = vadd.f32 %v2379, %v2440
    %v2449 = vadd.f32 %v2380, %v2439
    %v2450 = vadd.f32 %v2381, %v2440
    %v2451 = vadd.f32 %v2382, %v2439
    %v2452 = vadd.f32 %v2383, %v2440
    %v2453 = vadd.f32 %v2384, %v2439
    %v2454 = vadd.f32 %v2385, %v2440
    %v2455 = vadd.f32 %v2386, %v2439
    %v2456 = vadd.f32 %v2387, %v2440
    %v2457 = vadd.f32 %v2388, %v2439
    %v2458 = vadd.f32 %v2389, %v2440
    %v2459 = vadd.f32 %v2390, %v2439
    %v2460 = vadd.f32 %v2391, %v2440
    %v2461 = vadd.f32 %v2392, %v2439
    %v2462 = vadd.f32 %v2393, %v2440
    %v2463 = vadd.f32 %v2394, %v2439
    %v2464 = vadd.f32 %v2395, %v2440
    %v2465 = vadd.f32 %v2396, %v2439
    %v2466 = vadd.f32 %v2397, %v2440
    %v2467 = vadd.f32 %v2398, %v2439
    %v2468 = vadd.f32 %v2399, %v2440
    %v2469 = vadd.f32 %v2400, %v2439
    %v2470 = vadd.f32 %v2401, %v2440
    %v2471 = vadd.f32 %v2402, %v2439
    %v2472 = vadd.f32 %v2403, %v2440
    %v2473 = vadd.f32 %v2404, %v2439
    %v2474 = vadd.f32 %v2405, %v2440
    %v2475 = vadd.f32 %v2406, %v2439
    %v2476 = vadd.f32 %v2407, %v2440
    %v2477 = vadd.f32 %v2408, %v2439
    %v2478 = vadd.f32 %v2409, %v2440
    %v2479 = vadd.f32 %v2410, %v2439
    %v2480 = vadd.f32 %v2411, %v2440
    %v2481 = vadd.f32 %v2412, %v2439
    %v2482 = vadd.f32 %v2413, %v2440
    %v2483 = vadd.f32 %v2414, %v2439
    %v2484 = vadd.f32 %v2415, %v2440
    %v2485 = vadd.f32 %v2416, %v2439
    %v2486 = vadd.f32 %v2417, %v2440
    %v2487 = vadd.f32 %v2418, %v2439
    %v2488 = vadd.f32 %v2419, %v2440
    %v2489 = vadd.f32 %v2420, %v2439
    %v2490 = vadd.f32 %v2421, %v2440
    %v2491 = vadd.f32 %v2422, %v2439
    %v2492 = vadd.f32 %v2423, %v2440
    %v2493 = vadd.f32 %v2424, %v2439
    %v2494 = vadd.f32 %v2425, %v2440
    %v2495 = vadd.f32 %v2426, %v2439
    %v2496 = vadd.f32 %v2427, %v2440
    %v2497 = vadd.f32 %v2428, %v2439
    %v2498 = vadd.f32 %v2429, %v2440
    %v2499 = vadd.f32 %v2430, %v2439
    %v2500 = vadd.f32 %v2431, %v2440
    %v2501 = vadd.f32 %v2432, %v2439
    %v2502 = vadd.f32 %v2433, %v2440
    %v2503 = vadd.f32 %v2434, %v2439
    %v2504 = vadd.f32 %v2435, %v2440
    %v2505 = vadd.f32 %v2436, %v2439
    %v2506 = vadd.f32 %v2437, %v2440
    %v2507 = vpack.c.bf16 %v2445, %v2443
    %v2508 = vpack.c.bf16 %v2446, %v2444
    %v2509 = vpack.c.bf16 %v2449, %v2447
    %v2510 = vpack.c.bf16 %v2450, %v2448
    %v2511 = vpack.c.bf16 %v2453, %v2451
    %v2512 = vpack.c.bf16 %v2454, %v2452
    %v2513 = vpack.c.bf16 %v2457, %v2455
    %v2514 = vpack.c.bf16 %v2458, %v2456
    %v2515 = vpack.c.bf16 %v2461, %v2459
    %v2516 = vpack.c.bf16 %v2462, %v2460
    %v2517 = vpack.c.bf16 %v2465, %v2463
    %v2518 = vpack.c.bf16 %v2466, %v2464
    %v2519 = vpack.c.bf16 %v2469, %v2467
    %v2520 = vpack.c.bf16 %v2470, %v2468
    %v2521 = vpack.c.bf16 %v2473, %v2471
    %v2522 = vpack.c.bf16 %v2474, %v2472
    %v2523 = vpack.c.bf16 %v2477, %v2475
    %v2524 = vpack.c.bf16 %v2478, %v2476
    %v2525 = vpack.c.bf16 %v2481, %v2479
    %v2526 = vpack.c.bf16 %v2482, %v2480
    %v2527 = vpack.c.bf16 %v2485, %v2483
    %v2528 = vpack.c.bf16 %v2486, %v2484
    %v2529 = vpack.c.bf16 %v2489, %v2487
    %v2530 = vpack.c.bf16 %v2490, %v2488
    %v2531 = vpack.c.bf16 %v2493, %v2491
    %v2532 = vpack.c.bf16 %v2494, %v2492
    %v2533 = vpack.c.bf16 %v2497, %v2495
    %v2534 = vpack.c.bf16 %v2498, %v2496
    %v2535 = vpack.c.bf16 %v2501, %v2499
    %v2536 = vpack.c.bf16 %v2502, %v2500
    %v2537 = vpack.c.bf16 %v2505, %v2503
    %v2538 = vpack.c.bf16 %v2506, %v2504
    %v2539 = vunpack.c.l.bf16 %v2507
    %v2540 = vunpack.c.l.bf16 %v2508
    %v2541 = vunpack.c.h.bf16 %v2507
    %v2542 = vunpack.c.h.bf16 %v2508
    %v2543 = vunpack.c.l.bf16 %v2509
    %v2544 = vunpack.c.l.bf16 %v2510
    %v2545 = vunpack.c.h.bf16 %v2509
    %v2546 = vunpack.c.h.bf16 %v2510
    %v2547 = vunpack.c.l.bf16 %v2511
    %v2548 = vunpack.c.l.bf16 %v2512
    %v2549 = vunpack.c.h.bf16 %v2511
    %v2550 = vunpack.c.h.bf16 %v2512
    %v2551 = vunpack.c.l.bf16 %v2513
    %v2552 = vunpack.c.l.bf16 %v2514
    %v2553 = vunpack.c.h.bf16 %v2513
    %v2554 = vunpack.c.h.bf16 %v2514
    %v2555 = vunpack.c.l.bf16 %v2515
    %v2556 = vunpack.c.l.bf16 %v2516
    %v2557 = vunpack.c.h.bf16 %v2515
    %v2558 = vunpack.c.h.bf16 %v2516
    %v2559 = vunpack.c.l.bf16 %v2517
    %v2560 = vunpack.c.l.bf16 %v2518
    %v2561 = vunpack.c.h.bf16 %v2517
    %v2562 = vunpack.c.h.bf16 %v2518
    %v2563 = vunpack.c.l.bf16 %v2519
    %v2564 = vunpack.c.l.bf16 %v2520
    %v2565 = vunpack.c.h.bf16 %v2519
    %v2566 = vunpack.c.h.bf16 %v2520
    %v2567 = vunpack.c.l.bf16 %v2521
    %v2568 = vunpack.c.l.bf16 %v2522
    %v2569 = vunpack.c.h.bf16 %v2521
    %v2570 = vunpack.c.h.bf16 %v2522
    %v2571 = vunpack.c.l.bf16 %v2523
    %v2572 = vunpack.c.l.bf16 %v2524
    %v2573 = vunpack.c.h.bf16 %v2523
    %v2574 = vunpack.c.h.bf16 %v2524
    %v2575 = vunpack.c.l.bf16 %v2525
    %v2576 = vunpack.c.l.bf16 %v2526
    %v2577 = vunpack.c.h.bf16 %v2525
    %v2578 = vunpack.c.h.bf16 %v2526
    %v2579 = vunpack.c.l.bf16 %v2527
    %v2580 = vunpack.c.l.bf16 %v2528
    %v2581 = vunpack.c.h.bf16 %v2527
    %v2582 = vunpack.c.h.bf16 %v2528
    %v2583 = vunpack.c.l.bf16 %v2529
    %v2584 = vunpack.c.l.bf16 %v2530
    %v2585 = vunpack.c.h.bf16 %v2529
    %v2586 = vunpack.c.h.bf16 %v2530
    %v2587 = vunpack.c.l.bf16 %v2531
    %v2588 = vunpack.c.l.bf16 %v2532
    %v2589 = vunpack.c.h.bf16 %v2531
    %v2590 = vunpack.c.h.bf16 %v2532
    %v2591 = vunpack.c.l.bf16 %v2533
    %v2592 = vunpack.c.l.bf16 %v2534
    %v2593 = vunpack.c.h.bf16 %v2533
    %v2594 = vunpack.c.h.bf16 %v2534
    %v2595 = vunpack.c.l.bf16 %v2535
    %v2596 = vunpack.c.l.bf16 %v2536
    %v2597 = vunpack.c.h.bf16 %v2535
    %v2598 = vunpack.c.h.bf16 %v2536
    %v2599 = vunpack.c.l.bf16 %v2537
    %v2600 = vunpack.c.l.bf16 %v2538
    %v2601 = vunpack.c.h.bf16 %v2537
    %v2602 = vunpack.c.h.bf16 %v2538
    %v2603 = vtanh.pop %v2539
    %v2604 = vtanh.pop %v2540
    %v2605 = vtanh.pop %v2541
    %v2606 = vtanh.pop %v2542
    %v2607 = vtanh.pop %v2543
    %v2608 = vtanh.pop %v2544
    %v2609 = vtanh.pop %v2545
    %v2610 = vtanh.pop %v2546
    %v2611 = vtanh.pop %v2547
    %v2612 = vtanh.pop %v2548
    %v2613 = vtanh.pop %v2549
    %v2614 = vtanh.pop %v2550
    %v2615 = vtanh.pop %v2551
    %v2616 = vtanh.pop %v2552
    %v2617 = vtanh.pop %v2553
    %v2618 = vtanh.pop %v2554
    %v2619 = vtanh.pop %v2555
    %v2620 = vtanh.pop %v2556
    %v2621 = vtanh.pop %v2557
    %v2622 = vtanh.pop %v2558
    %v2623 = vtanh.pop %v2559
    %v2624 = vtanh.pop %v2560
    %v2625 = vtanh.pop %v2561
    %v2626 = vtanh.pop %v2562
    %v2627 = vtanh.pop %v2563
    %v2628 = vtanh.pop %v2564
    %v2629 = vtanh.pop %v2565
    %v2630 = vtanh.pop %v2566
    %v2631 = vtanh.pop %v2567
    %v2632 = vtanh.pop %v2568
    %v2633 = vtanh.pop %v2569
    %v2634 = vtanh.pop %v2570
    %v2635 = vtanh.pop %v2571
    %v2636 = vtanh.pop %v2572
    %v2637 = vtanh.pop %v2573
    %v2638 = vtanh.pop %v2574
    %v2639 = vtanh.pop %v2575
    %v2640 = vtanh.pop %v2576
    %v2641 = vtanh.pop %v2577
    %v2642 = vtanh.pop %v2578
    %v2643 = vtanh.pop %v2579
    %v2644 = vtanh.pop %v2580
    %v2645 = vtanh.pop %v2581
    %v2646 = vtanh.pop %v2582
    %v2647 = vtanh.pop %v2583
    %v2648 = vtanh.pop %v2584
    %v2649 = vtanh.pop %v2585
    %v2650 = vtanh.pop %v2586
    %v2651 = vtanh.pop %v2587
    %v2652 = vtanh.pop %v2588
    %v2653 = vtanh.pop %v2589
    %v2654 = vtanh.pop %v2590
    %v2655 = vtanh.pop %v2591
    %v2656 = vtanh.pop %v2592
    %v2657 = vtanh.pop %v2593
    %v2658 = vtanh.pop %v2594
    %v2659 = vtanh.pop %v2595
    %v2660 = vtanh.pop %v2596
    %v2661 = vtanh.pop %v2597
    %v2662 = vtanh.pop %v2598
    %v2663 = vtanh.pop %v2599
    %v2664 = vtanh.pop %v2600
    %v2665 = vtanh.pop %v2601
    %v2666 = vtanh.pop %v2602
    %v2667 = vpack.c.bf16 %v2605, %v2603
    %v2668 = vpack.c.bf16 %v2606, %v2604
    %v2669 = vpack.c.bf16 %v2609, %v2607
    %v2670 = vpack.c.bf16 %v2610, %v2608
    %v2671 = vpack.c.bf16 %v2613, %v2611
    %v2672 = vpack.c.bf16 %v2614, %v2612
    %v2673 = vpack.c.bf16 %v2617, %v2615
    %v2674 = vpack.c.bf16 %v2618, %v2616
    %v2675 = vpack.c.bf16 %v2621, %v2619
    %v2676 = vpack.c.bf16 %v2622, %v2620
    %v2677 = vpack.c.bf16 %v2625, %v2623
    %v2678 = vpack.c.bf16 %v2626, %v2624
    %v2679 = vpack.c.bf16 %v2629, %v2627
    %v2680 = vpack.c.bf16 %v2630, %v2628
    %v2681 = vpack.c.bf16 %v2633, %v2631
    %v2682 = vpack.c.bf16 %v2634, %v2632
    %v2683 = vpack.c.bf16 %v2637, %v2635
    %v2684 = vpack.c.bf16 %v2638, %v2636
    %v2685 = vpack.c.bf16 %v2641, %v2639
    %v2686 = vpack.c.bf16 %v2642, %v2640
    %v2687 = vpack.c.bf16 %v2645, %v2643
    %v2688 = vpack.c.bf16 %v2646, %v2644
    %v2689 = vpack.c.bf16 %v2649, %v2647
    %v2690 = vpack.c.bf16 %v2650, %v2648
    %v2691 = vpack.c.bf16 %v2653, %v2651
    %v2692 = vpack.c.bf16 %v2654, %v2652
    %v2693 = vpack.c.bf16 %v2657, %v2655
    %v2694 = vpack.c.bf16 %v2658, %v2656
    %v2695 = vpack.c.bf16 %v2661, %v2659
    %v2696 = vpack.c.bf16 %v2662, %v2660
    %v2697 = vpack.c.bf16 %v2665, %v2663
    %v2698 = vpack.c.bf16 %v2666, %v2664
    %v2699 = vld [vmem:[#allocation8] sm:$0xf]
    %v2700 = vld [vmem:[#allocation8 + $0x4] sm:$0xf]
    %v2701 = vld [vmem:[#allocation8 + $0x8] sm:$0xf]
    %v2702 = vld [vmem:[#allocation8 + $0xc] sm:$0xf]
    %v2703 = vld [vmem:[#allocation8 + $0x10] sm:$0xf]
    %v2704 = vld [vmem:[#allocation8 + $0x14] sm:$0xf]
    %v2705 = vld [vmem:[#allocation8 + $0x18] sm:$0xf]
    %v2706 = vld [vmem:[#allocation8 + $0x1c] sm:$0xf]
    %v2707 = vld [vmem:[#allocation8 + $0x20] sm:$0xf]
    %v2708 = vld [vmem:[#allocation8 + $0x24] sm:$0xf]
    %v2709 = vld [vmem:[#allocation8 + $0x28] sm:$0xf]
    %v2710 = vld [vmem:[#allocation8 + $0x2c] sm:$0xf]
    %v2711 = vld [vmem:[#allocation8 + $0x30] sm:$0xf]
    %v2712 = vld [vmem:[#allocation8 + $0x34] sm:$0xf]
    %v2713 = vld [vmem:[#allocation8 + $0x38] sm:$0xf]
    %v2714 = vld [vmem:[#allocation8 + $0x3c] sm:$0xf]
    %v2715 = vld [vmem:[#allocation8 + $0x40] sm:$0xf]
    %v2716 = vld [vmem:[#allocation8 + $0x44] sm:$0xf]
    %v2717 = vld [vmem:[#allocation8 + $0x48] sm:$0xf]
    %v2718 = vld [vmem:[#allocation8 + $0x4c] sm:$0xf]
    %v2719 = vld [vmem:[#allocation8 + $0x50] sm:$0xf]
    %v2720 = vld [vmem:[#allocation8 + $0x54] sm:$0xf]
    %v2721 = vld [vmem:[#allocation8 + $0x58] sm:$0xf]
    %v2722 = vld [vmem:[#allocation8 + $0x5c] sm:$0xf]
    %v2723 = vld [vmem:[#allocation8 + $0x60] sm:$0xf]
    %v2724 = vld [vmem:[#allocation8 + $0x64] sm:$0xf]
    %v2725 = vld [vmem:[#allocation8 + $0x68] sm:$0xf]
    %v2726 = vld [vmem:[#allocation8 + $0x6c] sm:$0xf]
    %v2727 = vld [vmem:[#allocation8 + $0x70] sm:$0xf]
    %v2728 = vld [vmem:[#allocation8 + $0x74] sm:$0xf]
    %v2729 = vld [vmem:[#allocation8 + $0x78] sm:$0xf]
    %v2730 = vld [vmem:[#allocation8 + $0x7c] sm:$0xf]
    %v2731 = vld [vmem:[%s4] sm:$0x1]
    %v2733 = vperm.slane %v2731, 0
    %v2767 = vunpack.c.l.b16 %v2699
    %v2768 = vunpack.c.l.b16 %v2700
    %v2769 = vunpack.c.l.b16 %v2701
    %v2770 = vunpack.c.l.b16 %v2702
    %v2771 = vunpack.c.l.b16 %v2703
    %v2772 = vunpack.c.l.b16 %v2704
    %v2773 = vunpack.c.l.b16 %v2705
    %v2774 = vunpack.c.l.b16 %v2706
    %v2775 = vunpack.c.l.b16 %v2707
    %v2776 = vunpack.c.l.b16 %v2708
    %v2777 = vunpack.c.l.b16 %v2709
    %v2778 = vunpack.c.l.b16 %v2710
    %v2779 = vunpack.c.l.b16 %v2711
    %v2780 = vunpack.c.l.b16 %v2712
    %v2781 = vunpack.c.l.b16 %v2713
    %v2782 = vunpack.c.l.b16 %v2714
    %v2783 = vunpack.c.l.b16 %v2715
    %v2784 = vunpack.c.l.b16 %v2716
    %v2785 = vunpack.c.l.b16 %v2717
    %v2786 = vunpack.c.l.b16 %v2718
    %v2787 = vunpack.c.l.b16 %v2719
    %v2788 = vunpack.c.l.b16 %v2720
    %v2789 = vunpack.c.l.b16 %v2721
    %v2790 = vunpack.c.l.b16 %v2722
    %v2791 = vunpack.c.l.b16 %v2723
    %v2792 = vunpack.c.l.b16 %v2724
    %v2793 = vunpack.c.l.b16 %v2725
    %v2794 = vunpack.c.l.b16 %v2726
    %v2795 = vunpack.c.l.b16 %v2727
    %v2796 = vunpack.c.l.b16 %v2728
    %v2797 = vunpack.c.l.b16 %v2729
    %v2798 = vunpack.c.l.b16 %v2730
    %v2799 = vpack.c.b16 %v2768, %v2767
    %v2800 = vpack.c.b16 %v2770, %v2769
    %v2801 = vpack.c.b16 %v2772, %v2771
    %v2802 = vpack.c.b16 %v2774, %v2773
    %v2803 = vpack.c.b16 %v2776, %v2775
    %v2804 = vpack.c.b16 %v2778, %v2777
    %v2805 = vpack.c.b16 %v2780, %v2779
    %v2806 = vpack.c.b16 %v2782, %v2781
    %v2807 = vpack.c.b16 %v2784, %v2783
    %v2808 = vpack.c.b16 %v2786, %v2785
    %v2809 = vpack.c.b16 %v2788, %v2787
    %v2810 = vpack.c.b16 %v2790, %v2789
    %v2811 = vpack.c.b16 %v2792, %v2791
    %v2812 = vpack.c.b16 %v2794, %v2793
    %v2813 = vpack.c.b16 %v2796, %v2795
    %v2814 = vpack.c.b16 %v2798, %v2797
    %2831 = vmatpush.bf16.msra.mxu0 %v2806
    %2832 = vmatpush.bf16.msra.mxu0 %v2805
    %2833 = vmatpush.bf16.msra.mxu0 %v2804
    %2834 = vmatpush.bf16.msra.mxu0 %v2803
    %2835 = vmatpush.bf16.msra.mxu0 %v2802
    %2836 = vmatpush.bf16.msra.mxu0 %v2801
    %2837 = vmatpush.bf16.msra.mxu0 %v2800
    %2838 = vmatpush.bf16.msra.mxu0 %v2799
    %2839 = vmatmul.bf16.gmra.mxu0 %v2667
    %v2840 = vpop.f32.mrf.mxu0
    %v2841 = vadd.f32 %v2733, %v2840
    %v2842 = vpop.f32.mrf.mxu0
    %v2843 = vadd.f32 %v2733, %v2842
    %2844 = vmatmul.bf16.gmra.mxu0 %v2669
    %v2845 = vpop.f32.mrf.mxu0
    %v2846 = vadd.f32 %v2733, %v2845
    %v2847 = vpop.f32.mrf.mxu0
    %v2848 = vadd.f32 %v2733, %v2847
    %2849 = vmatmul.bf16.gmra.mxu0 %v2671
    %v2850 = vpop.f32.mrf.mxu0
    %v2851 = vadd.f32 %v2733, %v2850
    %v2852 = vpop.f32.mrf.mxu0
    %v2853 = vadd.f32 %v2733, %v2852
    %2854 = vmatmul.bf16.gmra.mxu0 %v2673
    %v2855 = vpop.f32.mrf.mxu0
    %v2856 = vadd.f32 %v2733, %v2855
    %v2857 = vpop.f32.mrf.mxu0
    %v2858 = vadd.f32 %v2733, %v2857
    %2859 = vmatmul.bf16.gmra.mxu0 %v2675
    %v2860 = vpop.f32.mrf.mxu0
    %v2861 = vadd.f32 %v2733, %v2860
    %v2862 = vpop.f32.mrf.mxu0
    %v2863 = vadd.f32 %v2733, %v2862
    %2864 = vmatmul.bf16.gmra.mxu0 %v2677
    %v2865 = vpop.f32.mrf.mxu0
    %v2866 = vadd.f32 %v2733, %v2865
    %v2867 = vpop.f32.mrf.mxu0
    %v2868 = vadd.f32 %v2733, %v2867
    %2869 = vmatmul.bf16.gmra.mxu0 %v2679
    %v2870 = vpop.f32.mrf.mxu0
    %v2871 = vadd.f32 %v2733, %v2870
    %v2872 = vpop.f32.mrf.mxu0
    %v2873 = vadd.f32 %v2733, %v2872
    %2874 = vmatmul.bf16.gmra.mxu0 %v2681
    %v2875 = vpop.f32.mrf.mxu0
    %v2876 = vadd.f32 %v2733, %v2875
    %v2877 = vpop.f32.mrf.mxu0
    %v2878 = vadd.f32 %v2733, %v2877
    %2879 = vmatmul.bf16.gmra.mxu0 %v2683
    %v2880 = vpop.f32.mrf.mxu0
    %v2881 = vadd.f32 %v2733, %v2880
    %v2882 = vpop.f32.mrf.mxu0
    %v2883 = vadd.f32 %v2733, %v2882
    %2884 = vmatmul.bf16.gmra.mxu0 %v2685
    %v2885 = vpop.f32.mrf.mxu0
    %v2886 = vadd.f32 %v2733, %v2885
    %v2887 = vpop.f32.mrf.mxu0
    %v2888 = vadd.f32 %v2733, %v2887
    %2889 = vmatmul.bf16.gmra.mxu0 %v2687
    %v2890 = vpop.f32.mrf.mxu0
    %v2891 = vadd.f32 %v2733, %v2890
    %v2892 = vpop.f32.mrf.mxu0
    %v2893 = vadd.f32 %v2733, %v2892
    %2894 = vmatmul.bf16.gmra.mxu0 %v2689
    %v2895 = vpop.f32.mrf.mxu0
    %v2896 = vadd.f32 %v2733, %v2895
    %v2897 = vpop.f32.mrf.mxu0
    %v2898 = vadd.f32 %v2733, %v2897
    %2899 = vmatmul.bf16.gmra.mxu0 %v2691
    %v2900 = vpop.f32.mrf.mxu0
    %v2901 = vadd.f32 %v2733, %v2900
    %v2902 = vpop.f32.mrf.mxu0
    %v2903 = vadd.f32 %v2733, %v2902
    %2904 = vmatmul.bf16.gmra.mxu0 %v2693
    %v2905 = vpop.f32.mrf.mxu0
    %v2906 = vadd.f32 %v2733, %v2905
    %v2907 = vpop.f32.mrf.mxu0
    %v2908 = vadd.f32 %v2733, %v2907
    %2909 = vmatmul.bf16.gmra.mxu0 %v2695
    %v2910 = vpop.f32.mrf.mxu0
    %v2911 = vadd.f32 %v2733, %v2910
    %v2912 = vpop.f32.mrf.mxu0
    %v2913 = vadd.f32 %v2733, %v2912
    %2914 = vmatmul.bf16.gmra.mxu0 %v2697
    %v2915 = vpop.f32.mrf.mxu0
    %v2916 = vadd.f32 %v2733, %v2915
    %v2917 = vpop.f32.mrf.mxu0
    %v2918 = vadd.f32 %v2733, %v2917
    %2919 = vdwg.mxu0
    %2920 = vmatpush.bf16.msra.mxu0 %v2814
    %2921 = vmatpush.bf16.msra.mxu0 %v2813
    %2922 = vmatpush.bf16.msra.mxu0 %v2812
    %2923 = vmatpush.bf16.msra.mxu0 %v2811
    %2924 = vmatpush.bf16.msra.mxu0 %v2810
    %2925 = vmatpush.bf16.msra.mxu0 %v2809
    %2926 = vmatpush.bf16.msra.mxu0 %v2808
    %2927 = vmatpush.bf16.msra.mxu0 %v2807
    %2928 = vmatmul.bf16.gmra.mxu0 %v2668
    %v2929 = vpop.f32.mrf.mxu0
    %v2930 = vadd.f32 %v2841, %v2929
    %v2931 = vpop.f32.mrf.mxu0
    %v2932 = vadd.f32 %v2843, %v2931
    %2933 = vmatmul.bf16.gmra.mxu0 %v2670
    %v2934 = vpop.f32.mrf.mxu0
    %v2935 = vadd.f32 %v2846, %v2934
    %v2936 = vpop.f32.mrf.mxu0
    %v2937 = vadd.f32 %v2848, %v2936
    %2938 = vmatmul.bf16.gmra.mxu0 %v2672
    %v2939 = vpop.f32.mrf.mxu0
    %v2940 = vadd.f32 %v2851, %v2939
    %v2941 = vpop.f32.mrf.mxu0
    %v2942 = vadd.f32 %v2853, %v2941
    %2943 = vmatmul.bf16.gmra.mxu0 %v2674
    %v2944 = vpop.f32.mrf.mxu0
    %v2945 = vadd.f32 %v2856, %v2944
    %v2946 = vpop.f32.mrf.mxu0
    %v2947 = vadd.f32 %v2858, %v2946
    %2948 = vmatmul.bf16.gmra.mxu0 %v2676
    %v2949 = vpop.f32.mrf.mxu0
    %v2950 = vadd.f32 %v2861, %v2949
    %v2951 = vpop.f32.mrf.mxu0
    %v2952 = vadd.f32 %v2863, %v2951
    %2953 = vmatmul.bf16.gmra.mxu0 %v2678
    %v2954 = vpop.f32.mrf.mxu0
    %v2955 = vadd.f32 %v2866, %v2954
    %v2956 = vpop.f32.mrf.mxu0
    %v2957 = vadd.f32 %v2868, %v2956
    %2958 = vmatmul.bf16.gmra.mxu0 %v2680
    %v2959 = vpop.f32.mrf.mxu0
    %v2960 = vadd.f32 %v2871, %v2959
    %v2961 = vpop.f32.mrf.mxu0
    %v2962 = vadd.f32 %v2873, %v2961
    %2963 = vmatmul.bf16.gmra.mxu0 %v2682
    %v2964 = vpop.f32.mrf.mxu0
    %v2965 = vadd.f32 %v2876, %v2964
    %v2966 = vpop.f32.mrf.mxu0
    %v2967 = vadd.f32 %v2878, %v2966
    %2968 = vmatmul.bf16.gmra.mxu0 %v2684
    %v2969 = vpop.f32.mrf.mxu0
    %v2970 = vadd.f32 %v2881, %v2969
    %v2971 = vpop.f32.mrf.mxu0
    %v2972 = vadd.f32 %v2883, %v2971
    %2973 = vmatmul.bf16.gmra.mxu0 %v2686
    %v2974 = vpop.f32.mrf.mxu0
    %v2975 = vadd.f32 %v2886, %v2974
    %v2976 = vpop.f32.mrf.mxu0
    %v2977 = vadd.f32 %v2888, %v2976
    %2978 = vmatmul.bf16.gmra.mxu0 %v2688
    %v2979 = vpop.f32.mrf.mxu0
    %v2980 = vadd.f32 %v2891, %v2979
    %v2981 = vpop.f32.mrf.mxu0
    %v2982 = vadd.f32 %v2893, %v2981
    %2983 = vmatmul.bf16.gmra.mxu0 %v2690
    %v2984 = vpop.f32.mrf.mxu0
    %v2985 = vadd.f32 %v2896, %v2984
    %v2986 = vpop.f32.mrf.mxu0
    %v2987 = vadd.f32 %v2898, %v2986
    %2988 = vmatmul.bf16.gmra.mxu0 %v2692
    %v2989 = vpop.f32.mrf.mxu0
    %v2990 = vadd.f32 %v2901, %v2989
    %v2991 = vpop.f32.mrf.mxu0
    %v2992 = vadd.f32 %v2903, %v2991
    %2993 = vmatmul.bf16.gmra.mxu0 %v2694
    %v2994 = vpop.f32.mrf.mxu0
    %v2995 = vadd.f32 %v2906, %v2994
    %v2996 = vpop.f32.mrf.mxu0
    %v2997 = vadd.f32 %v2908, %v2996
    %2998 = vmatmul.bf16.gmra.mxu0 %v2696
    %v2999 = vpop.f32.mrf.mxu0
    %v3000 = vadd.f32 %v2911, %v2999
    %v3001 = vpop.f32.mrf.mxu0
    %v3002 = vadd.f32 %v2913, %v3001
    %3003 = vmatmul.bf16.gmra.mxu0 %v2698
    %v3004 = vpop.f32.mrf.mxu0
    %v3005 = vadd.f32 %v2916, %v3004
    %v3006 = vpop.f32.mrf.mxu0
    %v3007 = vadd.f32 %v2918, %v3006
    %3008 = vdwg.mxu0
    %v3009 = vpack.c.bf16 %v2932, %v2930
    %v3010 = vpack.c.bf16 %v2937, %v2935
    %v3011 = vpack.c.bf16 %v2942, %v2940
    %v3012 = vpack.c.bf16 %v2947, %v2945
    %v3013 = vpack.c.bf16 %v2952, %v2950
    %v3014 = vpack.c.bf16 %v2957, %v2955
    %v3015 = vpack.c.bf16 %v2962, %v2960
    %v3016 = vpack.c.bf16 %v2967, %v2965
    %v3017 = vpack.c.bf16 %v2972, %v2970
    %v3018 = vpack.c.bf16 %v2977, %v2975
    %v3019 = vpack.c.bf16 %v2982, %v2980
    %v3020 = vpack.c.bf16 %v2987, %v2985
    %v3021 = vpack.c.bf16 %v2992, %v2990
    %v3022 = vpack.c.bf16 %v2997, %v2995
    %v3023 = vpack.c.bf16 %v3002, %v3000
    %v3024 = vpack.c.bf16 %v3007, %v3005
    %v3025 = vunpack.c.l.bf16 %v3009
    %v3026 = vunpack.c.h.bf16 %v3009
    %v3027 = vunpack.c.l.bf16 %v3010
    %v3028 = vunpack.c.h.bf16 %v3010
    %v3029 = vunpack.c.l.bf16 %v3011
    %v3030 = vunpack.c.h.bf16 %v3011
    %v3031 = vunpack.c.l.bf16 %v3012
    %v3032 = vunpack.c.h.bf16 %v3012
    %v3033 = vunpack.c.l.bf16 %v3013
    %v3034 = vunpack.c.h.bf16 %v3013
    %v3035 = vunpack.c.l.bf16 %v3014
    %v3036 = vunpack.c.h.bf16 %v3014
    %v3037 = vunpack.c.l.bf16 %v3015
    %v3038 = vunpack.c.h.bf16 %v3015
    %v3039 = vunpack.c.l.bf16 %v3016
    %v3040 = vunpack.c.h.bf16 %v3016
    %v3041 = vunpack.c.l.bf16 %v3017
    %v3042 = vunpack.c.h.bf16 %v3017
    %v3043 = vunpack.c.l.bf16 %v3018
    %v3044 = vunpack.c.h.bf16 %v3018
    %v3045 = vunpack.c.l.bf16 %v3019
    %v3046 = vunpack.c.h.bf16 %v3019
    %v3047 = vunpack.c.l.bf16 %v3020
    %v3048 = vunpack.c.h.bf16 %v3020
    %v3049 = vunpack.c.l.bf16 %v3021
    %v3050 = vunpack.c.h.bf16 %v3021
    %v3051 = vunpack.c.l.bf16 %v3022
    %v3052 = vunpack.c.h.bf16 %v3022
    %v3053 = vunpack.c.l.bf16 %v3023
    %v3054 = vunpack.c.h.bf16 %v3023
    %v3055 = vunpack.c.l.bf16 %v3024
    %v3056 = vunpack.c.h.bf16 %v3024
    %v3057 = vtanh.pop %v3025
    %v3058 = vtanh.pop %v3026
    %v3059 = vtanh.pop %v3027
    %v3060 = vtanh.pop %v3028
    %v3061 = vtanh.pop %v3029
    %v3062 = vtanh.pop %v3030
    %v3063 = vtanh.pop %v3031
    %v3064 = vtanh.pop %v3032
    %v3065 = vtanh.pop %v3033
    %v3066 = vtanh.pop %v3034
    %v3067 = vtanh.pop %v3035
    %v3068 = vtanh.pop %v3036
    %v3069 = vtanh.pop %v3037
    %v3070 = vtanh.pop %v3038
    %v3071 = vtanh.pop %v3039
    %v3072 = vtanh.pop %v3040
    %v3073 = vtanh.pop %v3041
    %v3074 = vtanh.pop %v3042
    %v3075 = vtanh.pop %v3043
    %v3076 = vtanh.pop %v3044
    %v3077 = vtanh.pop %v3045
    %v3078 = vtanh.pop %v3046
    %v3079 = vtanh.pop %v3047
    %v3080 = vtanh.pop %v3048
    %v3081 = vtanh.pop %v3049
    %v3082 = vtanh.pop %v3050
    %v3083 = vtanh.pop %v3051
    %v3084 = vtanh.pop %v3052
    %v3085 = vtanh.pop %v3053
    %v3086 = vtanh.pop %v3054
    %v3087 = vtanh.pop %v3055
    %v3088 = vtanh.pop %v3056
    %v3089 = vpack.c.bf16 %v3058, %v3057
    %v3090 = vpack.c.bf16 %v3060, %v3059
    %v3091 = vpack.c.bf16 %v3062, %v3061
    %v3092 = vpack.c.bf16 %v3064, %v3063
    %v3093 = vpack.c.bf16 %v3066, %v3065
    %v3094 = vpack.c.bf16 %v3068, %v3067
    %v3095 = vpack.c.bf16 %v3070, %v3069
    %v3096 = vpack.c.bf16 %v3072, %v3071
    %v3097 = vpack.c.bf16 %v3074, %v3073
    %v3098 = vpack.c.bf16 %v3076, %v3075
    %v3099 = vpack.c.bf16 %v3078, %v3077
    %v3100 = vpack.c.bf16 %v3080, %v3079
    %v3101 = vpack.c.bf16 %v3082, %v3081
    %v3102 = vpack.c.bf16 %v3084, %v3083
    %v3103 = vpack.c.bf16 %v3086, %v3085
    %v3104 = vpack.c.bf16 %v3088, %v3087
    %v3105 = vld [vmem:[#allocation10] sm:$0xff]
    %v3106 = vld [vmem:[#allocation10 + $0x8] sm:$0xff]
    %v3107 = vld [vmem:[#allocation10 + $0x10] sm:$0xff]
    %v3108 = vld [vmem:[#allocation10 + $0x18] sm:$0xff]
    %v3109 = vld [vmem:[#allocation10 + $0x20] sm:$0xff]
    %v3110 = vld [vmem:[#allocation10 + $0x28] sm:$0xff]
    %v3111 = vld [vmem:[#allocation10 + $0x30] sm:$0xff]
    %v3112 = vld [vmem:[#allocation10 + $0x38] sm:$0xff]
    %v3113 = vld [vmem:[#allocation10 + $0x40] sm:$0xff]
    %v3114 = vld [vmem:[#allocation10 + $0x48] sm:$0xff]
    %v3115 = vld [vmem:[#allocation10 + $0x50] sm:$0xff]
    %v3116 = vld [vmem:[#allocation10 + $0x58] sm:$0xff]
    %v3117 = vld [vmem:[#allocation10 + $0x60] sm:$0xff]
    %v3118 = vld [vmem:[#allocation10 + $0x68] sm:$0xff]
    %v3119 = vld [vmem:[#allocation10 + $0x70] sm:$0xff]
    %v3120 = vld [vmem:[#allocation10 + $0x78] sm:$0xff]
    %v3121 = vld [vmem:[%s6] sm:$0x3]
    %v3123 = vperm.slane %v3121, 0
    %v3124 = vperm.slane %v3121, 1
    %v3143 = vunpack.c.l.b16 %v3105
    %v3144 = vunpack.c.h.b16 %v3105
    %v3145 = vunpack.c.l.b16 %v3106
    %v3146 = vunpack.c.h.b16 %v3106
    %v3147 = vunpack.c.l.b16 %v3107
    %v3148 = vunpack.c.h.b16 %v3107
    %v3149 = vunpack.c.l.b16 %v3108
    %v3150 = vunpack.c.h.b16 %v3108
    %v3151 = vunpack.c.l.b16 %v3109
    %v3152 = vunpack.c.h.b16 %v3109
    %v3153 = vunpack.c.l.b16 %v3110
    %v3154 = vunpack.c.h.b16 %v3110
    %v3155 = vunpack.c.l.b16 %v3111
    %v3156 = vunpack.c.h.b16 %v3111
    %v3157 = vunpack.c.l.b16 %v3112
    %v3158 = vunpack.c.h.b16 %v3112
    %v3159 = vunpack.c.l.b16 %v3113
    %v3160 = vunpack.c.h.b16 %v3113
    %v3161 = vunpack.c.l.b16 %v3114
    %v3162 = vunpack.c.h.b16 %v3114
    %v3163 = vunpack.c.l.b16 %v3115
    %v3164 = vunpack.c.h.b16 %v3115
    %v3165 = vunpack.c.l.b16 %v3116
    %v3166 = vunpack.c.h.b16 %v3116
    %v3167 = vunpack.c.l.b16 %v3117
    %v3168 = vunpack.c.h.b16 %v3117
    %v3169 = vunpack.c.l.b16 %v3118
    %v3170 = vunpack.c.h.b16 %v3118
    %v3171 = vunpack.c.l.b16 %v3119
    %v3172 = vunpack.c.h.b16 %v3119
    %v3173 = vunpack.c.l.b16 %v3120
    %v3174 = vunpack.c.h.b16 %v3120
    %v3175 = vpack.c.b16 %v3145, %v3143
    %v3176 = vpack.c.b16 %v3146, %v3144
    %v3177 = vpack.c.b16 %v3149, %v3147
    %v3178 = vpack.c.b16 %v3150, %v3148
    %v3179 = vpack.c.b16 %v3153, %v3151
    %v3180 = vpack.c.b16 %v3154, %v3152
    %v3181 = vpack.c.b16 %v3157, %v3155
    %v3182 = vpack.c.b16 %v3158, %v3156
    %v3183 = vpack.c.b16 %v3161, %v3159
    %v3184 = vpack.c.b16 %v3162, %v3160
    %v3185 = vpack.c.b16 %v3165, %v3163
    %v3186 = vpack.c.b16 %v3166, %v3164
    %v3187 = vpack.c.b16 %v3169, %v3167
    %v3188 = vpack.c.b16 %v3170, %v3168
    %v3189 = vpack.c.b16 %v3173, %v3171
    %v3190 = vpack.c.b16 %v3174, %v3172
    %3207 = vmatpush.bf16.msra.mxu0 %v3189
    %3208 = vmatpush.bf16.msra.mxu0 %v3187
    %3209 = vmatpush.bf16.msra.mxu0 %v3185
    %3210 = vmatpush.bf16.msra.mxu0 %v3183
    %3211 = vmatpush.bf16.msra.mxu0 %v3181
    %3212 = vmatpush.bf16.msra.mxu0 %v3179
    %3213 = vmatpush.bf16.msra.mxu0 %v3177
    %3214 = vmatpush.bf16.msra.mxu0 %v3175
    %3215 = vmatmul.bf16.gmra.mxu0 %v3089
    %v3216 = vpop.f32.mrf.mxu0
    %v3217 = vadd.f32 %v3123, %v3216
    %v3218 = vpop.f32.mrf.mxu0
    %v3219 = vadd.f32 %v3123, %v3218
    %3220 = vmatmul.bf16.gmra.mxu0 %v3090
    %v3221 = vpop.f32.mrf.mxu0
    %v3222 = vadd.f32 %v3123, %v3221
    %v3223 = vpop.f32.mrf.mxu0
    %v3224 = vadd.f32 %v3123, %v3223
    %3225 = vmatmul.bf16.gmra.mxu0 %v3091
    %v3226 = vpop.f32.mrf.mxu0
    %v3227 = vadd.f32 %v3123, %v3226
    %v3228 = vpop.f32.mrf.mxu0
    %v3229 = vadd.f32 %v3123, %v3228
    %3230 = vmatmul.bf16.gmra.mxu0 %v3092
    %v3231 = vpop.f32.mrf.mxu0
    %v3232 = vadd.f32 %v3123, %v3231
    %v3233 = vpop.f32.mrf.mxu0
    %v3234 = vadd.f32 %v3123, %v3233
    %3235 = vmatmul.bf16.gmra.mxu0 %v3093
    %v3236 = vpop.f32.mrf.mxu0
    %v3237 = vadd.f32 %v3123, %v3236
    %v3238 = vpop.f32.mrf.mxu0
    %v3239 = vadd.f32 %v3123, %v3238
    %3240 = vmatmul.bf16.gmra.mxu0 %v3094
    %v3241 = vpop.f32.mrf.mxu0
    %v3242 = vadd.f32 %v3123, %v3241
    %v3243 = vpop.f32.mrf.mxu0
    %v3244 = vadd.f32 %v3123, %v3243
    %3245 = vmatmul.bf16.gmra.mxu0 %v3095
    %v3246 = vpop.f32.mrf.mxu0
    %v3247 = vadd.f32 %v3123, %v3246
    %v3248 = vpop.f32.mrf.mxu0
    %v3249 = vadd.f32 %v3123, %v3248
    %3250 = vmatmul.bf16.gmra.mxu0 %v3096
    %v3251 = vpop.f32.mrf.mxu0
    %v3252 = vadd.f32 %v3123, %v3251
    %v3253 = vpop.f32.mrf.mxu0
    %v3254 = vadd.f32 %v3123, %v3253
    %3255 = vmatmul.bf16.gmra.mxu0 %v3097
    %v3256 = vpop.f32.mrf.mxu0
    %v3257 = vadd.f32 %v3123, %v3256
    %v3258 = vpop.f32.mrf.mxu0
    %v3259 = vadd.f32 %v3123, %v3258
    %3260 = vmatmul.bf16.gmra.mxu0 %v3098
    %v3261 = vpop.f32.mrf.mxu0
    %v3262 = vadd.f32 %v3123, %v3261
    %v3263 = vpop.f32.mrf.mxu0
    %v3264 = vadd.f32 %v3123, %v3263
    %3265 = vmatmul.bf16.gmra.mxu0 %v3099
    %v3266 = vpop.f32.mrf.mxu0
    %v3267 = vadd.f32 %v3123, %v3266
    %v3268 = vpop.f32.mrf.mxu0
    %v3269 = vadd.f32 %v3123, %v3268
    %3270 = vmatmul.bf16.gmra.mxu0 %v3100
    %v3271 = vpop.f32.mrf.mxu0
    %v3272 = vadd.f32 %v3123, %v3271
    %v3273 = vpop.f32.mrf.mxu0
    %v3274 = vadd.f32 %v3123, %v3273
    %3275 = vmatmul.bf16.gmra.mxu0 %v3101
    %v3276 = vpop.f32.mrf.mxu0
    %v3277 = vadd.f32 %v3123, %v3276
    %v3278 = vpop.f32.mrf.mxu0
    %v3279 = vadd.f32 %v3123, %v3278
    %3280 = vmatmul.bf16.gmra.mxu0 %v3102
    %v3281 = vpop.f32.mrf.mxu0
    %v3282 = vadd.f32 %v3123, %v3281
    %v3283 = vpop.f32.mrf.mxu0
    %v3284 = vadd.f32 %v3123, %v3283
    %3285 = vmatmul.bf16.gmra.mxu0 %v3103
    %v3286 = vpop.f32.mrf.mxu0
    %v3287 = vadd.f32 %v3123, %v3286
    %v3288 = vpop.f32.mrf.mxu0
    %v3289 = vadd.f32 %v3123, %v3288
    %3290 = vmatmul.bf16.gmra.mxu0 %v3104
    %v3291 = vpop.f32.mrf.mxu0
    %v3292 = vadd.f32 %v3123, %v3291
    %v3293 = vpop.f32.mrf.mxu0
    %v3294 = vadd.f32 %v3123, %v3293
    %3295 = vdwg.mxu0
    %3296 = vmatpush.bf16.msra.mxu0 %v3190
    %3297 = vmatpush.bf16.msra.mxu0 %v3188
    %3298 = vmatpush.bf16.msra.mxu0 %v3186
    %3299 = vmatpush.bf16.msra.mxu0 %v3184
    %3300 = vmatpush.bf16.msra.mxu0 %v3182
    %3301 = vmatpush.bf16.msra.mxu0 %v3180
    %3302 = vmatpush.bf16.msra.mxu0 %v3178
    %3303 = vmatpush.bf16.msra.mxu0 %v3176
    %3304 = vmatmul.bf16.gmra.mxu0 %v3089
    %v3305 = vpop.f32.mrf.mxu0
    %v3306 = vadd.f32 %v3124, %v3305
    %v3307 = vpop.f32.mrf.mxu0
    %v3308 = vadd.f32 %v3124, %v3307
    %3309 = vmatmul.bf16.gmra.mxu0 %v3090
    %v3310 = vpop.f32.mrf.mxu0
    %v3311 = vadd.f32 %v3124, %v3310
    %v3312 = vpop.f32.mrf.mxu0
    %v3313 = vadd.f32 %v3124, %v3312
    %3314 = vmatmul.bf16.gmra.mxu0 %v3091
    %v3315 = vpop.f32.mrf.mxu0
    %v3316 = vadd.f32 %v3124, %v3315
    %v3317 = vpop.f32.mrf.mxu0
    %v3318 = vadd.f32 %v3124, %v3317
    %3319 = vmatmul.bf16.gmra.mxu0 %v3092
    %v3320 = vpop.f32.mrf.mxu0
    %v3321 = vadd.f32 %v3124, %v3320
    %v3322 = vpop.f32.mrf.mxu0
    %v3323 = vadd.f32 %v3124, %v3322
    %3324 = vmatmul.bf16.gmra.mxu0 %v3093
    %v3325 = vpop.f32.mrf.mxu0
    %v3326 = vadd.f32 %v3124, %v3325
    %v3327 = vpop.f32.mrf.mxu0
    %v3328 = vadd.f32 %v3124, %v3327
    %3329 = vmatmul.bf16.gmra.mxu0 %v3094
    %v3330 = vpop.f32.mrf.mxu0
    %v3331 = vadd.f32 %v3124, %v3330
    %v3332 = vpop.f32.mrf.mxu0
    %v3333 = vadd.f32 %v3124, %v3332
    %3334 = vmatmul.bf16.gmra.mxu0 %v3095
    %v3335 = vpop.f32.mrf.mxu0
    %v3336 = vadd.f32 %v3124, %v3335
    %v3337 = vpop.f32.mrf.mxu0
    %v3338 = vadd.f32 %v3124, %v3337
    %3339 = vmatmul.bf16.gmra.mxu0 %v3096
    %v3340 = vpop.f32.mrf.mxu0
    %v3341 = vadd.f32 %v3124, %v3340
    %v3342 = vpop.f32.mrf.mxu0
    %v3343 = vadd.f32 %v3124, %v3342
    %3344 = vmatmul.bf16.gmra.mxu0 %v3097
    %v3345 = vpop.f32.mrf.mxu0
    %v3346 = vadd.f32 %v3124, %v3345
    %v3347 = vpop.f32.mrf.mxu0
    %v3348 = vadd.f32 %v3124, %v3347
    %3349 = vmatmul.bf16.gmra.mxu0 %v3098
    %v3350 = vpop.f32.mrf.mxu0
    %v3351 = vadd.f32 %v3124, %v3350
    %v3352 = vpop.f32.mrf.mxu0
    %v3353 = vadd.f32 %v3124, %v3352
    %3354 = vmatmul.bf16.gmra.mxu0 %v3099
    %v3355 = vpop.f32.mrf.mxu0
    %v3356 = vadd.f32 %v3124, %v3355
    %v3357 = vpop.f32.mrf.mxu0
    %v3358 = vadd.f32 %v3124, %v3357
    %3359 = vmatmul.bf16.gmra.mxu0 %v3100
    %v3360 = vpop.f32.mrf.mxu0
    %v3361 = vadd.f32 %v3124, %v3360
    %v3362 = vpop.f32.mrf.mxu0
    %v3363 = vadd.f32 %v3124, %v3362
    %3364 = vmatmul.bf16.gmra.mxu0 %v3101
    %v3365 = vpop.f32.mrf.mxu0
    %v3366 = vadd.f32 %v3124, %v3365
    %v3367 = vpop.f32.mrf.mxu0
    %v3368 = vadd.f32 %v3124, %v3367
    %3369 = vmatmul.bf16.gmra.mxu0 %v3102
    %v3370 = vpop.f32.mrf.mxu0
    %v3371 = vadd.f32 %v3124, %v3370
    %v3372 = vpop.f32.mrf.mxu0
    %v3373 = vadd.f32 %v3124, %v3372
    %3374 = vmatmul.bf16.gmra.mxu0 %v3103
    %v3375 = vpop.f32.mrf.mxu0
    %v3376 = vadd.f32 %v3124, %v3375
    %v3377 = vpop.f32.mrf.mxu0
    %v3378 = vadd.f32 %v3124, %v3377
    %3379 = vmatmul.bf16.gmra.mxu0 %v3104
    %v3380 = vpop.f32.mrf.mxu0
    %v3381 = vadd.f32 %v3124, %v3380
    %v3382 = vpop.f32.mrf.mxu0
    %v3383 = vadd.f32 %v3124, %v3382
    %3384 = vdwg.mxu0
    %v3385 = vpack.c.bf16 %v3219, %v3217
    %v3386 = vpack.c.bf16 %v3308, %v3306
    %v3387 = vpack.c.bf16 %v3224, %v3222
    %v3388 = vpack.c.bf16 %v3313, %v3311
    %v3389 = vpack.c.bf16 %v3229, %v3227
    %v3390 = vpack.c.bf16 %v3318, %v3316
    %v3391 = vpack.c.bf16 %v3234, %v3232
    %v3392 = vpack.c.bf16 %v3323, %v3321
    %v3393 = vpack.c.bf16 %v3239, %v3237
    %v3394 = vpack.c.bf16 %v3328, %v3326
    %v3395 = vpack.c.bf16 %v3244, %v3242
    %v3396 = vpack.c.bf16 %v3333, %v3331
    %v3397 = vpack.c.bf16 %v3249, %v3247
    %v3398 = vpack.c.bf16 %v3338, %v3336
    %v3399 = vpack.c.bf16 %v3254, %v3252
    %v3400 = vpack.c.bf16 %v3343, %v3341
    %v3401 = vpack.c.bf16 %v3259, %v3257
    %v3402 = vpack.c.bf16 %v3348, %v3346
    %v3403 = vpack.c.bf16 %v3264, %v3262
    %v3404 = vpack.c.bf16 %v3353, %v3351
    %v3405 = vpack.c.bf16 %v3269, %v3267
    %v3406 = vpack.c.bf16 %v3358, %v3356
    %v3407 = vpack.c.bf16 %v3274, %v3272
    %v3408 = vpack.c.bf16 %v3363, %v3361
    %v3409 = vpack.c.bf16 %v3279, %v3277
    %v3410 = vpack.c.bf16 %v3368, %v3366
    %v3411 = vpack.c.bf16 %v3284, %v3282
    %v3412 = vpack.c.bf16 %v3373, %v3371
    %v3413 = vpack.c.bf16 %v3289, %v3287
    %v3414 = vpack.c.bf16 %v3378, %v3376
    %v3415 = vpack.c.bf16 %v3294, %v3292
    %v3416 = vpack.c.bf16 %v3383, %v3381
    %v3417 = vunpack.c.l.bf16 %v3385
    %v3418 = vunpack.c.l.bf16 %v3386
    %v3419 = vunpack.c.h.bf16 %v3385
    %v3420 = vunpack.c.h.bf16 %v3386
    %v3421 = vunpack.c.l.bf16 %v3387
    %v3422 = vunpack.c.l.bf16 %v3388
    %v3423 = vunpack.c.h.bf16 %v3387
    %v3424 = vunpack.c.h.bf16 %v3388
    %v3425 = vunpack.c.l.bf16 %v3389
    %v3426 = vunpack.c.l.bf16 %v3390
    %v3427 = vunpack.c.h.bf16 %v3389
    %v3428 = vunpack.c.h.bf16 %v3390
    %v3429 = vunpack.c.l.bf16 %v3391
    %v3430 = vunpack.c.l.bf16 %v3392
    %v3431 = vunpack.c.h.bf16 %v3391
    %v3432 = vunpack.c.h.bf16 %v3392
    %v3433 = vunpack.c.l.bf16 %v3393
    %v3434 = vunpack.c.l.bf16 %v3394
    %v3435 = vunpack.c.h.bf16 %v3393
    %v3436 = vunpack.c.h.bf16 %v3394
    %v3437 = vunpack.c.l.bf16 %v3395
    %v3438 = vunpack.c.l.bf16 %v3396
    %v3439 = vunpack.c.h.bf16 %v3395
    %v3440 = vunpack.c.h.bf16 %v3396
    %v3441 = vunpack.c.l.bf16 %v3397
    %v3442 = vunpack.c.l.bf16 %v3398
    %v3443 = vunpack.c.h.bf16 %v3397
    %v3444 = vunpack.c.h.bf16 %v3398
    %v3445 = vunpack.c.l.bf16 %v3399
    %v3446 = vunpack.c.l.bf16 %v3400
    %v3447 = vunpack.c.h.bf16 %v3399
    %v3448 = vunpack.c.h.bf16 %v3400
    %v3449 = vunpack.c.l.bf16 %v3401
    %v3450 = vunpack.c.l.bf16 %v3402
    %v3451 = vunpack.c.h.bf16 %v3401
    %v3452 = vunpack.c.h.bf16 %v3402
    %v3453 = vunpack.c.l.bf16 %v3403
    %v3454 = vunpack.c.l.bf16 %v3404
    %v3455 = vunpack.c.h.bf16 %v3403
    %v3456 = vunpack.c.h.bf16 %v3404
    %v3457 = vunpack.c.l.bf16 %v3405
    %v3458 = vunpack.c.l.bf16 %v3406
    %v3459 = vunpack.c.h.bf16 %v3405
    %v3460 = vunpack.c.h.bf16 %v3406
    %v3461 = vunpack.c.l.bf16 %v3407
    %v3462 = vunpack.c.l.bf16 %v3408
    %v3463 = vunpack.c.h.bf16 %v3407
    %v3464 = vunpack.c.h.bf16 %v3408
    %v3465 = vunpack.c.l.bf16 %v3409
    %v3466 = vunpack.c.l.bf16 %v3410
    %v3467 = vunpack.c.h.bf16 %v3409
    %v3468 = vunpack.c.h.bf16 %v3410
    %v3469 = vunpack.c.l.bf16 %v3411
    %v3470 = vunpack.c.l.bf16 %v3412
    %v3471 = vunpack.c.h.bf16 %v3411
    %v3472 = vunpack.c.h.bf16 %v3412
    %v3473 = vunpack.c.l.bf16 %v3413
    %v3474 = vunpack.c.l.bf16 %v3414
    %v3475 = vunpack.c.h.bf16 %v3413
    %v3476 = vunpack.c.h.bf16 %v3414
    %v3477 = vunpack.c.l.bf16 %v3415
    %v3478 = vunpack.c.l.bf16 %v3416
    %v3479 = vunpack.c.h.bf16 %v3415
    %v3480 = vunpack.c.h.bf16 %v3416
    %v3481 = vtanh.pop %v3417
    %v3482 = vtanh.pop %v3418
    %v3483 = vtanh.pop %v3419
    %v3484 = vtanh.pop %v3420
    %v3485 = vtanh.pop %v3421
    %v3486 = vtanh.pop %v3422
    %v3487 = vtanh.pop %v3423
    %v3488 = vtanh.pop %v3424
    %v3489 = vtanh.pop %v3425
    %v3490 = vtanh.pop %v3426
    %v3491 = vtanh.pop %v3427
    %v3492 = vtanh.pop %v3428
    %v3493 = vtanh.pop %v3429
    %v3494 = vtanh.pop %v3430
    %v3495 = vtanh.pop %v3431
    %v3496 = vtanh.pop %v3432
    %v3497 = vtanh.pop %v3433
    %v3498 = vtanh.pop %v3434
    %v3499 = vtanh.pop %v3435
    %v3500 = vtanh.pop %v3436
    %v3501 = vtanh.pop %v3437
    %v3502 = vtanh.pop %v3438
    %v3503 = vtanh.pop %v3439
    %v3504 = vtanh.pop %v3440
    %v3505 = vtanh.pop %v3441
    %v3506 = vtanh.pop %v3442
    %v3507 = vtanh.pop %v3443
    %v3508 = vtanh.pop %v3444
    %v3509 = vtanh.pop %v3445
    %v3510 = vtanh.pop %v3446
    %v3511 = vtanh.pop %v3447
    %v3512 = vtanh.pop %v3448
    %v3513 = vtanh.pop %v3449
    %v3514 = vtanh.pop %v3450
    %v3515 = vtanh.pop %v3451
    %v3516 = vtanh.pop %v3452
    %v3517 = vtanh.pop %v3453
    %v3518 = vtanh.pop %v3454
    %v3519 = vtanh.pop %v3455
    %v3520 = vtanh.pop %v3456
    %v3521 = vtanh.pop %v3457
    %v3522 = vtanh.pop %v3458
    %v3523 = vtanh.pop %v3459
    %v3524 = vtanh.pop %v3460
    %v3525 = vtanh.pop %v3461
    %v3526 = vtanh.pop %v3462
    %v3527 = vtanh.pop %v3463
    %v3528 = vtanh.pop %v3464
    %v3529 = vtanh.pop %v3465
    %v3530 = vtanh.pop %v3466
    %v3531 = vtanh.pop %v3467
    %v3532 = vtanh.pop %v3468
    %v3533 = vtanh.pop %v3469
    %v3534 = vtanh.pop %v3470
    %v3535 = vtanh.pop %v3471
    %v3536 = vtanh.pop %v3472
    %v3537 = vtanh.pop %v3473
    %v3538 = vtanh.pop %v3474
    %v3539 = vtanh.pop %v3475
    %v3540 = vtanh.pop %v3476
    %v3541 = vtanh.pop %v3477
    %v3542 = vtanh.pop %v3478
    %v3543 = vtanh.pop %v3479
    %v3544 = vtanh.pop %v3480
    %v3545 = vpack.c.bf16 %v3483, %v3481
    %v3546 = vpack.c.bf16 %v3484, %v3482
    %v3547 = vpack.c.bf16 %v3487, %v3485
    %v3548 = vpack.c.bf16 %v3488, %v3486
    %v3549 = vpack.c.bf16 %v3491, %v3489
    %v3550 = vpack.c.bf16 %v3492, %v3490
    %v3551 = vpack.c.bf16 %v3495, %v3493
    %v3552 = vpack.c.bf16 %v3496, %v3494
    %v3553 = vpack.c.bf16 %v3499, %v3497
    %v3554 = vpack.c.bf16 %v3500, %v3498
    %v3555 = vpack.c.bf16 %v3503, %v3501
    %v3556 = vpack.c.bf16 %v3504, %v3502
    %v3557 = vpack.c.bf16 %v3507, %v3505
    %v3558 = vpack.c.bf16 %v3508, %v3506
    %v3559 = vpack.c.bf16 %v3511, %v3509
    %v3560 = vpack.c.bf16 %v3512, %v3510
    %v3561 = vpack.c.bf16 %v3515, %v3513
    %v3562 = vpack.c.bf16 %v3516, %v3514
    %v3563 = vpack.c.bf16 %v3519, %v3517
    %v3564 = vpack.c.bf16 %v3520, %v3518
    %v3565 = vpack.c.bf16 %v3523, %v3521
    %v3566 = vpack.c.bf16 %v3524, %v3522
    %v3567 = vpack.c.bf16 %v3527, %v3525
    %v3568 = vpack.c.bf16 %v3528, %v3526
    %v3569 = vpack.c.bf16 %v3531, %v3529
    %v3570 = vpack.c.bf16 %v3532, %v3530
    %v3571 = vpack.c.bf16 %v3535, %v3533
    %v3572 = vpack.c.bf16 %v3536, %v3534
    %v3573 = vpack.c.bf16 %v3539, %v3537
    %v3574 = vpack.c.bf16 %v3540, %v3538
    %v3575 = vpack.c.bf16 %v3543, %v3541
    %v3576 = vpack.c.bf16 %v3544, %v3542
    %v3577 = vld [vmem:[#allocation11] sm:$0xff]
    %v3578 = vld [vmem:[#allocation11 + $0x8] sm:$0xff]
    %v3579 = vld [vmem:[#allocation11 + $0x10] sm:$0xff]
    %v3580 = vld [vmem:[#allocation11 + $0x18] sm:$0xff]
    %v3581 = vld [vmem:[#allocation11 + $0x20] sm:$0xff]
    %v3582 = vld [vmem:[#allocation11 + $0x28] sm:$0xff]
    %v3583 = vld [vmem:[#allocation11 + $0x30] sm:$0xff]
    %v3584 = vld [vmem:[#allocation11 + $0x38] sm:$0xff]
    %v3585 = vld [vmem:[#allocation11 + $0x40] sm:$0xff]
    %v3586 = vld [vmem:[#allocation11 + $0x48] sm:$0xff]
    %v3587 = vld [vmem:[#allocation11 + $0x50] sm:$0xff]
    %v3588 = vld [vmem:[#allocation11 + $0x58] sm:$0xff]
    %v3589 = vld [vmem:[#allocation11 + $0x60] sm:$0xff]
    %v3590 = vld [vmem:[#allocation11 + $0x68] sm:$0xff]
    %v3591 = vld [vmem:[#allocation11 + $0x70] sm:$0xff]
    %v3592 = vld [vmem:[#allocation11 + $0x78] sm:$0xff]
    %v3593 = vld [vmem:[#allocation11 + $0x80] sm:$0xff]
    %v3594 = vld [vmem:[#allocation11 + $0x88] sm:$0xff]
    %v3595 = vld [vmem:[#allocation11 + $0x90] sm:$0xff]
    %v3596 = vld [vmem:[#allocation11 + $0x98] sm:$0xff]
    %v3597 = vld [vmem:[#allocation11 + $0xa0] sm:$0xff]
    %v3598 = vld [vmem:[#allocation11 + $0xa8] sm:$0xff]
    %v3599 = vld [vmem:[#allocation11 + $0xb0] sm:$0xff]
    %v3600 = vld [vmem:[#allocation11 + $0xb8] sm:$0xff]
    %v3601 = vld [vmem:[#allocation11 + $0xc0] sm:$0xff]
    %v3602 = vld [vmem:[#allocation11 + $0xc8] sm:$0xff]
    %v3603 = vld [vmem:[#allocation11 + $0xd0] sm:$0xff]
    %v3604 = vld [vmem:[#allocation11 + $0xd8] sm:$0xff]
    %v3605 = vld [vmem:[#allocation11 + $0xe0] sm:$0xff]
    %v3606 = vld [vmem:[#allocation11 + $0xe8] sm:$0xff]
    %v3607 = vld [vmem:[#allocation11 + $0xf0] sm:$0xff]
    %v3608 = vld [vmem:[#allocation11 + $0xf8] sm:$0xff]
    %v3609 = vld [vmem:[#allocation11 + $0x100] sm:$0xff]
    %v3610 = vld [vmem:[#allocation11 + $0x108] sm:$0xff]
    %v3611 = vld [vmem:[#allocation11 + $0x110] sm:$0xff]
    %v3612 = vld [vmem:[#allocation11 + $0x118] sm:$0xff]
    %v3613 = vld [vmem:[#allocation11 + $0x120] sm:$0xff]
    %v3614 = vld [vmem:[#allocation11 + $0x128] sm:$0xff]
    %v3615 = vld [vmem:[#allocation11 + $0x130] sm:$0xff]
    %v3616 = vld [vmem:[#allocation11 + $0x138] sm:$0xff]
    %v3617 = vld [vmem:[#allocation11 + $0x140] sm:$0xff]
    %v3618 = vld [vmem:[#allocation11 + $0x148] sm:$0xff]
    %v3619 = vld [vmem:[#allocation11 + $0x150] sm:$0xff]
    %v3620 = vld [vmem:[#allocation11 + $0x158] sm:$0xff]
    %v3621 = vld [vmem:[#allocation11 + $0x160] sm:$0xff]
    %v3622 = vld [vmem:[#allocation11 + $0x168] sm:$0xff]
    %v3623 = vld [vmem:[#allocation11 + $0x170] sm:$0xff]
    %v3624 = vld [vmem:[#allocation11 + $0x178] sm:$0xff]
    %v3625 = vld [vmem:[#allocation11 + $0x180] sm:$0xff]
    %v3626 = vld [vmem:[#allocation11 + $0x188] sm:$0xff]
    %v3627 = vld [vmem:[#allocation11 + $0x190] sm:$0xff]
    %v3628 = vld [vmem:[#allocation11 + $0x198] sm:$0xff]
    %v3629 = vld [vmem:[#allocation11 + $0x1a0] sm:$0xff]
    %v3630 = vld [vmem:[#allocation11 + $0x1a8] sm:$0xff]
    %v3631 = vld [vmem:[#allocation11 + $0x1b0] sm:$0xff]
    %v3632 = vld [vmem:[#allocation11 + $0x1b8] sm:$0xff]
    %v3633 = vld [vmem:[#allocation11 + $0x1c0] sm:$0xff]
    %v3634 = vld [vmem:[#allocation11 + $0x1c8] sm:$0xff]
    %v3635 = vld [vmem:[#allocation11 + $0x1d0] sm:$0xff]
    %v3636 = vld [vmem:[#allocation11 + $0x1d8] sm:$0xff]
    %v3637 = vld [vmem:[#allocation11 + $0x1e0] sm:$0xff]
    %v3638 = vld [vmem:[#allocation11 + $0x1e8] sm:$0xff]
    %v3639 = vld [vmem:[#allocation11 + $0x1f0] sm:$0xff]
    %v3640 = vld [vmem:[#allocation11 + $0x1f8] sm:$0xff]
    %v3641 = vld [vmem:[%s8] sm:$0xf]
    %v3643 = vperm.slane %v3641, 0
    %v3644 = vperm.slane %v3641, 1
    %v3645 = vperm.slane %v3641, 2
    %v3646 = vperm.slane %v3641, 3
    %v3715 = vunpack.c.l.b16 %v3577
    %v3716 = vunpack.c.h.b16 %v3577
    %v3717 = vunpack.c.l.b16 %v3578
    %v3718 = vunpack.c.h.b16 %v3578
    %v3719 = vunpack.c.l.b16 %v3579
    %v3720 = vunpack.c.h.b16 %v3579
    %v3721 = vunpack.c.l.b16 %v3580
    %v3722 = vunpack.c.h.b16 %v3580
    %v3723 = vunpack.c.l.b16 %v3581
    %v3724 = vunpack.c.h.b16 %v3581
    %v3725 = vunpack.c.l.b16 %v3582
    %v3726 = vunpack.c.h.b16 %v3582
    %v3727 = vunpack.c.l.b16 %v3583
    %v3728 = vunpack.c.h.b16 %v3583
    %v3729 = vunpack.c.l.b16 %v3584
    %v3730 = vunpack.c.h.b16 %v3584
    %v3731 = vunpack.c.l.b16 %v3585
    %v3732 = vunpack.c.h.b16 %v3585
    %v3733 = vunpack.c.l.b16 %v3586
    %v3734 = vunpack.c.h.b16 %v3586
    %v3735 = vunpack.c.l.b16 %v3587
    %v3736 = vunpack.c.h.b16 %v3587
    %v3737 = vunpack.c.l.b16 %v3588
    %v3738 = vunpack.c.h.b16 %v3588
    %v3739 = vunpack.c.l.b16 %v3589
    %v3740 = vunpack.c.h.b16 %v3589
    %v3741 = vunpack.c.l.b16 %v3590
    %v3742 = vunpack.c.h.b16 %v3590
    %v3743 = vunpack.c.l.b16 %v3591
    %v3744 = vunpack.c.h.b16 %v3591
    %v3745 = vunpack.c.l.b16 %v3592
    %v3746 = vunpack.c.h.b16 %v3592
    %v3747 = vunpack.c.l.b16 %v3593
    %v3748 = vunpack.c.h.b16 %v3593
    %v3749 = vunpack.c.l.b16 %v3594
    %v3750 = vunpack.c.h.b16 %v3594
    %v3751 = vunpack.c.l.b16 %v3595
    %v3752 = vunpack.c.h.b16 %v3595
    %v3753 = vunpack.c.l.b16 %v3596
    %v3754 = vunpack.c.h.b16 %v3596
    %v3755 = vunpack.c.l.b16 %v3597
    %v3756 = vunpack.c.h.b16 %v3597
    %v3757 = vunpack.c.l.b16 %v3598
    %v3758 = vunpack.c.h.b16 %v3598
    %v3759 = vunpack.c.l.b16 %v3599
    %v3760 = vunpack.c.h.b16 %v3599
    %v3761 = vunpack.c.l.b16 %v3600
    %v3762 = vunpack.c.h.b16 %v3600
    %v3763 = vunpack.c.l.b16 %v3601
    %v3764 = vunpack.c.h.b16 %v3601
    %v3765 = vunpack.c.l.b16 %v3602
    %v3766 = vunpack.c.h.b16 %v3602
    %v3767 = vunpack.c.l.b16 %v3603
    %v3768 = vunpack.c.h.b16 %v3603
    %v3769 = vunpack.c.l.b16 %v3604
    %v3770 = vunpack.c.h.b16 %v3604
    %v3771 = vunpack.c.l.b16 %v3605
    %v3772 = vunpack.c.h.b16 %v3605
    %v3773 = vunpack.c.l.b16 %v3606
    %v3774 = vunpack.c.h.b16 %v3606
    %v3775 = vunpack.c.l.b16 %v3607
    %v3776 = vunpack.c.h.b16 %v3607
    %v3777 = vunpack.c.l.b16 %v3608
    %v3778 = vunpack.c.h.b16 %v3608
    %v3779 = vunpack.c.l.b16 %v3609
    %v3780 = vunpack.c.h.b16 %v3609
    %v3781 = vunpack.c.l.b16 %v3610
    %v3782 = vunpack.c.h.b16 %v3610
    %v3783 = vunpack.c.l.b16 %v3611
    %v3784 = vunpack.c.h.b16 %v3611
    %v3785 = vunpack.c.l.b16 %v3612
    %v3786 = vunpack.c.h.b16 %v3612
    %v3787 = vunpack.c.l.b16 %v3613
    %v3788 = vunpack.c.h.b16 %v3613
    %v3789 = vunpack.c.l.b16 %v3614
    %v3790 = vunpack.c.h.b16 %v3614
    %v3791 = vunpack.c.l.b16 %v3615
    %v3792 = vunpack.c.h.b16 %v3615
    %v3793 = vunpack.c.l.b16 %v3616
    %v3794 = vunpack.c.h.b16 %v3616
    %v3795 = vunpack.c.l.b16 %v3617
    %v3796 = vunpack.c.h.b16 %v3617
    %v3797 = vunpack.c.l.b16 %v3618
    %v3798 = vunpack.c.h.b16 %v3618
    %v3799 = vunpack.c.l.b16 %v3619
    %v3800 = vunpack.c.h.b16 %v3619
    %v3801 = vunpack.c.l.b16 %v3620
    %v3802 = vunpack.c.h.b16 %v3620
    %v3803 = vunpack.c.l.b16 %v3621
    %v3804 = vunpack.c.h.b16 %v3621
    %v3805 = vunpack.c.l.b16 %v3622
    %v3806 = vunpack.c.h.b16 %v3622
    %v3807 = vunpack.c.l.b16 %v3623
    %v3808 = vunpack.c.h.b16 %v3623
    %v3809 = vunpack.c.l.b16 %v3624
    %v3810 = vunpack.c.h.b16 %v3624
    %v3811 = vunpack.c.l.b16 %v3625
    %v3812 = vunpack.c.h.b16 %v3625
    %v3813 = vunpack.c.l.b16 %v3626
    %v3814 = vunpack.c.h.b16 %v3626
    %v3815 = vunpack.c.l.b16 %v3627
    %v3816 = vunpack.c.h.b16 %v3627
    %v3817 = vunpack.c.l.b16 %v3628
    %v3818 = vunpack.c.h.b16 %v3628
    %v3819 = vunpack.c.l.b16 %v3629
    %v3820 = vunpack.c.h.b16 %v3629
    %v3821 = vunpack.c.l.b16 %v3630
    %v3822 = vunpack.c.h.b16 %v3630
    %v3823 = vunpack.c.l.b16 %v3631
    %v3824 = vunpack.c.h.b16 %v3631
    %v3825 = vunpack.c.l.b16 %v3632
    %v3826 = vunpack.c.h.b16 %v3632
    %v3827 = vunpack.c.l.b16 %v3633
    %v3828 = vunpack.c.h.b16 %v3633
    %v3829 = vunpack.c.l.b16 %v3634
    %v3830 = vunpack.c.h.b16 %v3634
    %v3831 = vunpack.c.l.b16 %v3635
    %v3832 = vunpack.c.h.b16 %v3635
    %v3833 = vunpack.c.l.b16 %v3636
    %v3834 = vunpack.c.h.b16 %v3636
    %v3835 = vunpack.c.l.b16 %v3637
    %v3836 = vunpack.c.h.b16 %v3637
    %v3837 = vunpack.c.l.b16 %v3638
    %v3838 = vunpack.c.h.b16 %v3638
    %v3839 = vunpack.c.l.b16 %v3639
    %v3840 = vunpack.c.h.b16 %v3639
    %v3841 = vunpack.c.l.b16 %v3640
    %v3842 = vunpack.c.h.b16 %v3640
    %v3843 = vpack.c.b16 %v3719, %v3715
    %v3844 = vpack.c.b16 %v3720, %v3716
    %v3845 = vpack.c.b16 %v3721, %v3717
    %v3846 = vpack.c.b16 %v3722, %v3718
    %v3847 = vpack.c.b16 %v3727, %v3723
    %v3848 = vpack.c.b16 %v3728, %v3724
    %v3849 = vpack.c.b16 %v3729, %v3725
    %v3850 = vpack.c.b16 %v3730, %v3726
    %v3851 = vpack.c.b16 %v3735, %v3731
    %v3852 = vpack.c.b16 %v3736, %v3732
    %v3853 = vpack.c.b16 %v3737, %v3733
    %v3854 = vpack.c.b16 %v3738, %v3734
    %v3855 = vpack.c.b16 %v3743, %v3739
    %v3856 = vpack.c.b16 %v3744, %v3740
    %v3857 = vpack.c.b16 %v3745, %v3741
    %v3858 = vpack.c.b16 %v3746, %v3742
    %v3859 = vpack.c.b16 %v3751, %v3747
    %v3860 = vpack.c.b16 %v3752, %v3748
    %v3861 = vpack.c.b16 %v3753, %v3749
    %v3862 = vpack.c.b16 %v3754, %v3750
    %v3863 = vpack.c.b16 %v3759, %v3755
    %v3864 = vpack.c.b16 %v3760, %v3756
    %v3865 = vpack.c.b16 %v3761, %v3757
    %v3866 = vpack.c.b16 %v3762, %v3758
    %v3867 = vpack.c.b16 %v3767, %v3763
    %v3868 = vpack.c.b16 %v3768, %v3764
    %v3869 = vpack.c.b16 %v3769, %v3765
    %v3870 = vpack.c.b16 %v3770, %v3766
    %v3871 = vpack.c.b16 %v3775, %v3771
    %v3872 = vpack.c.b16 %v3776, %v3772
    %v3873 = vpack.c.b16 %v3777, %v3773
    %v3874 = vpack.c.b16 %v3778, %v3774
    %v3875 = vpack.c.b16 %v3783, %v3779
    %v3876 = vpack.c.b16 %v3784, %v3780
    %v3877 = vpack.c.b16 %v3785, %v3781
    %v3878 = vpack.c.b16 %v3786, %v3782
    %v3879 = vpack.c.b16 %v3791, %v3787
    %v3880 = vpack.c.b16 %v3792, %v3788
    %v3881 = vpack.c.b16 %v3793, %v3789
    %v3882 = vpack.c.b16 %v3794, %v3790
    %v3883 = vpack.c.b16 %v3799, %v3795
    %v3884 = vpack.c.b16 %v3800, %v3796
    %v3885 = vpack.c.b16 %v3801, %v3797
    %v3886 = vpack.c.b16 %v3802, %v3798
    %v3887 = vpack.c.b16 %v3807, %v3803
    %v3888 = vpack.c.b16 %v3808, %v3804
    %v3889 = vpack.c.b16 %v3809, %v3805
    %v3890 = vpack.c.b16 %v3810, %v3806
    %v3891 = vpack.c.b16 %v3815, %v3811
    %v3892 = vpack.c.b16 %v3816, %v3812
    %v3893 = vpack.c.b16 %v3817, %v3813
    %v3894 = vpack.c.b16 %v3818, %v3814
    %v3895 = vpack.c.b16 %v3823, %v3819
    %v3896 = vpack.c.b16 %v3824, %v3820
    %v3897 = vpack.c.b16 %v3825, %v3821
    %v3898 = vpack.c.b16 %v3826, %v3822
    %v3899 = vpack.c.b16 %v3831, %v3827
    %v3900 = vpack.c.b16 %v3832, %v3828
    %v3901 = vpack.c.b16 %v3833, %v3829
    %v3902 = vpack.c.b16 %v3834, %v3830
    %v3903 = vpack.c.b16 %v3839, %v3835
    %v3904 = vpack.c.b16 %v3840, %v3836
    %v3905 = vpack.c.b16 %v3841, %v3837
    %v3906 = vpack.c.b16 %v3842, %v3838
    %3971 = vmatpush.bf16.msra.mxu0 %v3871
    %3972 = vmatpush.bf16.msra.mxu0 %v3867
    %3973 = vmatpush.bf16.msra.mxu0 %v3863
    %3974 = vmatpush.bf16.msra.mxu0 %v3859
    %3975 = vmatpush.bf16.msra.mxu0 %v3855
    %3976 = vmatpush.bf16.msra.mxu0 %v3851
    %3977 = vmatpush.bf16.msra.mxu0 %v3847
    %3978 = vmatpush.bf16.msra.mxu0 %v3843
    %3979 = vmatmul.bf16.gmra.mxu0 %v3545
    %v3980 = vpop.f32.mrf.mxu0
    %v3981 = vadd.f32 %v3643, %v3980
    %v3982 = vpop.f32.mrf.mxu0
    %v3983 = vadd.f32 %v3643, %v3982
    %3984 = vmatmul.bf16.gmra.mxu0 %v3547
    %v3985 = vpop.f32.mrf.mxu0
    %v3986 = vadd.f32 %v3643, %v3985
    %v3987 = vpop.f32.mrf.mxu0
    %v3988 = vadd.f32 %v3643, %v3987
    %3989 = vmatmul.bf16.gmra.mxu0 %v3549
    %v3990 = vpop.f32.mrf.mxu0
    %v3991 = vadd.f32 %v3643, %v3990
    %v3992 = vpop.f32.mrf.mxu0
    %v3993 = vadd.f32 %v3643, %v3992
    %3994 = vmatmul.bf16.gmra.mxu0 %v3551
    %v3995 = vpop.f32.mrf.mxu0
    %v3996 = vadd.f32 %v3643, %v3995
    %v3997 = vpop.f32.mrf.mxu0
    %v3998 = vadd.f32 %v3643, %v3997
    %3999 = vmatmul.bf16.gmra.mxu0 %v3553
    %v4000 = vpop.f32.mrf.mxu0
    %v4001 = vadd.f32 %v3643, %v4000
    %v4002 = vpop.f32.mrf.mxu0
    %v4003 = vadd.f32 %v3643, %v4002
    %4004 = vmatmul.bf16.gmra.mxu0 %v3555
    %v4005 = vpop.f32.mrf.mxu0
    %v4006 = vadd.f32 %v3643, %v4005
    %v4007 = vpop.f32.mrf.mxu0
    %v4008 = vadd.f32 %v3643, %v4007
    %4009 = vmatmul.bf16.gmra.mxu0 %v3557
    %v4010 = vpop.f32.mrf.mxu0
    %v4011 = vadd.f32 %v3643, %v4010
    %v4012 = vpop.f32.mrf.mxu0
    %v4013 = vadd.f32 %v3643, %v4012
    %4014 = vmatmul.bf16.gmra.mxu0 %v3559
    %v4015 = vpop.f32.mrf.mxu0
    %v4016 = vadd.f32 %v3643, %v4015
    %v4017 = vpop.f32.mrf.mxu0
    %v4018 = vadd.f32 %v3643, %v4017
    %4019 = vmatmul.bf16.gmra.mxu0 %v3561
    %v4020 = vpop.f32.mrf.mxu0
    %v4021 = vadd.f32 %v3643, %v4020
    %v4022 = vpop.f32.mrf.mxu0
    %v4023 = vadd.f32 %v3643, %v4022
    %4024 = vmatmul.bf16.gmra.mxu0 %v3563
    %v4025 = vpop.f32.mrf.mxu0
    %v4026 = vadd.f32 %v3643, %v4025
    %v4027 = vpop.f32.mrf.mxu0
    %v4028 = vadd.f32 %v3643, %v4027
    %4029 = vmatmul.bf16.gmra.mxu0 %v3565
    %v4030 = vpop.f32.mrf.mxu0
    %v4031 = vadd.f32 %v3643, %v4030
    %v4032 = vpop.f32.mrf.mxu0
    %v4033 = vadd.f32 %v3643, %v4032
    %4034 = vmatmul.bf16.gmra.mxu0 %v3567
    %v4035 = vpop.f32.mrf.mxu0
    %v4036 = vadd.f32 %v3643, %v4035
    %v4037 = vpop.f32.mrf.mxu0
    %v4038 = vadd.f32 %v3643, %v4037
    %4039 = vmatmul.bf16.gmra.mxu0 %v3569
    %v4040 = vpop.f32.mrf.mxu0
    %v4041 = vadd.f32 %v3643, %v4040
    %v4042 = vpop.f32.mrf.mxu0
    %v4043 = vadd.f32 %v3643, %v4042
    %4044 = vmatmul.bf16.gmra.mxu0 %v3571
    %v4045 = vpop.f32.mrf.mxu0
    %v4046 = vadd.f32 %v3643, %v4045
    %v4047 = vpop.f32.mrf.mxu0
    %v4048 = vadd.f32 %v3643, %v4047
    %4049 = vmatmul.bf16.gmra.mxu0 %v3573
    %v4050 = vpop.f32.mrf.mxu0
    %v4051 = vadd.f32 %v3643, %v4050
    %v4052 = vpop.f32.mrf.mxu0
    %v4053 = vadd.f32 %v3643, %v4052
    %4054 = vmatmul.bf16.gmra.mxu0 %v3575
    %v4055 = vpop.f32.mrf.mxu0
    %v4056 = vadd.f32 %v3643, %v4055
    %v4057 = vpop.f32.mrf.mxu0
    %v4058 = vadd.f32 %v3643, %v4057
    %4059 = vdwg.mxu0
    %4060 = vmatpush.bf16.msra.mxu0 %v3903
    %4061 = vmatpush.bf16.msra.mxu0 %v3899
    %4062 = vmatpush.bf16.msra.mxu0 %v3895
    %4063 = vmatpush.bf16.msra.mxu0 %v3891
    %4064 = vmatpush.bf16.msra.mxu0 %v3887
    %4065 = vmatpush.bf16.msra.mxu0 %v3883
    %4066 = vmatpush.bf16.msra.mxu0 %v3879
    %4067 = vmatpush.bf16.msra.mxu0 %v3875
    %4068 = vmatmul.bf16.gmra.mxu0 %v3546
    %v4069 = vpop.f32.mrf.mxu0
    %v4070 = vadd.f32 %v3981, %v4069
    %v4071 = vpop.f32.mrf.mxu0
    %v4072 = vadd.f32 %v3983, %v4071
    %4073 = vmatmul.bf16.gmra.mxu0 %v3548
    %v4074 = vpop.f32.mrf.mxu0
    %v4075 = vadd.f32 %v3986, %v4074
    %v4076 = vpop.f32.mrf.mxu0
    %v4077 = vadd.f32 %v3988, %v4076
    %4078 = vmatmul.bf16.gmra.mxu0 %v3550
    %v4079 = vpop.f32.mrf.mxu0
    %v4080 = vadd.f32 %v3991, %v4079
    %v4081 = vpop.f32.mrf.mxu0
    %v4082 = vadd.f32 %v3993, %v4081
    %4083 = vmatmul.bf16.gmra.mxu0 %v3552
    %v4084 = vpop.f32.mrf.mxu0
    %v4085 = vadd.f32 %v3996, %v4084
    %v4086 = vpop.f32.mrf.mxu0
    %v4087 = vadd.f32 %v3998, %v4086
    %4088 = vmatmul.bf16.gmra.mxu0 %v3554
    %v4089 = vpop.f32.mrf.mxu0
    %v4090 = vadd.f32 %v4001, %v4089
    %v4091 = vpop.f32.mrf.mxu0
    %v4092 = vadd.f32 %v4003, %v4091
    %4093 = vmatmul.bf16.gmra.mxu0 %v3556
    %v4094 = vpop.f32.mrf.mxu0
    %v4095 = vadd.f32 %v4006, %v4094
    %v4096 = vpop.f32.mrf.mxu0
    %v4097 = vadd.f32 %v4008, %v4096
    %4098 = vmatmul.bf16.gmra.mxu0 %v3558
    %v4099 = vpop.f32.mrf.mxu0
    %v4100 = vadd.f32 %v4011, %v4099
    %v4101 = vpop.f32.mrf.mxu0
    %v4102 = vadd.f32 %v4013, %v4101
    %4103 = vmatmul.bf16.gmra.mxu0 %v3560
    %v4104 = vpop.f32.mrf.mxu0
    %v4105 = vadd.f32 %v4016, %v4104
    %v4106 = vpop.f32.mrf.mxu0
    %v4107 = vadd.f32 %v4018, %v4106
    %4108 = vmatmul.bf16.gmra.mxu0 %v3562
    %v4109 = vpop.f32.mrf.mxu0
    %v4110 = vadd.f32 %v4021, %v4109
    %v4111 = vpop.f32.mrf.mxu0
    %v4112 = vadd.f32 %v4023, %v4111
    %4113 = vmatmul.bf16.gmra.mxu0 %v3564
    %v4114 = vpop.f32.mrf.mxu0
    %v4115 = vadd.f32 %v4026, %v4114
    %v4116 = vpop.f32.mrf.mxu0
    %v4117 = vadd.f32 %v4028, %v4116
    %4118 = vmatmul.bf16.gmra.mxu0 %v3566
    %v4119 = vpop.f32.mrf.mxu0
    %v4120 = vadd.f32 %v4031, %v4119
    %v4121 = vpop.f32.mrf.mxu0
    %v4122 = vadd.f32 %v4033, %v4121
    %4123 = vmatmul.bf16.gmra.mxu0 %v3568
    %v4124 = vpop.f32.mrf.mxu0
    %v4125 = vadd.f32 %v4036, %v4124
    %v4126 = vpop.f32.mrf.mxu0
    %v4127 = vadd.f32 %v4038, %v4126
    %4128 = vmatmul.bf16.gmra.mxu0 %v3570
    %v4129 = vpop.f32.mrf.mxu0
    %v4130 = vadd.f32 %v4041, %v4129
    %v4131 = vpop.f32.mrf.mxu0
    %v4132 = vadd.f32 %v4043, %v4131
    %4133 = vmatmul.bf16.gmra.mxu0 %v3572
    %v4134 = vpop.f32.mrf.mxu0
    %v4135 = vadd.f32 %v4046, %v4134
    %v4136 = vpop.f32.mrf.mxu0
    %v4137 = vadd.f32 %v4048, %v4136
    %4138 = vmatmul.bf16.gmra.mxu0 %v3574
    %v4139 = vpop.f32.mrf.mxu0
    %v4140 = vadd.f32 %v4051, %v4139
    %v4141 = vpop.f32.mrf.mxu0
    %v4142 = vadd.f32 %v4053, %v4141
    %4143 = vmatmul.bf16.gmra.mxu0 %v3576
    %v4144 = vpop.f32.mrf.mxu0
    %v4145 = vadd.f32 %v4056, %v4144
    %v4146 = vpop.f32.mrf.mxu0
    %v4147 = vadd.f32 %v4058, %v4146
    %4148 = vdwg.mxu0
    %4149 = vmatpush.bf16.msra.mxu0 %v3872
    %4150 = vmatpush.bf16.msra.mxu0 %v3868
    %4151 = vmatpush.bf16.msra.mxu0 %v3864
    %4152 = vmatpush.bf16.msra.mxu0 %v3860
    %4153 = vmatpush.bf16.msra.mxu0 %v3856
    %4154 = vmatpush.bf16.msra.mxu0 %v3852
    %4155 = vmatpush.bf16.msra.mxu0 %v3848
    %4156 = vmatpush.bf16.msra.mxu0 %v3844
    %4157 = vmatmul.bf16.gmra.mxu0 %v3545
    %v4158 = vpop.f32.mrf.mxu0
    %v4159 = vadd.f32 %v3644, %v4158
    %v4160 = vpop.f32.mrf.mxu0
    %v4161 = vadd.f32 %v3644, %v4160
    %4162 = vmatmul.bf16.gmra.mxu0 %v3547
    %v4163 = vpop.f32.mrf.mxu0
    %v4164 = vadd.f32 %v3644, %v4163
    %v4165 = vpop.f32.mrf.mxu0
    %v4166 = vadd.f32 %v3644, %v4165
    %4167 = vmatmul.bf16.gmra.mxu0 %v3549
    %v4168 = vpop.f32.mrf.mxu0
    %v4169 = vadd.f32 %v3644, %v4168
    %v4170 = vpop.f32.mrf.mxu0
    %v4171 = vadd.f32 %v3644, %v4170
    %4172 = vmatmul.bf16.gmra.mxu0 %v3551
    %v4173 = vpop.f32.mrf.mxu0
    %v4174 = vadd.f32 %v3644, %v4173
    %v4175 = vpop.f32.mrf.mxu0
    %v4176 = vadd.f32 %v3644, %v4175
    %4177 = vmatmul.bf16.gmra.mxu0 %v3553
    %v4178 = vpop.f32.mrf.mxu0
    %v4179 = vadd.f32 %v3644, %v4178
    %v4180 = vpop.f32.mrf.mxu0
    %v4181 = vadd.f32 %v3644, %v4180
    %4182 = vmatmul.bf16.gmra.mxu0 %v3555
    %v4183 = vpop.f32.mrf.mxu0
    %v4184 = vadd.f32 %v3644, %v4183
    %v4185 = vpop.f32.mrf.mxu0
    %v4186 = vadd.f32 %v3644, %v4185
    %4187 = vmatmul.bf16.gmra.mxu0 %v3557
    %v4188 = vpop.f32.mrf.mxu0
    %v4189 = vadd.f32 %v3644, %v4188
    %v4190 = vpop.f32.mrf.mxu0
    %v4191 = vadd.f32 %v3644, %v4190
    %4192 = vmatmul.bf16.gmra.mxu0 %v3559
    %v4193 = vpop.f32.mrf.mxu0
    %v4194 = vadd.f32 %v3644, %v4193
    %v4195 = vpop.f32.mrf.mxu0
    %v4196 = vadd.f32 %v3644, %v4195
    %4197 = vmatmul.bf16.gmra.mxu0 %v3561
    %v4198 = vpop.f32.mrf.mxu0
    %v4199 = vadd.f32 %v3644, %v4198
    %v4200 = vpop.f32.mrf.mxu0
    %v4201 = vadd.f32 %v3644, %v4200
    %4202 = vmatmul.bf16.gmra.mxu0 %v3563
    %v4203 = vpop.f32.mrf.mxu0
    %v4204 = vadd.f32 %v3644, %v4203
    %v4205 = vpop.f32.mrf.mxu0
    %v4206 = vadd.f32 %v3644, %v4205
    %4207 = vmatmul.bf16.gmra.mxu0 %v3565
    %v4208 = vpop.f32.mrf.mxu0
    %v4209 = vadd.f32 %v3644, %v4208
    %v4210 = vpop.f32.mrf.mxu0
    %v4211 = vadd.f32 %v3644, %v4210
    %4212 = vmatmul.bf16.gmra.mxu0 %v3567
    %v4213 = vpop.f32.mrf.mxu0
    %v4214 = vadd.f32 %v3644, %v4213
    %v4215 = vpop.f32.mrf.mxu0
    %v4216 = vadd.f32 %v3644, %v4215
    %4217 = vmatmul.bf16.gmra.mxu0 %v3569
    %v4218 = vpop.f32.mrf.mxu0
    %v4219 = vadd.f32 %v3644, %v4218
    %v4220 = vpop.f32.mrf.mxu0
    %v4221 = vadd.f32 %v3644, %v4220
    %4222 = vmatmul.bf16.gmra.mxu0 %v3571
    %v4223 = vpop.f32.mrf.mxu0
    %v4224 = vadd.f32 %v3644, %v4223
    %v4225 = vpop.f32.mrf.mxu0
    %v4226 = vadd.f32 %v3644, %v4225
    %4227 = vmatmul.bf16.gmra.mxu0 %v3573
    %v4228 = vpop.f32.mrf.mxu0
    %v4229 = vadd.f32 %v3644, %v4228
    %v4230 = vpop.f32.mrf.mxu0
    %v4231 = vadd.f32 %v3644, %v4230
    %4232 = vmatmul.bf16.gmra.mxu0 %v3575
    %v4233 = vpop.f32.mrf.mxu0
    %v4234 = vadd.f32 %v3644, %v4233
    %v4235 = vpop.f32.mrf.mxu0
    %v4236 = vadd.f32 %v3644, %v4235
    %4237 = vdwg.mxu0
    %4238 = vmatpush.bf16.msra.mxu0 %v3904
    %4239 = vmatpush.bf16.msra.mxu0 %v3900
    %4240 = vmatpush.bf16.msra.mxu0 %v3896
    %4241 = vmatpush.bf16.msra.mxu0 %v3892
    %4242 = vmatpush.bf16.msra.mxu0 %v3888
    %4243 = vmatpush.bf16.msra.mxu0 %v3884
    %4244 = vmatpush.bf16.msra.mxu0 %v3880
    %4245 = vmatpush.bf16.msra.mxu0 %v3876
    %4246 = vmatmul.bf16.gmra.mxu0 %v3546
    %v4247 = vpop.f32.mrf.mxu0
    %v4248 = vadd.f32 %v4159, %v4247
    %v4249 = vpop.f32.mrf.mxu0
    %v4250 = vadd.f32 %v4161, %v4249
    %4251 = vmatmul.bf16.gmra.mxu0 %v3548
    %v4252 = vpop.f32.mrf.mxu0
    %v4253 = vadd.f32 %v4164, %v4252
    %v4254 = vpop.f32.mrf.mxu0
    %v4255 = vadd.f32 %v4166, %v4254
    %4256 = vmatmul.bf16.gmra.mxu0 %v3550
    %v4257 = vpop.f32.mrf.mxu0
    %v4258 = vadd.f32 %v4169, %v4257
    %v4259 = vpop.f32.mrf.mxu0
    %v4260 = vadd.f32 %v4171, %v4259
    %4261 = vmatmul.bf16.gmra.mxu0 %v3552
    %v4262 = vpop.f32.mrf.mxu0
    %v4263 = vadd.f32 %v4174, %v4262
    %v4264 = vpop.f32.mrf.mxu0
    %v4265 = vadd.f32 %v4176, %v4264
    %4266 = vmatmul.bf16.gmra.mxu0 %v3554
    %v4267 = vpop.f32.mrf.mxu0
    %v4268 = vadd.f32 %v4179, %v4267
    %v4269 = vpop.f32.mrf.mxu0
    %v4270 = vadd.f32 %v4181, %v4269
    %4271 = vmatmul.bf16.gmra.mxu0 %v3556
    %v4272 = vpop.f32.mrf.mxu0
    %v4273 = vadd.f32 %v4184, %v4272
    %v4274 = vpop.f32.mrf.mxu0
    %v4275 = vadd.f32 %v4186, %v4274
    %4276 = vmatmul.bf16.gmra.mxu0 %v3558
    %v4277 = vpop.f32.mrf.mxu0
    %v4278 = vadd.f32 %v4189, %v4277
    %v4279 = vpop.f32.mrf.mxu0
    %v4280 = vadd.f32 %v4191, %v4279
    %4281 = vmatmul.bf16.gmra.mxu0 %v3560
    %v4282 = vpop.f32.mrf.mxu0
    %v4283 = vadd.f32 %v4194, %v4282
    %v4284 = vpop.f32.mrf.mxu0
    %v4285 = vadd.f32 %v4196, %v4284
    %4286 = vmatmul.bf16.gmra.mxu0 %v3562
    %v4287 = vpop.f32.mrf.mxu0
    %v4288 = vadd.f32 %v4199, %v4287
    %v4289 = vpop.f32.mrf.mxu0
    %v4290 = vadd.f32 %v4201, %v4289
    %4291 = vmatmul.bf16.gmra.mxu0 %v3564
    %v4292 = vpop.f32.mrf.mxu0
    %v4293 = vadd.f32 %v4204, %v4292
    %v4294 = vpop.f32.mrf.mxu0
    %v4295 = vadd.f32 %v4206, %v4294
    %4296 = vmatmul.bf16.gmra.mxu0 %v3566
    %v4297 = vpop.f32.mrf.mxu0
    %v4298 = vadd.f32 %v4209, %v4297
    %v4299 = vpop.f32.mrf.mxu0
    %v4300 = vadd.f32 %v4211, %v4299
    %4301 = vmatmul.bf16.gmra.mxu0 %v3568
    %v4302 = vpop.f32.mrf.mxu0
    %v4303 = vadd.f32 %v4214, %v4302
    %v4304 = vpop.f32.mrf.mxu0
    %v4305 = vadd.f32 %v4216, %v4304
    %4306 = vmatmul.bf16.gmra.mxu0 %v3570
    %v4307 = vpop.f32.mrf.mxu0
    %v4308 = vadd.f32 %v4219, %v4307
    %v4309 = vpop.f32.mrf.mxu0
    %v4310 = vadd.f32 %v4221, %v4309
    %4311 = vmatmul.bf16.gmra.mxu0 %v3572
    %v4312 = vpop.f32.mrf.mxu0
    %v4313 = vadd.f32 %v4224, %v4312
    %v4314 = vpop.f32.mrf.mxu0
    %v4315 = vadd.f32 %v4226, %v4314
    %4316 = vmatmul.bf16.gmra.mxu0 %v3574
    %v4317 = vpop.f32.mrf.mxu0
    %v4318 = vadd.f32 %v4229, %v4317
    %v4319 = vpop.f32.mrf.mxu0
    %v4320 = vadd.f32 %v4231, %v4319
    %4321 = vmatmul.bf16.gmra.mxu0 %v3576
    %v4322 = vpop.f32.mrf.mxu0
    %v4323 = vadd.f32 %v4234, %v4322
    %v4324 = vpop.f32.mrf.mxu0
    %v4325 = vadd.f32 %v4236, %v4324
    %4326 = vdwg.mxu0
    %4327 = vmatpush.bf16.msra.mxu0 %v3873
    %4328 = vmatpush.bf16.msra.mxu0 %v3869
    %4329 = vmatpush.bf16.msra.mxu0 %v3865
    %4330 = vmatpush.bf16.msra.mxu0 %v3861
    %4331 = vmatpush.bf16.msra.mxu0 %v3857
    %4332 = vmatpush.bf16.msra.mxu0 %v3853
    %4333 = vmatpush.bf16.msra.mxu0 %v3849
    %4334 = vmatpush.bf16.msra.mxu0 %v3845
    %4335 = vmatmul.bf16.gmra.mxu0 %v3545
    %v4336 = vpop.f32.mrf.mxu0
    %v4337 = vadd.f32 %v3645, %v4336
    %v4338 = vpop.f32.mrf.mxu0
    %v4339 = vadd.f32 %v3645, %v4338
    %4340 = vmatmul.bf16.gmra.mxu0 %v3547
    %v4341 = vpop.f32.mrf.mxu0
    %v4342 = vadd.f32 %v3645, %v4341
    %v4343 = vpop.f32.mrf.mxu0
    %v4344 = vadd.f32 %v3645, %v4343
    %4345 = vmatmul.bf16.gmra.mxu0 %v3549
    %v4346 = vpop.f32.mrf.mxu0
    %v4347 = vadd.f32 %v3645, %v4346
    %v4348 = vpop.f32.mrf.mxu0
    %v4349 = vadd.f32 %v3645, %v4348
    %4350 = vmatmul.bf16.gmra.mxu0 %v3551
    %v4351 = vpop.f32.mrf.mxu0
    %v4352 = vadd.f32 %v3645, %v4351
    %v4353 = vpop.f32.mrf.mxu0
    %v4354 = vadd.f32 %v3645, %v4353
    %4355 = vmatmul.bf16.gmra.mxu0 %v3553
    %v4356 = vpop.f32.mrf.mxu0
    %v4357 = vadd.f32 %v3645, %v4356
    %v4358 = vpop.f32.mrf.mxu0
    %v4359 = vadd.f32 %v3645, %v4358
    %4360 = vmatmul.bf16.gmra.mxu0 %v3555
    %v4361 = vpop.f32.mrf.mxu0
    %v4362 = vadd.f32 %v3645, %v4361
    %v4363 = vpop.f32.mrf.mxu0
    %v4364 = vadd.f32 %v3645, %v4363
    %4365 = vmatmul.bf16.gmra.mxu0 %v3557
    %v4366 = vpop.f32.mrf.mxu0
    %v4367 = vadd.f32 %v3645, %v4366
    %v4368 = vpop.f32.mrf.mxu0
    %v4369 = vadd.f32 %v3645, %v4368
    %4370 = vmatmul.bf16.gmra.mxu0 %v3559
    %v4371 = vpop.f32.mrf.mxu0
    %v4372 = vadd.f32 %v3645, %v4371
    %v4373 = vpop.f32.mrf.mxu0
    %v4374 = vadd.f32 %v3645, %v4373
    %4375 = vmatmul.bf16.gmra.mxu0 %v3561
    %v4376 = vpop.f32.mrf.mxu0
    %v4377 = vadd.f32 %v3645, %v4376
    %v4378 = vpop.f32.mrf.mxu0
    %v4379 = vadd.f32 %v3645, %v4378
    %4380 = vmatmul.bf16.gmra.mxu0 %v3563
    %v4381 = vpop.f32.mrf.mxu0
    %v4382 = vadd.f32 %v3645, %v4381
    %v4383 = vpop.f32.mrf.mxu0
    %v4384 = vadd.f32 %v3645, %v4383
    %4385 = vmatmul.bf16.gmra.mxu0 %v3565
    %v4386 = vpop.f32.mrf.mxu0
    %v4387 = vadd.f32 %v3645, %v4386
    %v4388 = vpop.f32.mrf.mxu0
    %v4389 = vadd.f32 %v3645, %v4388
    %4390 = vmatmul.bf16.gmra.mxu0 %v3567
    %v4391 = vpop.f32.mrf.mxu0
    %v4392 = vadd.f32 %v3645, %v4391
    %v4393 = vpop.f32.mrf.mxu0
    %v4394 = vadd.f32 %v3645, %v4393
    %4395 = vmatmul.bf16.gmra.mxu0 %v3569
    %v4396 = vpop.f32.mrf.mxu0
    %v4397 = vadd.f32 %v3645, %v4396
    %v4398 = vpop.f32.mrf.mxu0
    %v4399 = vadd.f32 %v3645, %v4398
    %4400 = vmatmul.bf16.gmra.mxu0 %v3571
    %v4401 = vpop.f32.mrf.mxu0
    %v4402 = vadd.f32 %v3645, %v4401
    %v4403 = vpop.f32.mrf.mxu0
    %v4404 = vadd.f32 %v3645, %v4403
    %4405 = vmatmul.bf16.gmra.mxu0 %v3573
    %v4406 = vpop.f32.mrf.mxu0
    %v4407 = vadd.f32 %v3645, %v4406
    %v4408 = vpop.f32.mrf.mxu0
    %v4409 = vadd.f32 %v3645, %v4408
    %4410 = vmatmul.bf16.gmra.mxu0 %v3575
    %v4411 = vpop.f32.mrf.mxu0
    %v4412 = vadd.f32 %v3645, %v4411
    %v4413 = vpop.f32.mrf.mxu0
    %v4414 = vadd.f32 %v3645, %v4413
    %4415 = vdwg.mxu0
    %4416 = vmatpush.bf16.msra.mxu0 %v3905
    %4417 = vmatpush.bf16.msra.mxu0 %v3901
    %4418 = vmatpush.bf16.msra.mxu0 %v3897
    %4419 = vmatpush.bf16.msra.mxu0 %v3893
    %4420 = vmatpush.bf16.msra.mxu0 %v3889
    %4421 = vmatpush.bf16.msra.mxu0 %v3885
    %4422 = vmatpush.bf16.msra.mxu0 %v3881
    %4423 = vmatpush.bf16.msra.mxu0 %v3877
    %4424 = vmatmul.bf16.gmra.mxu0 %v3546
    %v4425 = vpop.f32.mrf.mxu0
    %v4426 = vadd.f32 %v4337, %v4425
    %v4427 = vpop.f32.mrf.mxu0
    %v4428 = vadd.f32 %v4339, %v4427
    %4429 = vmatmul.bf16.gmra.mxu0 %v3548
    %v4430 = vpop.f32.mrf.mxu0
    %v4431 = vadd.f32 %v4342, %v4430
    %v4432 = vpop.f32.mrf.mxu0
    %v4433 = vadd.f32 %v4344, %v4432
    %4434 = vmatmul.bf16.gmra.mxu0 %v3550
    %v4435 = vpop.f32.mrf.mxu0
    %v4436 = vadd.f32 %v4347, %v4435
    %v4437 = vpop.f32.mrf.mxu0
    %v4438 = vadd.f32 %v4349, %v4437
    %4439 = vmatmul.bf16.gmra.mxu0 %v3552
    %v4440 = vpop.f32.mrf.mxu0
    %v4441 = vadd.f32 %v4352, %v4440
    %v4442 = vpop.f32.mrf.mxu0
    %v4443 = vadd.f32 %v4354, %v4442
    %4444 = vmatmul.bf16.gmra.mxu0 %v3554
    %v4445 = vpop.f32.mrf.mxu0
    %v4446 = vadd.f32 %v4357, %v4445
    %v4447 = vpop.f32.mrf.mxu0
    %v4448 = vadd.f32 %v4359, %v4447
    %4449 = vmatmul.bf16.gmra.mxu0 %v3556
    %v4450 = vpop.f32.mrf.mxu0
    %v4451 = vadd.f32 %v4362, %v4450
    %v4452 = vpop.f32.mrf.mxu0
    %v4453 = vadd.f32 %v4364, %v4452
    %4454 = vmatmul.bf16.gmra.mxu0 %v3558
    %v4455 = vpop.f32.mrf.mxu0
    %v4456 = vadd.f32 %v4367, %v4455
    %v4457 = vpop.f32.mrf.mxu0
    %v4458 = vadd.f32 %v4369, %v4457
    %4459 = vmatmul.bf16.gmra.mxu0 %v3560
    %v4460 = vpop.f32.mrf.mxu0
    %v4461 = vadd.f32 %v4372, %v4460
    %v4462 = vpop.f32.mrf.mxu0
    %v4463 = vadd.f32 %v4374, %v4462
    %4464 = vmatmul.bf16.gmra.mxu0 %v3562
    %v4465 = vpop.f32.mrf.mxu0
    %v4466 = vadd.f32 %v4377, %v4465
    %v4467 = vpop.f32.mrf.mxu0
    %v4468 = vadd.f32 %v4379, %v4467
    %4469 = vmatmul.bf16.gmra.mxu0 %v3564
    %v4470 = vpop.f32.mrf.mxu0
    %v4471 = vadd.f32 %v4382, %v4470
    %v4472 = vpop.f32.mrf.mxu0
    %v4473 = vadd.f32 %v4384, %v4472
    %4474 = vmatmul.bf16.gmra.mxu0 %v3566
    %v4475 = vpop.f32.mrf.mxu0
    %v4476 = vadd.f32 %v4387, %v4475
    %v4477 = vpop.f32.mrf.mxu0
    %v4478 = vadd.f32 %v4389, %v4477
    %4479 = vmatmul.bf16.gmra.mxu0 %v3568
    %v4480 = vpop.f32.mrf.mxu0
    %v4481 = vadd.f32 %v4392, %v4480
    %v4482 = vpop.f32.mrf.mxu0
    %v4483 = vadd.f32 %v4394, %v4482
    %4484 = vmatmul.bf16.gmra.mxu0 %v3570
    %v4485 = vpop.f32.mrf.mxu0
    %v4486 = vadd.f32 %v4397, %v4485
    %v4487 = vpop.f32.mrf.mxu0
    %v4488 = vadd.f32 %v4399, %v4487
    %4489 = vmatmul.bf16.gmra.mxu0 %v3572
    %v4490 = vpop.f32.mrf.mxu0
    %v4491 = vadd.f32 %v4402, %v4490
    %v4492 = vpop.f32.mrf.mxu0
    %v4493 = vadd.f32 %v4404, %v4492
    %4494 = vmatmul.bf16.gmra.mxu0 %v3574
    %v4495 = vpop.f32.mrf.mxu0
    %v4496 = vadd.f32 %v4407, %v4495
    %v4497 = vpop.f32.mrf.mxu0
    %v4498 = vadd.f32 %v4409, %v4497
    %4499 = vmatmul.bf16.gmra.mxu0 %v3576
    %v4500 = vpop.f32.mrf.mxu0
    %v4501 = vadd.f32 %v4412, %v4500
    %v4502 = vpop.f32.mrf.mxu0
    %v4503 = vadd.f32 %v4414, %v4502
    %4504 = vdwg.mxu0
    %4505 = vmatpush.bf16.msra.mxu0 %v3874
    %4506 = vmatpush.bf16.msra.mxu0 %v3870
    %4507 = vmatpush.bf16.msra.mxu0 %v3866
    %4508 = vmatpush.bf16.msra.mxu0 %v3862
    %4509 = vmatpush.bf16.msra.mxu0 %v3858
    %4510 = vmatpush.bf16.msra.mxu0 %v3854
    %4511 = vmatpush.bf16.msra.mxu0 %v3850
    %4512 = vmatpush.bf16.msra.mxu0 %v3846
    %4513 = vmatmul.bf16.gmra.mxu0 %v3545
    %v4514 = vpop.f32.mrf.mxu0
    %v4515 = vadd.f32 %v3646, %v4514
    %v4516 = vpop.f32.mrf.mxu0
    %v4517 = vadd.f32 %v3646, %v4516
    %4518 = vmatmul.bf16.gmra.mxu0 %v3547
    %v4519 = vpop.f32.mrf.mxu0
    %v4520 = vadd.f32 %v3646, %v4519
    %v4521 = vpop.f32.mrf.mxu0
    %v4522 = vadd.f32 %v3646, %v4521
    %4523 = vmatmul.bf16.gmra.mxu0 %v3549
    %v4524 = vpop.f32.mrf.mxu0
    %v4525 = vadd.f32 %v3646, %v4524
    %v4526 = vpop.f32.mrf.mxu0
    %v4527 = vadd.f32 %v3646, %v4526
    %4528 = vmatmul.bf16.gmra.mxu0 %v3551
    %v4529 = vpop.f32.mrf.mxu0
    %v4530 = vadd.f32 %v3646, %v4529
    %v4531 = vpop.f32.mrf.mxu0
    %v4532 = vadd.f32 %v3646, %v4531
    %4533 = vmatmul.bf16.gmra.mxu0 %v3553
    %v4534 = vpop.f32.mrf.mxu0
    %v4535 = vadd.f32 %v3646, %v4534
    %v4536 = vpop.f32.mrf.mxu0
    %v4537 = vadd.f32 %v3646, %v4536
    %4538 = vmatmul.bf16.gmra.mxu0 %v3555
    %v4539 = vpop.f32.mrf.mxu0
    %v4540 = vadd.f32 %v3646, %v4539
    %v4541 = vpop.f32.mrf.mxu0
    %v4542 = vadd.f32 %v3646, %v4541
    %4543 = vmatmul.bf16.gmra.mxu0 %v3557
    %v4544 = vpop.f32.mrf.mxu0
    %v4545 = vadd.f32 %v3646, %v4544
    %v4546 = vpop.f32.mrf.mxu0
    %v4547 = vadd.f32 %v3646, %v4546
    %4548 = vmatmul.bf16.gmra.mxu0 %v3559
    %v4549 = vpop.f32.mrf.mxu0
    %v4550 = vadd.f32 %v3646, %v4549
    %v4551 = vpop.f32.mrf.mxu0
    %v4552 = vadd.f32 %v3646, %v4551
    %4553 = vmatmul.bf16.gmra.mxu0 %v3561
    %v4554 = vpop.f32.mrf.mxu0
    %v4555 = vadd.f32 %v3646, %v4554
    %v4556 = vpop.f32.mrf.mxu0
    %v4557 = vadd.f32 %v3646, %v4556
    %4558 = vmatmul.bf16.gmra.mxu0 %v3563
    %v4559 = vpop.f32.mrf.mxu0
    %v4560 = vadd.f32 %v3646, %v4559
    %v4561 = vpop.f32.mrf.mxu0
    %v4562 = vadd.f32 %v3646, %v4561
    %4563 = vmatmul.bf16.gmra.mxu0 %v3565
    %v4564 = vpop.f32.mrf.mxu0
    %v4565 = vadd.f32 %v3646, %v4564
    %v4566 = vpop.f32.mrf.mxu0
    %v4567 = vadd.f32 %v3646, %v4566
    %4568 = vmatmul.bf16.gmra.mxu0 %v3567
    %v4569 = vpop.f32.mrf.mxu0
    %v4570 = vadd.f32 %v3646, %v4569
    %v4571 = vpop.f32.mrf.mxu0
    %v4572 = vadd.f32 %v3646, %v4571
    %4573 = vmatmul.bf16.gmra.mxu0 %v3569
    %v4574 = vpop.f32.mrf.mxu0
    %v4575 = vadd.f32 %v3646, %v4574
    %v4576 = vpop.f32.mrf.mxu0
    %v4577 = vadd.f32 %v3646, %v4576
    %4578 = vmatmul.bf16.gmra.mxu0 %v3571
    %v4579 = vpop.f32.mrf.mxu0
    %v4580 = vadd.f32 %v3646, %v4579
    %v4581 = vpop.f32.mrf.mxu0
    %v4582 = vadd.f32 %v3646, %v4581
    %4583 = vmatmul.bf16.gmra.mxu0 %v3573
    %v4584 = vpop.f32.mrf.mxu0
    %v4585 = vadd.f32 %v3646, %v4584
    %v4586 = vpop.f32.mrf.mxu0
    %v4587 = vadd.f32 %v3646, %v4586
    %4588 = vmatmul.bf16.gmra.mxu0 %v3575
    %v4589 = vpop.f32.mrf.mxu0
    %v4590 = vadd.f32 %v3646, %v4589
    %v4591 = vpop.f32.mrf.mxu0
    %v4592 = vadd.f32 %v3646, %v4591
    %4593 = vdwg.mxu0
    %4594 = vmatpush.bf16.msra.mxu0 %v3906
    %4595 = vmatpush.bf16.msra.mxu0 %v3902
    %4596 = vmatpush.bf16.msra.mxu0 %v3898
    %4597 = vmatpush.bf16.msra.mxu0 %v3894
    %4598 = vmatpush.bf16.msra.mxu0 %v3890
    %4599 = vmatpush.bf16.msra.mxu0 %v3886
    %4600 = vmatpush.bf16.msra.mxu0 %v3882
    %4601 = vmatpush.bf16.msra.mxu0 %v3878
    %4602 = vmatmul.bf16.gmra.mxu0 %v3546
    %v4603 = vpop.f32.mrf.mxu0
    %v4604 = vadd.f32 %v4515, %v4603
    %v4605 = vpop.f32.mrf.mxu0
    %v4606 = vadd.f32 %v4517, %v4605
    %4607 = vmatmul.bf16.gmra.mxu0 %v3548
    %v4608 = vpop.f32.mrf.mxu0
    %v4609 = vadd.f32 %v4520, %v4608
    %v4610 = vpop.f32.mrf.mxu0
    %v4611 = vadd.f32 %v4522, %v4610
    %4612 = vmatmul.bf16.gmra.mxu0 %v3550
    %v4613 = vpop.f32.mrf.mxu0
    %v4614 = vadd.f32 %v4525, %v4613
    %v4615 = vpop.f32.mrf.mxu0
    %v4616 = vadd.f32 %v4527, %v4615
    %4617 = vmatmul.bf16.gmra.mxu0 %v3552
    %v4618 = vpop.f32.mrf.mxu0
    %v4619 = vadd.f32 %v4530, %v4618
    %v4620 = vpop.f32.mrf.mxu0
    %v4621 = vadd.f32 %v4532, %v4620
    %4622 = vmatmul.bf16.gmra.mxu0 %v3554
    %v4623 = vpop.f32.mrf.mxu0
    %v4624 = vadd.f32 %v4535, %v4623
    %v4625 = vpop.f32.mrf.mxu0
    %v4626 = vadd.f32 %v4537, %v4625
    %4627 = vmatmul.bf16.gmra.mxu0 %v3556
    %v4628 = vpop.f32.mrf.mxu0
    %v4629 = vadd.f32 %v4540, %v4628
    %v4630 = vpop.f32.mrf.mxu0
    %v4631 = vadd.f32 %v4542, %v4630
    %4632 = vmatmul.bf16.gmra.mxu0 %v3558
    %v4633 = vpop.f32.mrf.mxu0
    %v4634 = vadd.f32 %v4545, %v4633
    %v4635 = vpop.f32.mrf.mxu0
    %v4636 = vadd.f32 %v4547, %v4635
    %4637 = vmatmul.bf16.gmra.mxu0 %v3560
    %v4638 = vpop.f32.mrf.mxu0
    %v4639 = vadd.f32 %v4550, %v4638
    %v4640 = vpop.f32.mrf.mxu0
    %v4641 = vadd.f32 %v4552, %v4640
    %4642 = vmatmul.bf16.gmra.mxu0 %v3562
    %v4643 = vpop.f32.mrf.mxu0
    %v4644 = vadd.f32 %v4555, %v4643
    %v4645 = vpop.f32.mrf.mxu0
    %v4646 = vadd.f32 %v4557, %v4645
    %4647 = vmatmul.bf16.gmra.mxu0 %v3564
    %v4648 = vpop.f32.mrf.mxu0
    %v4649 = vadd.f32 %v4560, %v4648
    %v4650 = vpop.f32.mrf.mxu0
    %v4651 = vadd.f32 %v4562, %v4650
    %4652 = vmatmul.bf16.gmra.mxu0 %v3566
    %v4653 = vpop.f32.mrf.mxu0
    %v4654 = vadd.f32 %v4565, %v4653
    %v4655 = vpop.f32.mrf.mxu0
    %v4656 = vadd.f32 %v4567, %v4655
    %4657 = vmatmul.bf16.gmra.mxu0 %v3568
    %v4658 = vpop.f32.mrf.mxu0
    %v4659 = vadd.f32 %v4570, %v4658
    %v4660 = vpop.f32.mrf.mxu0
    %v4661 = vadd.f32 %v4572, %v4660
    %4662 = vmatmul.bf16.gmra.mxu0 %v3570
    %v4663 = vpop.f32.mrf.mxu0
    %v4664 = vadd.f32 %v4575, %v4663
    %v4665 = vpop.f32.mrf.mxu0
    %v4666 = vadd.f32 %v4577, %v4665
    %4667 = vmatmul.bf16.gmra.mxu0 %v3572
    %v4668 = vpop.f32.mrf.mxu0
    %v4669 = vadd.f32 %v4580, %v4668
    %v4670 = vpop.f32.mrf.mxu0
    %v4671 = vadd.f32 %v4582, %v4670
    %4672 = vmatmul.bf16.gmra.mxu0 %v3574
    %v4673 = vpop.f32.mrf.mxu0
    %v4674 = vadd.f32 %v4585, %v4673
    %v4675 = vpop.f32.mrf.mxu0
    %v4676 = vadd.f32 %v4587, %v4675
    %4677 = vmatmul.bf16.gmra.mxu0 %v3576
    %v4678 = vpop.f32.mrf.mxu0
    %v4679 = vadd.f32 %v4590, %v4678
    %v4680 = vpop.f32.mrf.mxu0
    %v4681 = vadd.f32 %v4592, %v4680
    %4682 = vdwg.mxu0
    %v4683 = vpack.c.bf16 %v4248, %v4070
    %v4684 = vpack.c.bf16 %v4604, %v4426
    %v4685 = vpack.c.bf16 %v4250, %v4072
    %v4686 = vpack.c.bf16 %v4606, %v4428
    %v4687 = vpack.c.bf16 %v4253, %v4075
    %v4688 = vpack.c.bf16 %v4609, %v4431
    %v4689 = vpack.c.bf16 %v4255, %v4077
    %v4690 = vpack.c.bf16 %v4611, %v4433
    %v4691 = vpack.c.bf16 %v4258, %v4080
    %v4692 = vpack.c.bf16 %v4614, %v4436
    %v4693 = vpack.c.bf16 %v4260, %v4082
    %v4694 = vpack.c.bf16 %v4616, %v4438
    %v4695 = vpack.c.bf16 %v4263, %v4085
    %v4696 = vpack.c.bf16 %v4619, %v4441
    %v4697 = vpack.c.bf16 %v4265, %v4087
    %v4698 = vpack.c.bf16 %v4621, %v4443
    %v4699 = vpack.c.bf16 %v4268, %v4090
    %v4700 = vpack.c.bf16 %v4624, %v4446
    %v4701 = vpack.c.bf16 %v4270, %v4092
    %v4702 = vpack.c.bf16 %v4626, %v4448
    %v4703 = vpack.c.bf16 %v4273, %v4095
    %v4704 = vpack.c.bf16 %v4629, %v4451
    %v4705 = vpack.c.bf16 %v4275, %v4097
    %v4706 = vpack.c.bf16 %v4631, %v4453
    %v4707 = vpack.c.bf16 %v4278, %v4100
    %v4708 = vpack.c.bf16 %v4634, %v4456
    %v4709 = vpack.c.bf16 %v4280, %v4102
    %v4710 = vpack.c.bf16 %v4636, %v4458
    %v4711 = vpack.c.bf16 %v4283, %v4105
    %v4712 = vpack.c.bf16 %v4639, %v4461
    %v4713 = vpack.c.bf16 %v4285, %v4107
    %v4714 = vpack.c.bf16 %v4641, %v4463
    %v4715 = vpack.c.bf16 %v4288, %v4110
    %v4716 = vpack.c.bf16 %v4644, %v4466
    %v4717 = vpack.c.bf16 %v4290, %v4112
    %v4718 = vpack.c.bf16 %v4646, %v4468
    %v4719 = vpack.c.bf16 %v4293, %v4115
    %v4720 = vpack.c.bf16 %v4649, %v4471
    %v4721 = vpack.c.bf16 %v4295, %v4117
    %v4722 = vpack.c.bf16 %v4651, %v4473
    %v4723 = vpack.c.bf16 %v4298, %v4120
    %v4724 = vpack.c.bf16 %v4654, %v4476
    %v4725 = vpack.c.bf16 %v4300, %v4122
    %v4726 = vpack.c.bf16 %v4656, %v4478
    %v4727 = vpack.c.bf16 %v4303, %v4125
    %v4728 = vpack.c.bf16 %v4659, %v4481
    %v4729 = vpack.c.bf16 %v4305, %v4127
    %v4730 = vpack.c.bf16 %v4661, %v4483
    %v4731 = vpack.c.bf16 %v4308, %v4130
    %v4732 = vpack.c.bf16 %v4664, %v4486
    %v4733 = vpack.c.bf16 %v4310, %v4132
    %v4734 = vpack.c.bf16 %v4666, %v4488
    %v4735 = vpack.c.bf16 %v4313, %v4135
    %v4736 = vpack.c.bf16 %v4669, %v4491
    %v4737 = vpack.c.bf16 %v4315, %v4137
    %v4738 = vpack.c.bf16 %v4671, %v4493
    %v4739 = vpack.c.bf16 %v4318, %v4140
    %v4740 = vpack.c.bf16 %v4674, %v4496
    %v4741 = vpack.c.bf16 %v4320, %v4142
    %v4742 = vpack.c.bf16 %v4676, %v4498
    %v4743 = vpack.c.bf16 %v4323, %v4145
    %v4744 = vpack.c.bf16 %v4679, %v4501
    %v4745 = vpack.c.bf16 %v4325, %v4147
    %v4746 = vpack.c.bf16 %v4681, %v4503
    %4747 = vst [vmem:[#allocation13] sm:$0xff] %v4683
    %4748 = vst [vmem:[#allocation13 + $0x8] sm:$0xff] %v4684
    %4749 = vst [vmem:[#allocation13 + $0x10] sm:$0xff] %v4685
    %4750 = vst [vmem:[#allocation13 + $0x18] sm:$0xff] %v4686
    %4751 = vst [vmem:[#allocation13 + $0x20] sm:$0xff] %v4687
    %4752 = vst [vmem:[#allocation13 + $0x28] sm:$0xff] %v4688
    %4753 = vst [vmem:[#allocation13 + $0x30] sm:$0xff] %v4689
    %4754 = vst [vmem:[#allocation13 + $0x38] sm:$0xff] %v4690
    %4755 = vst [vmem:[#allocation13 + $0x40] sm:$0xff] %v4691
    %4756 = vst [vmem:[#allocation13 + $0x48] sm:$0xff] %v4692
    %4757 = vst [vmem:[#allocation13 + $0x50] sm:$0xff] %v4693
    %4758 = vst [vmem:[#allocation13 + $0x58] sm:$0xff] %v4694
    %4759 = vst [vmem:[#allocation13 + $0x60] sm:$0xff] %v4695
    %4760 = vst [vmem:[#allocation13 + $0x68] sm:$0xff] %v4696
    %4761 = vst [vmem:[#allocation13 + $0x70] sm:$0xff] %v4697
    %4762 = vst [vmem:[#allocation13 + $0x78] sm:$0xff] %v4698
    %4763 = vst [vmem:[#allocation13 + $0x80] sm:$0xff] %v4699
    %4764 = vst [vmem:[#allocation13 + $0x88] sm:$0xff] %v4700
    %4765 = vst [vmem:[#allocation13 + $0x90] sm:$0xff] %v4701
    %4766 = vst [vmem:[#allocation13 + $0x98] sm:$0xff] %v4702
    %4767 = vst [vmem:[#allocation13 + $0xa0] sm:$0xff] %v4703
    %4768 = vst [vmem:[#allocation13 + $0xa8] sm:$0xff] %v4704
    %4769 = vst [vmem:[#allocation13 + $0xb0] sm:$0xff] %v4705
    %4770 = vst [vmem:[#allocation13 + $0xb8] sm:$0xff] %v4706
    %4771 = vst [vmem:[#allocation13 + $0xc0] sm:$0xff] %v4707
    %4772 = vst [vmem:[#allocation13 + $0xc8] sm:$0xff] %v4708
    %4773 = vst [vmem:[#allocation13 + $0xd0] sm:$0xff] %v4709
    %4774 = vst [vmem:[#allocation13 + $0xd8] sm:$0xff] %v4710
    %4775 = vst [vmem:[#allocation13 + $0xe0] sm:$0xff] %v4711
    %4776 = vst [vmem:[#allocation13 + $0xe8] sm:$0xff] %v4712
    %4777 = vst [vmem:[#allocation13 + $0xf0] sm:$0xff] %v4713
    %4778 = vst [vmem:[#allocation13 + $0xf8] sm:$0xff] %v4714
    %4779 = vst [vmem:[#allocation13 + $0x100] sm:$0xff] %v4715
    %4780 = vst [vmem:[#allocation13 + $0x108] sm:$0xff] %v4716
    %4781 = vst [vmem:[#allocation13 + $0x110] sm:$0xff] %v4717
    %4782 = vst [vmem:[#allocation13 + $0x118] sm:$0xff] %v4718
    %4783 = vst [vmem:[#allocation13 + $0x120] sm:$0xff] %v4719
    %4784 = vst [vmem:[#allocation13 + $0x128] sm:$0xff] %v4720
    %4785 = vst [vmem:[#allocation13 + $0x130] sm:$0xff] %v4721
    %4786 = vst [vmem:[#allocation13 + $0x138] sm:$0xff] %v4722
    %4787 = vst [vmem:[#allocation13 + $0x140] sm:$0xff] %v4723
    %4788 = vst [vmem:[#allocation13 + $0x148] sm:$0xff] %v4724
    %4789 = vst [vmem:[#allocation13 + $0x150] sm:$0xff] %v4725
    %4790 = vst [vmem:[#allocation13 + $0x158] sm:$0xff] %v4726
    %4791 = vst [vmem:[#allocation13 + $0x160] sm:$0xff] %v4727
    %4792 = vst [vmem:[#allocation13 + $0x168] sm:$0xff] %v4728
    %4793 = vst [vmem:[#allocation13 + $0x170] sm:$0xff] %v4729
    %4794 = vst [vmem:[#allocation13 + $0x178] sm:$0xff] %v4730
    %4795 = vst [vmem:[#allocation13 + $0x180] sm:$0xff] %v4731
    %4796 = vst [vmem:[#allocation13 + $0x188] sm:$0xff] %v4732
    %4797 = vst [vmem:[#allocation13 + $0x190] sm:$0xff] %v4733
    %4798 = vst [vmem:[#allocation13 + $0x198] sm:$0xff] %v4734
    %4799 = vst [vmem:[#allocation13 + $0x1a0] sm:$0xff] %v4735
    %4800 = vst [vmem:[#allocation13 + $0x1a8] sm:$0xff] %v4736
    %4801 = vst [vmem:[#allocation13 + $0x1b0] sm:$0xff] %v4737
    %4802 = vst [vmem:[#allocation13 + $0x1b8] sm:$0xff] %v4738
    %4803 = vst [vmem:[#allocation13 + $0x1c0] sm:$0xff] %v4739
    %4804 = vst [vmem:[#allocation13 + $0x1c8] sm:$0xff] %v4740
    %4805 = vst [vmem:[#allocation13 + $0x1d0] sm:$0xff] %v4741
    %4806 = vst [vmem:[#allocation13 + $0x1d8] sm:$0xff] %v4742
    %4807 = vst [vmem:[#allocation13 + $0x1e0] sm:$0xff] %v4743
    %4808 = vst [vmem:[#allocation13 + $0x1e8] sm:$0xff] %v4744
    %4809 = vst [vmem:[#allocation13 + $0x1f0] sm:$0xff] %v4745
    %4810 = vst [vmem:[#allocation13 + $0x1f8] sm:$0xff] %v4746
    // Predicated region
    $region62: #{tpu_custom_call.1} parent=1 // pred_check
      _
    $region63: #{tpu_custom_call.1} parent=1 // pred_check_branch
      %4812 = sbr.rel (0) target = $region65
    $region64: #{tpu_custom_call.1} parent=1 // pred_region
      %4814 = vsyncadd [#allocation4], 0
      %s4815 = sshll.u32 [#allocation13], 4
      %s4816 = int_to_ptr.vmem [resolvable:$true] %s4815
      %s4817 = sshll.u32 %s9, 4
      %s4818 = int_to_ptr.hbm [resolvable:$true] %s4817
      %4823 = dma.vmem_to_hbm [thread:$0]  %s4816, 8192, %s4818, [#allocation4], 256, 256, 16
    $region65: #{tpu_custom_call.1} parent=1 // pred_fallthru
      _
    // Predicated region
    $region66: #{tpu_custom_call.1} parent=1 // pred_check
      _
    $region67: #{tpu_custom_call.1} parent=1 // pred_check_branch
      %4825 = sbr.rel (0) target = $region69
    $region68: #{tpu_custom_call.1} parent=1 // pred_region
      %4827 = dma.done [#allocation4], 8192
    $region69: #{tpu_custom_call.1} parent=1 // pred_fallthru
      _
    %4828 = vsyncpa [#allocation3], 1
    %4829 = vsyncpa [#allocation6], 1
    %4830 = vsyncpa [#allocation9], 1
    %4831 = vsyncpa [#allocation12], 1
    %4832 = vsyncpa [#allocation4], 1

</llo_original>
